<compile_context>
chip_gen: v7x
topology: tpu7x:2x2x1
jax: 0.10.0
libtpu: 0.0.40
codegen_flags: <defaults>
</compile_context>

<pallas_src>
import functools
import math

import jax
import jax.numpy as jnp
import numpy as np
from jax import lax
from jax.experimental import pallas as pl
from jax.experimental.pallas import tpu as pltpu

LN_EPS = 1e-5


# ----------------------------------------------------------------------------
# shared math
# ----------------------------------------------------------------------------
def _layernorm(x, gamma, beta, eps=LN_EPS):
    mu = jnp.mean(x, axis=-1, keepdims=True)
    xc = x - mu
    var = jnp.mean(xc * xc, axis=-1, keepdims=True)
    return xc * lax.rsqrt(var + eps) * gamma + beta


# ----------------------------------------------------------------------------
# Pallas kernel: grid = (batch_blocks, num_layers)
#   - activations (Bt, L, D) persist in VMEM scratch across the layer axis
#   - per-layer weights streamed via the layer grid axis
# ----------------------------------------------------------------------------
def _decoder_kernel(wl_ref, ph_ref, mask_ref, ca_ref, vecs_ref,
                    saw_ref, sab_ref, ffw1_ref, ffb1_ref, ffw2_ref, ffb2_ref,
                    lng_ref, lnb_ref, out_ref, x_scr,
                    *, num_heads, head_dim, selfattn):
    layer = pl.program_id(1)
    n_layers = pl.num_programs(1)

    vecs = vecs_ref[...]                                   # (8, D) f32

    @pl.when(layer == 0)
    def _init():
        wl = wl_ref[...][:, :, None]                       # (Bt, L, 1)
        ph = ph_ref[...][:, :, None]                       # (Bt, 1, 1)
        x_scr[...] = (wl * vecs[0:1, :] + vecs[1:2, :]
                      + ph * vecs[2:3, :] + vecs[3:4, :])  # (Bt, L, D)

    x = x_scr[...]                                         # (Bt, L, D) f32
    Bt, L, D = x.shape

    lg = lng_ref[...]                                      # (3, D)
    lb = lnb_ref[...]                                      # (3, D)

    if selfattn:
        ab = sab_ref[...]                                  # (4, D) f32
        bias = (mask_ref[...] * (-1e9))[:, None, :]        # (Bt, 1, L)

        x2 = x.reshape(Bt * L, D).astype(jnp.bfloat16)
        q = (jnp.dot(x2, saw_ref[0], preferred_element_type=jnp.float32)
             + ab[0:1, :]).reshape(Bt, L, D)
        k = (jnp.dot(x2, saw_ref[1], preferred_element_type=jnp.float32)
             + ab[1:2, :]).reshape(Bt, L, D)
        v = (jnp.dot(x2, saw_ref[2], preferred_element_type=jnp.float32)
             + ab[2:3, :]).reshape(Bt, L, D)
        wo = saw_ref[3]                                    # (D, D) bf16

        scale = 1.0 / math.sqrt(head_dim)
        attn = jnp.zeros((Bt * L, D), jnp.float32)
        for h in range(num_heads):
            sl = slice(h * head_dim, (h + 1) * head_dim)
            qh, kh, vh = q[:, :, sl], k[:, :, sl], v[:, :, sl]
            s = lax.dot_general(qh, kh, (((2,), (2,)), ((0,), (0,))),
                                preferred_element_type=jnp.float32) * scale
            s = s + bias
            s = s - jnp.max(s, axis=-1, keepdims=True)
            p = jnp.exp(s)
            p = p * pl.reciprocal(jnp.sum(p, axis=-1, keepdims=True),
                                  approx=True)
            oh = lax.dot_general(p, vh, (((2,), (1,)), ((0,), (0,))),
                                 preferred_element_type=jnp.float32)
            # accumulate this head straight into the output via Wo row-slice
            attn = attn + jnp.dot(
                oh.reshape(Bt * L, head_dim).astype(jnp.bfloat16),
                wo[sl, :], preferred_element_type=jnp.float32)
        attn = attn + ab[3:4, :]
        x = _layernorm(x + attn.reshape(Bt, L, D), lg[0:1, :], lb[0:1, :])

    # degenerate single-token cross-attention: per-(batch,layer) constant vector
    ca = ca_ref[...]                                       # (Bt, D)
    x = _layernorm(x + ca[:, None, :], lg[1:2, :], lb[1:2, :])

    # FFN
    x2 = x.reshape(Bt * L, D).astype(jnp.bfloat16)
    h1 = jnp.maximum(
        jnp.dot(x2, ffw1_ref[...], preferred_element_type=jnp.float32)
        + ffb1_ref[...], 0.0)                              # (Bt*L, F)
    f = (jnp.dot(h1.astype(jnp.bfloat16), ffw2_ref[...],
                 preferred_element_type=jnp.float32) + ffb2_ref[...])
    x = _layernorm(x + f.reshape(Bt, L, D), lg[2:3, :], lb[2:3, :])
    x_scr[...] = x

    @pl.when(layer == n_layers - 1)
    def _finalize():
        wout = vecs[6:7, :]                                # (1, D)
        out_b = vecs[5:6, 0:1]                             # (1, 1)
        # lane-dense (Bt, L) output row instead of an (L, 1) column
        out_ref[...] = jnp.sum(x * wout, axis=-1) + out_b


# ----------------------------------------------------------------------------
# wrapper
# ----------------------------------------------------------------------------
def _pick_batch_tile(batch, seq_len, target_rows=256):
    best = 1
    cap = max(target_rows, seq_len)
    for cand in range(1, batch + 1):
        if batch % cand == 0 and cand * seq_len <= cap:
            best = cand
    return best


def spectra_dec_forward(params, wavelength, phase, z, mask=None, *,
                        num_heads, num_layers, selfattn, batch_tile=None):
    B, L = wavelength.shape
    Dz, D = params["wz"].shape
    F = params["ffw1"].shape[-1]
    assert D % num_heads == 0
    head_dim = D // num_heads

    Bt = batch_tile if batch_tile is not None else _pick_batch_tile(B, L)
    assert B % Bt == 0
    nB = B // Bt

    f32, bf16 = jnp.float32, jnp.bfloat16
    wl = wavelength.astype(f32).reshape(nB, Bt, L)
    ph = phase.astype(f32).reshape(nB, Bt, 1)
    km = jnp.zeros((B, L), f32) if mask is None else mask.astype(f32)
    km_r = km.reshape(nB, Bt, L)

    vecs = params["vecs"].astype(f32)                       # (8, D)
    attn_w = params["attn_w"].astype(f32)                   # (NL, 8, D, D)
    attn_b = params["attn_b"].astype(f32)                   # (NL, 8, D)

    # Precompute the degenerate single-token cross-attention output:
    # softmax over a single key == 1  =>  ca = (mem @ Wv + bv) @ Wo + bo,
    # independent of the queries; depends only on (batch, layer).
    mem = z.astype(f32) @ params["wz"].astype(f32) + vecs[4]            # (B, D)
    vm = jnp.einsum("bd,lde->ble", mem, attn_w[:, 6]) + attn_b[None, :, 6]
    ca = jnp.einsum("ble,lef->blf", vm, attn_w[:, 7]) + attn_b[None, :, 7]
    ca = ca.reshape(nB, Bt, num_layers, D).transpose(0, 2, 1, 3)  # (nB, NL, Bt, D)

    sa_w = attn_w[:, :4].astype(bf16)                       # (NL, 4, D, D)
    sa_b = attn_b[:, :4]                                    # (NL, 4, D)
    ffw1 = params["ffw1"].astype(bf16)
    ffw2 = params["ffw2"].astype(bf16)
    ffb1 = params["ffb1"].astype(f32)
    ffb2 = params["ffb2"].astype(f32)
    lng = params["lng"].astype(f32)
    lnb = params["lnb"].astype(f32)

    kernel = functools.partial(_decoder_kernel, num_heads=num_heads,
                               head_dim=head_dim, selfattn=selfattn)

    flux = pl.pallas_call(
        kernel,
        out_shape=jax.ShapeDtypeStruct((nB, Bt, L), f32),
        grid=(nB, num_layers),
        in_specs=[
            pl.BlockSpec((None, Bt, L), lambda b, l: (b, 0, 0)),          # wavelength
            pl.BlockSpec((None, Bt, 1), lambda b, l: (b, 0, 0)),          # phase
            pl.BlockSpec((None, Bt, L), lambda b, l: (b, 0, 0)),          # key mask
            pl.BlockSpec((None, None, Bt, D), lambda b, l: (b, l, 0, 0)), # cross-attn const
            pl.BlockSpec((8, D), lambda b, l: (0, 0)),                    # packed vectors
            pl.BlockSpec((None, 4, D, D), lambda b, l: (l, 0, 0, 0)),     # self-attn W (bf16)
            pl.BlockSpec((None, 4, D), lambda b, l: (l, 0, 0)),           # self-attn b
            pl.BlockSpec((None, D, F), lambda b, l: (l, 0, 0)),           # ffn W1 (bf16)
            pl.BlockSpec((None, 1, F), lambda b, l: (l, 0, 0)),           # ffn b1
            pl.BlockSpec((None, F, D), lambda b, l: (l, 0, 0)),           # ffn W2 (bf16)
            pl.BlockSpec((None, 1, D), lambda b, l: (l, 0, 0)),           # ffn b2
            pl.BlockSpec((None, 3, D), lambda b, l: (l, 0, 0)),           # LN gamma
            pl.BlockSpec((None, 3, D), lambda b, l: (l, 0, 0)),           # LN beta
        ],
        out_specs=pl.BlockSpec((None, Bt, L), lambda b, l: (b, 0, 0)),
        scratch_shapes=[pltpu.VMEM((Bt, L, D), f32)],
        compiler_params=pltpu.CompilerParams(
            dimension_semantics=("parallel", "arbitrary"),
            vmem_limit_bytes=32 * 1024 * 1024),
    )(wl, ph, km_r, ca, vecs, sa_w, sa_b, ffw1, ffb1, ffw2, ffb2, lng, lnb)

    x_rec = flux.reshape(B, L)
    var = jnp.ones_like(x_rec)
    if mask is not None:
        var = var + 1e10 * mask.astype(f32)
    return x_rec, var


# ----------------------------------------------------------------------------
# pure-JAX reference (full MHA incl. cross-attention, f32), used for validation
# ----------------------------------------------------------------------------
def _ref_mha(qin, kvin, Wq, Wk, Wv, Wo, bq, bk, bv, bo, bias, num_heads):
    B, Lq, D = qin.shape
    Lk = kvin.shape[1]
    dh = D // num_heads
    q = (qin @ Wq + bq).reshape(B, Lq, num_heads, dh).transpose(0, 2, 1, 3)
    k = (kvin @ Wk + bk).reshape(B, Lk, num_heads, dh).transpose(0, 2, 1, 3)
    v = (kvin @ Wv + bv).reshape(B, Lk, num_heads, dh).transpose(0, 2, 1, 3)
    s = jnp.einsum("bhqd,bhkd->bhqk", q, k) / math.sqrt(dh)
    if bias is not None:
        s = s + bias[:, None, None, :]
    p = jax.nn.softmax(s, axis=-1)
    o = jnp.einsum("bhqk,bhkd->bhqd", p, v).transpose(0, 2, 1, 3).reshape(B, Lq, D)
    return o @ Wo + bo


def reference_forward(params, wavelength, phase, z, mask, *,
                      num_heads, num_layers, selfattn):
    vecs = params["vecs"]
    wl_w, wl_b, ph_w, ph_b, z_b = vecs[0], vecs[1], vecs[2], vecs[3], vecs[4]
    out_b = vecs[5, 0]
    wout = vecs[6]
    x = (wavelength[..., None] * wl_w + wl_b
         + phase[..., None] * ph_w + ph_b)                    # (B, L, D)
    mem = (z @ params["wz"] + z_b)[:, None, :]                # (B, 1, D)
    bias = None if mask is None else (-1e9) * mask.astype(jnp.float32)

    for layer in range(num_layers):
        aw = params["attn_w"][layer]
        ab = params["attn_b"][layer]
        lg = params["lng"][layer]
        lb = params["lnb"][layer]
        if selfattn:
            sa = _ref_mha(x, x, aw[0], aw[1], aw[2], aw[3],
                          ab[0], ab[1], ab[2], ab[3], bias, num_heads)
            x = _layernorm(x + sa, lg[0], lb[0])
        ca = _ref_mha(x, mem, aw[4], aw[5], aw[6], aw[7],
                      ab[4], ab[5], ab[6], ab[7], None, num_heads)
        x = _layernorm(x + ca, lg[1], lb[1])
        h = jnp.maximum(x @ params["ffw1"][layer] + params["ffb1"][layer], 0.0)
        f = h @ params["ffw2"][layer] + params["ffb2"][layer]
        x = _layernorm(x + f, lg[2], lb[2])

    x_rec = jnp.einsum("bld,d->bl", x, wout) + out_b
    var = jnp.ones_like(x_rec)
    if mask is not None:
        var = var + 1e10 * mask.astype(jnp.float32)
    return x_rec, var


# ----------------------------------------------------------------------------
# deterministic parameter init (synthetic — no checkpoint loading)
# ----------------------------------------------------------------------------
def init_params(key, latent_dim, model_dim, ff_dim, num_layers):
    D, F = model_dim, ff_dim
    s = 0.2
    ks = jax.random.split(key, 16)

    def bf16_round(x):   # store bf16-representable values so ref == kernel weights
        return x.astype(jnp.bfloat16).astype(jnp.float32)

    vecs = jnp.zeros((8, D), jnp.float32)
    for i in range(5):
        vecs = vecs.at[i].set(jax.random.normal(ks[i], (D,)) * s)
    vecs = vecs.at[5, 0].set(jax.random.normal(ks[5], ()) * s)      # output bias
    vecs = vecs.at[6].set(jax.random.normal(ks[13], (D,)) * s)      # output head row
    return dict(
        vecs=vecs,
        wz=jax.random.normal(ks[6], (latent_dim, D)) * s,
        attn_w=bf16_round(jax.random.normal(ks[7], (num_layers, 8, D, D)) * s),
        attn_b=jax.random.normal(ks[8], (num_layers, 8, D)) * s,
        ffw1=bf16_round(jax.random.normal(ks[9], (num_layers, D, F)) * s),
        ffb1=jax.random.normal(ks[10], (num_layers, 1, F)) * s,
        ffw2=bf16_round(jax.random.normal(ks[11], (num_layers, F, D)) * s),
        ffb2=jax.random.normal(ks[12], (num_layers, 1, D)) * s,
        lng=jnp.ones((num_layers, 3, D), jnp.float32),
        lnb=jnp.zeros((num_layers, 3, D), jnp.float32),
    )


if __name__ == "__main__":
    B, L = 2, 8
    latent_dim, model_dim, num_heads, ff_dim, num_layers = 16, 32, 4, 64, 2
    selfattn = True

    key = jax.random.PRNGKey(0)
    kp, kw, kph, kz = jax.random.split(key, 4)
    params = init_params(kp, latent_dim, model_dim, ff_dim, num_layers)

    wavelength = jax.random.uniform(kw, (B, L), jnp.float32, -1.0, 1.0)
    phase = jax.random.uniform(kph, (B, 1), jnp.float32, -1.0, 1.0)
    z = jax.random.normal(kz, (B, latent_dim), jnp.float32)
    mask = jnp.zeros((B, L), jnp.float32).at[:, -2:].set(1.0)   # pad last 2 bins

    x_rec, var = spectra_dec_forward(params, wavelength, phase, z, mask,
                                     num_heads=num_heads,
                                     num_layers=num_layers,
                                     selfattn=selfattn)
    jax.block_until_ready((x_rec, var))

    x_ref, var_ref = reference_forward(params, wavelength, phase, z, mask,
                                       num_heads=num_heads,
                                       num_layers=num_layers,
                                       selfattn=selfattn)
    np.testing.assert_allclose(np.asarray(x_rec), np.asarray(x_ref),
                               rtol=5e-2, atol=5e-2)
    np.testing.assert_allclose(np.asarray(var), np.asarray(var_ref),
                               rtol=1e-6, atol=1e-6)
    assert x_rec.shape == (B, L) and var.shape == (B, L)
    print("KERNEL_OK")
</pallas_src>

<mosaic_0001>
module attributes {stable_mosaic.version = 11 : i64} {
  func.func @_decoder_kernel(%arg0: i32, %arg1: i32, %arg2: memref<1x2x8xf32, #tpu.memory_space<vmem>>, %arg3: memref<1x2x1xf32, #tpu.memory_space<vmem>>, %arg4: memref<1x2x8xf32, #tpu.memory_space<vmem>>, %arg5: memref<1x1x2x32xf32, #tpu.memory_space<vmem>>, %arg6: memref<8x32xf32, #tpu.memory_space<vmem>>, %arg7: memref<1x4x32x32xbf16, #tpu.memory_space<vmem>>, %arg8: memref<1x4x32xf32, #tpu.memory_space<vmem>>, %arg9: memref<1x32x64xbf16, #tpu.memory_space<vmem>>, %arg10: memref<1x1x64xf32, #tpu.memory_space<vmem>>, %arg11: memref<1x64x32xbf16, #tpu.memory_space<vmem>>, %arg12: memref<1x1x32xf32, #tpu.memory_space<vmem>>, %arg13: memref<1x3x32xf32, #tpu.memory_space<vmem>>, %arg14: memref<1x3x32xf32, #tpu.memory_space<vmem>>, %arg15: memref<1x2x8xf32, #tpu.memory_space<vmem>>, %arg16: memref<2x8x32xf32, #tpu.memory_space<vmem>>) attributes {dimension_semantics = [#tpu.dimension_semantics<parallel>, #tpu.dimension_semantics<arbitrary>], iteration_bounds = array<i64: 1, 2>, scalar_prefetch = 0 : i64, scratch_operands = 1 : i64, tpu.core_type = #tpu.core_type<tc>, window_params = [{transform_indices = @transform_0, window_bounds = array<i64: 1, 2, 8>}, {transform_indices = @transform_1, window_bounds = array<i64: 1, 2, 1>}, {transform_indices = @transform_2, window_bounds = array<i64: 1, 2, 8>}, {transform_indices = @transform_3, window_bounds = array<i64: 1, 1, 2, 32>}, {pipeline_mode = #tpu.pipeline_mode<synchronous>, transform_indices = @transform_4, window_bounds = array<i64: 8, 32>}, {transform_indices = @transform_5, window_bounds = array<i64: 1, 4, 32, 32>}, {transform_indices = @transform_6, window_bounds = array<i64: 1, 4, 32>}, {transform_indices = @transform_7, window_bounds = array<i64: 1, 32, 64>}, {transform_indices = @transform_8, window_bounds = array<i64: 1, 1, 64>}, {transform_indices = @transform_9, window_bounds = array<i64: 1, 64, 32>}, {transform_indices = @transform_10, window_bounds = array<i64: 1, 1, 32>}, {transform_indices = @transform_11, window_bounds = array<i64: 1, 3, 32>}, {transform_indices = @transform_12, window_bounds = array<i64: 1, 3, 32>}, {transform_indices = @transform_13, window_bounds = array<i64: 1, 2, 8>}]} {
    %c0 = arith.constant 0 : index
    %c0_0 = arith.constant 0 : index
    %0 = vector.load %arg6[%c0, %c0_0] : memref<8x32xf32, #tpu.memory_space<vmem>>, vector<8x32xf32>
    %c0_i32 = arith.constant 0 : i32
    %1 = arith.cmpi eq, %arg1, %c0_i32 : i32
    %2 = arith.extui %1 : i1 to i32
    %c0_i32_1 = arith.constant 0 : i32
    %3 = arith.cmpi ne, %2, %c0_i32_1 : i32
    scf.if %3 {
      %c0_96 = arith.constant 0 : index
      %c0_97 = arith.constant 0 : index
      %c0_98 = arith.constant 0 : index
      %245 = vector.load %arg2[%c0_96, %c0_97, %c0_98] : memref<1x2x8xf32, #tpu.memory_space<vmem>>, vector<1x2x8xf32>
      %246 = vector.shape_cast %245 : vector<1x2x8xf32> to vector<2x8xf32>
      %247 = vector.shape_cast %246 : vector<2x8xf32> to vector<2x8x1xf32>
      %c0_99 = arith.constant 0 : index
      %c0_100 = arith.constant 0 : index
      %c0_101 = arith.constant 0 : index
      %248 = vector.load %arg3[%c0_99, %c0_100, %c0_101] : memref<1x2x1xf32, #tpu.memory_space<vmem>>, vector<1x2x1xf32>
      %249 = vector.shape_cast %248 : vector<1x2x1xf32> to vector<2x1xf32>
      %250 = vector.shape_cast %249 : vector<2x1xf32> to vector<2x1x1xf32>
      %251 = vector.extract_strided_slice %0 {offsets = [0, 0], sizes = [1, 32], strides = [1, 1]} : vector<8x32xf32> to vector<1x32xf32>
      %252 = vector.shape_cast %251 : vector<1x32xf32> to vector<1x1x32xf32>
      %253 = vector.broadcast %247 : vector<2x8x1xf32> to vector<2x8x32xf32>
      %254 = vector.broadcast %252 : vector<1x1x32xf32> to vector<2x8x32xf32>
      %255 = arith.mulf %253, %254 : vector<2x8x32xf32>
      %256 = vector.extract_strided_slice %0 {offsets = [1, 0], sizes = [1, 32], strides = [1, 1]} : vector<8x32xf32> to vector<1x32xf32>
      %257 = vector.shape_cast %256 : vector<1x32xf32> to vector<1x1x32xf32>
      %258 = vector.broadcast %257 : vector<1x1x32xf32> to vector<2x8x32xf32>
      %259 = arith.addf %255, %258 : vector<2x8x32xf32>
      %260 = vector.extract_strided_slice %0 {offsets = [2, 0], sizes = [1, 32], strides = [1, 1]} : vector<8x32xf32> to vector<1x32xf32>
      %261 = vector.shape_cast %260 : vector<1x32xf32> to vector<1x1x32xf32>
      %262 = vector.broadcast %250 : vector<2x1x1xf32> to vector<2x1x32xf32>
      %263 = vector.broadcast %261 : vector<1x1x32xf32> to vector<2x1x32xf32>
      %264 = arith.mulf %262, %263 : vector<2x1x32xf32>
      %265 = vector.broadcast %264 : vector<2x1x32xf32> to vector<2x8x32xf32>
      %266 = arith.addf %259, %265 : vector<2x8x32xf32>
      %267 = vector.extract_strided_slice %0 {offsets = [3, 0], sizes = [1, 32], strides = [1, 1]} : vector<8x32xf32> to vector<1x32xf32>
      %268 = vector.shape_cast %267 : vector<1x32xf32> to vector<1x1x32xf32>
      %269 = vector.broadcast %268 : vector<1x1x32xf32> to vector<2x8x32xf32>
      %270 = arith.addf %266, %269 : vector<2x8x32xf32>
      %c0_102 = arith.constant 0 : index
      %c0_103 = arith.constant 0 : index
      %c0_104 = arith.constant 0 : index
      %271 = vector.load %arg16[%c0_102, %c0_103, %c0_104] : memref<2x8x32xf32, #tpu.memory_space<vmem>>, vector<2x8x32xf32>
      tpu.vector_store %arg16[%c0_102, %c0_103, %c0_104], %270 {strides = array<i32>} : memref<2x8x32xf32, #tpu.memory_space<vmem>>, vector<2x8x32xf32>,
    } else {
    }
    %c0_2 = arith.constant 0 : index
    %c0_3 = arith.constant 0 : index
    %c0_4 = arith.constant 0 : index
    %4 = vector.load %arg16[%c0_2, %c0_3, %c0_4] : memref<2x8x32xf32, #tpu.memory_space<vmem>>, vector<2x8x32xf32>
    %c0_5 = arith.constant 0 : index
    %c0_6 = arith.constant 0 : index
    %c0_7 = arith.constant 0 : index
    %5 = vector.load %arg13[%c0_5, %c0_6, %c0_7] : memref<1x3x32xf32, #tpu.memory_space<vmem>>, vector<1x3x32xf32>
    %6 = vector.shape_cast %5 : vector<1x3x32xf32> to vector<3x32xf32>
    %c0_8 = arith.constant 0 : index
    %c0_9 = arith.constant 0 : index
    %c0_10 = arith.constant 0 : index
    %7 = vector.load %arg14[%c0_8, %c0_9, %c0_10] : memref<1x3x32xf32, #tpu.memory_space<vmem>>, vector<1x3x32xf32>
    %8 = vector.shape_cast %7 : vector<1x3x32xf32> to vector<3x32xf32>
    %c0_11 = arith.constant 0 : index
    %c0_12 = arith.constant 0 : index
    %c0_13 = arith.constant 0 : index
    %9 = vector.load %arg8[%c0_11, %c0_12, %c0_13] : memref<1x4x32xf32, #tpu.memory_space<vmem>>, vector<1x4x32xf32>
    %10 = vector.shape_cast %9 : vector<1x4x32xf32> to vector<4x32xf32>
    %c0_14 = arith.constant 0 : index
    %c0_15 = arith.constant 0 : index
    %c0_16 = arith.constant 0 : index
    %11 = vector.load %arg4[%c0_14, %c0_15, %c0_16] : memref<1x2x8xf32, #tpu.memory_space<vmem>>, vector<1x2x8xf32>
    %12 = vector.shape_cast %11 : vector<1x2x8xf32> to vector<2x8xf32>
    %cst = arith.constant -1.000000e+09 : f32
    %13 = vector.broadcast %cst : f32 to vector<2x8xf32>
    %14 = arith.mulf %12, %13 : vector<2x8xf32>
    %15 = vector.shape_cast %14 : vector<2x8xf32> to vector<2x1x8xf32>
    %16 = vector.shape_cast %4 : vector<2x8x32xf32> to vector<16x32xf32>
    %17 = arith.truncf %16 : vector<16x32xf32> to vector<16x32xbf16>
    %c0_17 = arith.constant 0 : index
    %c0_18 = arith.constant 0 : index
    %c0_19 = arith.constant 0 : index
    %c0_20 = arith.constant 0 : index
    %18 = vector.load %arg7[%c0_17, %c0_18, %c0_19, %c0_20] : memref<1x4x32x32xbf16, #tpu.memory_space<vmem>>, vector<1x1x32x32xbf16>
    %19 = vector.shape_cast %18 : vector<1x1x32x32xbf16> to vector<32x32xbf16>
    %cst_21 = arith.constant dense<0.000000e+00> : vector<16x32xf32>
    %20 = tpu.matmul %17, %19, %cst_21 {dimension_numbers = #tpu.dot_dimension_numbers<[1], [0], [0], [1], [0, 0, 1, 1], [], []>} : vector<16x32xbf16>, vector<32x32xbf16>, vector<16x32xf32> -> vector<16x32xf32>
    %21 = vector.extract_strided_slice %10 {offsets = [0, 0], sizes = [1, 32], strides = [1, 1]} : vector<4x32xf32> to vector<1x32xf32>
    %22 = vector.broadcast %21 : vector<1x32xf32> to vector<16x32xf32>
    %23 = arith.addf %20, %22 : vector<16x32xf32>
    %24 = vector.shape_cast %23 : vector<16x32xf32> to vector<2x8x32xf32>
    %c0_22 = arith.constant 0 : index
    %c1 = arith.constant 1 : index
    %c0_23 = arith.constant 0 : index
    %c0_24 = arith.constant 0 : index
    %25 = vector.load %arg7[%c0_22, %c1, %c0_23, %c0_24] : memref<1x4x32x32xbf16, #tpu.memory_space<vmem>>, vector<1x1x32x32xbf16>
    %26 = vector.shape_cast %25 : vector<1x1x32x32xbf16> to vector<32x32xbf16>
    %cst_25 = arith.constant dense<0.000000e+00> : vector<16x32xf32>
    %27 = tpu.matmul %17, %26, %cst_25 {dimension_numbers = #tpu.dot_dimension_numbers<[1], [0], [0], [1], [0, 0, 1, 1], [], []>} : vector<16x32xbf16>, vector<32x32xbf16>, vector<16x32xf32> -> vector<16x32xf32>
    %28 = vector.extract_strided_slice %10 {offsets = [1, 0], sizes = [1, 32], strides = [1, 1]} : vector<4x32xf32> to vector<1x32xf32>
    %29 = vector.broadcast %28 : vector<1x32xf32> to vector<16x32xf32>
    %30 = arith.addf %27, %29 : vector<16x32xf32>
    %31 = vector.shape_cast %30 : vector<16x32xf32> to vector<2x8x32xf32>
    %c0_26 = arith.constant 0 : index
    %c2 = arith.constant 2 : index
    %c0_27 = arith.constant 0 : index
    %c0_28 = arith.constant 0 : index
    %32 = vector.load %arg7[%c0_26, %c2, %c0_27, %c0_28] : memref<1x4x32x32xbf16, #tpu.memory_space<vmem>>, vector<1x1x32x32xbf16>
    %33 = vector.shape_cast %32 : vector<1x1x32x32xbf16> to vector<32x32xbf16>
    %cst_29 = arith.constant dense<0.000000e+00> : vector<16x32xf32>
    %34 = tpu.matmul %17, %33, %cst_29 {dimension_numbers = #tpu.dot_dimension_numbers<[1], [0], [0], [1], [0, 0, 1, 1], [], []>} : vector<16x32xbf16>, vector<32x32xbf16>, vector<16x32xf32> -> vector<16x32xf32>
    %35 = vector.extract_strided_slice %10 {offsets = [2, 0], sizes = [1, 32], strides = [1, 1]} : vector<4x32xf32> to vector<1x32xf32>
    %36 = vector.broadcast %35 : vector<1x32xf32> to vector<16x32xf32>
    %37 = arith.addf %34, %36 : vector<16x32xf32>
    %38 = vector.shape_cast %37 : vector<16x32xf32> to vector<2x8x32xf32>
    %c0_30 = arith.constant 0 : index
    %c3 = arith.constant 3 : index
    %c0_31 = arith.constant 0 : index
    %c0_32 = arith.constant 0 : index
    %39 = vector.load %arg7[%c0_30, %c3, %c0_31, %c0_32] : memref<1x4x32x32xbf16, #tpu.memory_space<vmem>>, vector<1x1x32x32xbf16>
    %40 = vector.shape_cast %39 : vector<1x1x32x32xbf16> to vector<32x32xbf16>
    %cst_33 = arith.constant 0.000000e+00 : f32
    %41 = vector.broadcast %cst_33 : f32 to vector<16x32xf32>
    %42 = vector.extract_strided_slice %24 {offsets = [0, 0, 0], sizes = [2, 8, 8], strides = [1, 1, 1]} : vector<2x8x32xf32> to vector<2x8x8xf32>
    %43 = vector.extract_strided_slice %31 {offsets = [0, 0, 0], sizes = [2, 8, 8], strides = [1, 1, 1]} : vector<2x8x32xf32> to vector<2x8x8xf32>
    %44 = vector.extract_strided_slice %38 {offsets = [0, 0, 0], sizes = [2, 8, 8], strides = [1, 1, 1]} : vector<2x8x32xf32> to vector<2x8x8xf32>
    %cst_34 = arith.constant dense<0.000000e+00> : vector<2x8x8xf32>
    %45 = tpu.matmul %42, %43, %cst_34 {dimension_numbers = #tpu.dot_dimension_numbers<[2], [2], [1], [1], [0, 0, 0, 1, 1, 1], [0], [0]>} : vector<2x8x8xf32>, vector<2x8x8xf32>, vector<2x8x8xf32> -> vector<2x8x8xf32>
    %cst_35 = arith.constant 0.353553385 : f32
    %46 = vector.broadcast %cst_35 : f32 to vector<2x8x8xf32>
    %47 = arith.mulf %45, %46 : vector<2x8x8xf32>
    %48 = vector.broadcast %15 : vector<2x1x8xf32> to vector<2x8x8xf32>
    %49 = arith.addf %47, %48 : vector<2x8x8xf32>
    %cst_36 = arith.constant dense<0xFF800000> : vector<2x8xf32>
    %50 = vector.multi_reduction <maximumf>, %49, %cst_36 [2] : vector<2x8x8xf32> to vector<2x8xf32>
    %51 = vector.shape_cast %50 : vector<2x8xf32> to vector<2x8x1xf32>
    %52 = vector.broadcast %51 : vector<2x8x1xf32> to vector<2x8x8xf32>
    %53 = arith.subf %49, %52 : vector<2x8x8xf32>
    %54 = math.exp %53 : vector<2x8x8xf32>
    %cst_37 = arith.constant dense<0.000000e+00> : vector<2x8xf32>
    %55 = vector.multi_reduction <add>, %54, %cst_37 [2] : vector<2x8x8xf32> to vector<2x8xf32>
    %56 = vector.shape_cast %55 : vector<2x8xf32> to vector<2x8x1xf32>
    %57 = tpu.reciprocal %56 {approx = true} : vector<2x8x1xf32> -> vector<2x8x1xf32>
    %58 = vector.broadcast %57 : vector<2x8x1xf32> to vector<2x8x8xf32>
    %59 = arith.mulf %54, %58 : vector<2x8x8xf32>
    %cst_38 = arith.constant dense<0.000000e+00> : vector<2x8x8xf32>
    %60 = tpu.matmul %59, %44, %cst_38 {dimension_numbers = #tpu.dot_dimension_numbers<[2], [1], [1], [2], [0, 0, 0, 1, 1, 2], [0], [0]>} : vector<2x8x8xf32>, vector<2x8x8xf32>, vector<2x8x8xf32> -> vector<2x8x8xf32>
    %61 = vector.shape_cast %60 : vector<2x8x8xf32> to vector<16x8xf32>
    %62 = arith.truncf %61 : vector<16x8xf32> to vector<16x8xbf16>
    %63 = vector.extract_strided_slice %40 {offsets = [0, 0], sizes = [8, 32], strides = [1, 1]} : vector<32x32xbf16> to vector<8x32xbf16>
    %cst_39 = arith.constant dense<0.000000e+00> : vector<16x32xf32>
    %64 = tpu.matmul %62, %63, %cst_39 {dimension_numbers = #tpu.dot_dimension_numbers<[1], [0], [0], [1], [0, 0, 1, 1], [], []>} : vector<16x8xbf16>, vector<8x32xbf16>, vector<16x32xf32> -> vector<16x32xf32>
    %65 = arith.addf %41, %64 : vector<16x32xf32>
    %66 = vector.extract_strided_slice %24 {offsets = [0, 0, 8], sizes = [2, 8, 8], strides = [1, 1, 1]} : vector<2x8x32xf32> to vector<2x8x8xf32>
    %67 = vector.extract_strided_slice %31 {offsets = [0, 0, 8], sizes = [2, 8, 8], strides = [1, 1, 1]} : vector<2x8x32xf32> to vector<2x8x8xf32>
    %68 = vector.extract_strided_slice %38 {offsets = [0, 0, 8], sizes = [2, 8, 8], strides = [1, 1, 1]} : vector<2x8x32xf32> to vector<2x8x8xf32>
    %cst_40 = arith.constant dense<0.000000e+00> : vector<2x8x8xf32>
    %69 = tpu.matmul %66, %67, %cst_40 {dimension_numbers = #tpu.dot_dimension_numbers<[2], [2], [1], [1], [0, 0, 0, 1, 1, 1], [0], [0]>} : vector<2x8x8xf32>, vector<2x8x8xf32>, vector<2x8x8xf32> -> vector<2x8x8xf32>
    %cst_41 = arith.constant 0.353553385 : f32
    %70 = vector.broadcast %cst_41 : f32 to vector<2x8x8xf32>
    %71 = arith.mulf %69, %70 : vector<2x8x8xf32>
    %72 = vector.broadcast %15 : vector<2x1x8xf32> to vector<2x8x8xf32>
    %73 = arith.addf %71, %72 : vector<2x8x8xf32>
    %cst_42 = arith.constant dense<0xFF800000> : vector<2x8xf32>
    %74 = vector.multi_reduction <maximumf>, %73, %cst_42 [2] : vector<2x8x8xf32> to vector<2x8xf32>
    %75 = vector.shape_cast %74 : vector<2x8xf32> to vector<2x8x1xf32>
    %76 = vector.broadcast %75 : vector<2x8x1xf32> to vector<2x8x8xf32>
    %77 = arith.subf %73, %76 : vector<2x8x8xf32>
    %78 = math.exp %77 : vector<2x8x8xf32>
    %cst_43 = arith.constant dense<0.000000e+00> : vector<2x8xf32>
    %79 = vector.multi_reduction <add>, %78, %cst_43 [2] : vector<2x8x8xf32> to vector<2x8xf32>
    %80 = vector.shape_cast %79 : vector<2x8xf32> to vector<2x8x1xf32>
    %81 = tpu.reciprocal %80 {approx = true} : vector<2x8x1xf32> -> vector<2x8x1xf32>
    %82 = vector.broadcast %81 : vector<2x8x1xf32> to vector<2x8x8xf32>
    %83 = arith.mulf %78, %82 : vector<2x8x8xf32>
    %cst_44 = arith.constant dense<0.000000e+00> : vector<2x8x8xf32>
    %84 = tpu.matmul %83, %68, %cst_44 {dimension_numbers = #tpu.dot_dimension_numbers<[2], [1], [1], [2], [0, 0, 0, 1, 1, 2], [0], [0]>} : vector<2x8x8xf32>, vector<2x8x8xf32>, vector<2x8x8xf32> -> vector<2x8x8xf32>
    %85 = vector.shape_cast %84 : vector<2x8x8xf32> to vector<16x8xf32>
    %86 = arith.truncf %85 : vector<16x8xf32> to vector<16x8xbf16>
    %87 = vector.extract_strided_slice %40 {offsets = [8, 0], sizes = [8, 32], strides = [1, 1]} : vector<32x32xbf16> to vector<8x32xbf16>
    %cst_45 = arith.constant dense<0.000000e+00> : vector<16x32xf32>
    %88 = tpu.matmul %86, %87, %cst_45 {dimension_numbers = #tpu.dot_dimension_numbers<[1], [0], [0], [1], [0, 0, 1, 1], [], []>} : vector<16x8xbf16>, vector<8x32xbf16>, vector<16x32xf32> -> vector<16x32xf32>
    %89 = arith.addf %65, %88 : vector<16x32xf32>
    %90 = vector.extract_strided_slice %24 {offsets = [0, 0, 16], sizes = [2, 8, 8], strides = [1, 1, 1]} : vector<2x8x32xf32> to vector<2x8x8xf32>
    %91 = vector.extract_strided_slice %31 {offsets = [0, 0, 16], sizes = [2, 8, 8], strides = [1, 1, 1]} : vector<2x8x32xf32> to vector<2x8x8xf32>
    %92 = vector.extract_strided_slice %38 {offsets = [0, 0, 16], sizes = [2, 8, 8], strides = [1, 1, 1]} : vector<2x8x32xf32> to vector<2x8x8xf32>
    %cst_46 = arith.constant dense<0.000000e+00> : vector<2x8x8xf32>
    %93 = tpu.matmul %90, %91, %cst_46 {dimension_numbers = #tpu.dot_dimension_numbers<[2], [2], [1], [1], [0, 0, 0, 1, 1, 1], [0], [0]>} : vector<2x8x8xf32>, vector<2x8x8xf32>, vector<2x8x8xf32> -> vector<2x8x8xf32>
    %cst_47 = arith.constant 0.353553385 : f32
    %94 = vector.broadcast %cst_47 : f32 to vector<2x8x8xf32>
    %95 = arith.mulf %93, %94 : vector<2x8x8xf32>
    %96 = vector.broadcast %15 : vector<2x1x8xf32> to vector<2x8x8xf32>
    %97 = arith.addf %95, %96 : vector<2x8x8xf32>
    %cst_48 = arith.constant dense<0xFF800000> : vector<2x8xf32>
    %98 = vector.multi_reduction <maximumf>, %97, %cst_48 [2] : vector<2x8x8xf32> to vector<2x8xf32>
    %99 = vector.shape_cast %98 : vector<2x8xf32> to vector<2x8x1xf32>
    %100 = vector.broadcast %99 : vector<2x8x1xf32> to vector<2x8x8xf32>
    %101 = arith.subf %97, %100 : vector<2x8x8xf32>
    %102 = math.exp %101 : vector<2x8x8xf32>
    %cst_49 = arith.constant dense<0.000000e+00> : vector<2x8xf32>
    %103 = vector.multi_reduction <add>, %102, %cst_49 [2] : vector<2x8x8xf32> to vector<2x8xf32>
    %104 = vector.shape_cast %103 : vector<2x8xf32> to vector<2x8x1xf32>
    %105 = tpu.reciprocal %104 {approx = true} : vector<2x8x1xf32> -> vector<2x8x1xf32>
    %106 = vector.broadcast %105 : vector<2x8x1xf32> to vector<2x8x8xf32>
    %107 = arith.mulf %102, %106 : vector<2x8x8xf32>
    %cst_50 = arith.constant dense<0.000000e+00> : vector<2x8x8xf32>
    %108 = tpu.matmul %107, %92, %cst_50 {dimension_numbers = #tpu.dot_dimension_numbers<[2], [1], [1], [2], [0, 0, 0, 1, 1, 2], [0], [0]>} : vector<2x8x8xf32>, vector<2x8x8xf32>, vector<2x8x8xf32> -> vector<2x8x8xf32>
    %109 = vector.shape_cast %108 : vector<2x8x8xf32> to vector<16x8xf32>
    %110 = arith.truncf %109 : vector<16x8xf32> to vector<16x8xbf16>
    %111 = vector.extract_strided_slice %40 {offsets = [16, 0], sizes = [8, 32], strides = [1, 1]} : vector<32x32xbf16> to vector<8x32xbf16>
    %cst_51 = arith.constant dense<0.000000e+00> : vector<16x32xf32>
    %112 = tpu.matmul %110, %111, %cst_51 {dimension_numbers = #tpu.dot_dimension_numbers<[1], [0], [0], [1], [0, 0, 1, 1], [], []>} : vector<16x8xbf16>, vector<8x32xbf16>, vector<16x32xf32> -> vector<16x32xf32>
    %113 = arith.addf %89, %112 : vector<16x32xf32>
    %114 = vector.extract_strided_slice %24 {offsets = [0, 0, 24], sizes = [2, 8, 8], strides = [1, 1, 1]} : vector<2x8x32xf32> to vector<2x8x8xf32>
    %115 = vector.extract_strided_slice %31 {offsets = [0, 0, 24], sizes = [2, 8, 8], strides = [1, 1, 1]} : vector<2x8x32xf32> to vector<2x8x8xf32>
    %116 = vector.extract_strided_slice %38 {offsets = [0, 0, 24], sizes = [2, 8, 8], strides = [1, 1, 1]} : vector<2x8x32xf32> to vector<2x8x8xf32>
    %cst_52 = arith.constant dense<0.000000e+00> : vector<2x8x8xf32>
    %117 = tpu.matmul %114, %115, %cst_52 {dimension_numbers = #tpu.dot_dimension_numbers<[2], [2], [1], [1], [0, 0, 0, 1, 1, 1], [0], [0]>} : vector<2x8x8xf32>, vector<2x8x8xf32>, vector<2x8x8xf32> -> vector<2x8x8xf32>
    %cst_53 = arith.constant 0.353553385 : f32
    %118 = vector.broadcast %cst_53 : f32 to vector<2x8x8xf32>
    %119 = arith.mulf %117, %118 : vector<2x8x8xf32>
    %120 = vector.broadcast %15 : vector<2x1x8xf32> to vector<2x8x8xf32>
    %121 = arith.addf %119, %120 : vector<2x8x8xf32>
    %cst_54 = arith.constant dense<0xFF800000> : vector<2x8xf32>
    %122 = vector.multi_reduction <maximumf>, %121, %cst_54 [2] : vector<2x8x8xf32> to vector<2x8xf32>
    %123 = vector.shape_cast %122 : vector<2x8xf32> to vector<2x8x1xf32>
    %124 = vector.broadcast %123 : vector<2x8x1xf32> to vector<2x8x8xf32>
    %125 = arith.subf %121, %124 : vector<2x8x8xf32>
    %126 = math.exp %125 : vector<2x8x8xf32>
    %cst_55 = arith.constant dense<0.000000e+00> : vector<2x8xf32>
    %127 = vector.multi_reduction <add>, %126, %cst_55 [2] : vector<2x8x8xf32> to vector<2x8xf32>
    %128 = vector.shape_cast %127 : vector<2x8xf32> to vector<2x8x1xf32>
    %129 = tpu.reciprocal %128 {approx = true} : vector<2x8x1xf32> -> vector<2x8x1xf32>
    %130 = vector.broadcast %129 : vector<2x8x1xf32> to vector<2x8x8xf32>
    %131 = arith.mulf %126, %130 : vector<2x8x8xf32>
    %cst_56 = arith.constant dense<0.000000e+00> : vector<2x8x8xf32>
    %132 = tpu.matmul %131, %116, %cst_56 {dimension_numbers = #tpu.dot_dimension_numbers<[2], [1], [1], [2], [0, 0, 0, 1, 1, 2], [0], [0]>} : vector<2x8x8xf32>, vector<2x8x8xf32>, vector<2x8x8xf32> -> vector<2x8x8xf32>
    %133 = vector.shape_cast %132 : vector<2x8x8xf32> to vector<16x8xf32>
    %134 = arith.truncf %133 : vector<16x8xf32> to vector<16x8xbf16>
    %135 = vector.extract_strided_slice %40 {offsets = [24, 0], sizes = [8, 32], strides = [1, 1]} : vector<32x32xbf16> to vector<8x32xbf16>
    %cst_57 = arith.constant dense<0.000000e+00> : vector<16x32xf32>
    %136 = tpu.matmul %134, %135, %cst_57 {dimension_numbers = #tpu.dot_dimension_numbers<[1], [0], [0], [1], [0, 0, 1, 1], [], []>} : vector<16x8xbf16>, vector<8x32xbf16>, vector<16x32xf32> -> vector<16x32xf32>
    %137 = arith.addf %113, %136 : vector<16x32xf32>
    %138 = vector.extract_strided_slice %10 {offsets = [3, 0], sizes = [1, 32], strides = [1, 1]} : vector<4x32xf32> to vector<1x32xf32>
    %139 = vector.broadcast %138 : vector<1x32xf32> to vector<16x32xf32>
    %140 = arith.addf %137, %139 : vector<16x32xf32>
    %141 = vector.shape_cast %140 : vector<16x32xf32> to vector<2x8x32xf32>
    %142 = arith.addf %4, %141 : vector<2x8x32xf32>
    %143 = vector.extract_strided_slice %6 {offsets = [0, 0], sizes = [1, 32], strides = [1, 1]} : vector<3x32xf32> to vector<1x32xf32>
    %144 = vector.extract_strided_slice %8 {offsets = [0, 0], sizes = [1, 32], strides = [1, 1]} : vector<3x32xf32> to vector<1x32xf32>
    %cst_58 = arith.constant dense<0.000000e+00> : vector<2x8xf32>
    %145 = vector.multi_reduction <add>, %142, %cst_58 [2] : vector<2x8x32xf32> to vector<2x8xf32>
    %146 = vector.shape_cast %145 : vector<2x8xf32> to vector<2x8x1xf32>
    %cst_59 = arith.constant 3.200000e+01 : f32
    %147 = vector.broadcast %cst_59 : f32 to vector<2x8x1xf32>
    %148 = arith.divf %146, %147 : vector<2x8x1xf32>
    %149 = vector.broadcast %148 : vector<2x8x1xf32> to vector<2x8x32xf32>
    %150 = arith.subf %142, %149 : vector<2x8x32xf32>
    %151 = arith.mulf %150, %150 : vector<2x8x32xf32>
    %cst_60 = arith.constant dense<0.000000e+00> : vector<2x8xf32>
    %152 = vector.multi_reduction <add>, %151, %cst_60 [2] : vector<2x8x32xf32> to vector<2x8xf32>
    %153 = vector.shape_cast %152 : vector<2x8xf32> to vector<2x8x1xf32>
    %cst_61 = arith.constant 3.200000e+01 : f32
    %154 = vector.broadcast %cst_61 : f32 to vector<2x8x1xf32>
    %155 = arith.divf %153, %154 : vector<2x8x1xf32>
    %cst_62 = arith.constant 9.99999974E-6 : f32
    %156 = vector.broadcast %cst_62 : f32 to vector<2x8x1xf32>
    %157 = arith.addf %155, %156 : vector<2x8x1xf32>
    %158 = math.rsqrt %157 : vector<2x8x1xf32>
    %159 = vector.broadcast %158 : vector<2x8x1xf32> to vector<2x8x32xf32>
    %160 = arith.mulf %150, %159 : vector<2x8x32xf32>
    %161 = vector.shape_cast %143 : vector<1x32xf32> to vector<1x1x32xf32>
    %162 = vector.broadcast %161 : vector<1x1x32xf32> to vector<2x8x32xf32>
    %163 = arith.mulf %160, %162 : vector<2x8x32xf32>
    %164 = vector.shape_cast %144 : vector<1x32xf32> to vector<1x1x32xf32>
    %165 = vector.broadcast %164 : vector<1x1x32xf32> to vector<2x8x32xf32>
    %166 = arith.addf %163, %165 : vector<2x8x32xf32>
    %c0_63 = arith.constant 0 : index
    %c0_64 = arith.constant 0 : index
    %c0_65 = arith.constant 0 : index
    %c0_66 = arith.constant 0 : index
    %167 = vector.load %arg5[%c0_63, %c0_64, %c0_65, %c0_66] : memref<1x1x2x32xf32, #tpu.memory_space<vmem>>, vector<1x1x2x32xf32>
    %168 = vector.shape_cast %167 : vector<1x1x2x32xf32> to vector<2x32xf32>
    %169 = vector.shape_cast %168 : vector<2x32xf32> to vector<2x1x32xf32>
    %170 = vector.broadcast %169 : vector<2x1x32xf32> to vector<2x8x32xf32>
    %171 = arith.addf %166, %170 : vector<2x8x32xf32>
    %172 = vector.extract_strided_slice %6 {offsets = [1, 0], sizes = [1, 32], strides = [1, 1]} : vector<3x32xf32> to vector<1x32xf32>
    %173 = vector.extract_strided_slice %8 {offsets = [1, 0], sizes = [1, 32], strides = [1, 1]} : vector<3x32xf32> to vector<1x32xf32>
    %cst_67 = arith.constant dense<0.000000e+00> : vector<2x8xf32>
    %174 = vector.multi_reduction <add>, %171, %cst_67 [2] : vector<2x8x32xf32> to vector<2x8xf32>
    %175 = vector.shape_cast %174 : vector<2x8xf32> to vector<2x8x1xf32>
    %cst_68 = arith.constant 3.200000e+01 : f32
    %176 = vector.broadcast %cst_68 : f32 to vector<2x8x1xf32>
    %177 = arith.divf %175, %176 : vector<2x8x1xf32>
    %178 = vector.broadcast %177 : vector<2x8x1xf32> to vector<2x8x32xf32>
    %179 = arith.subf %171, %178 : vector<2x8x32xf32>
    %180 = arith.mulf %179, %179 : vector<2x8x32xf32>
    %cst_69 = arith.constant dense<0.000000e+00> : vector<2x8xf32>
    %181 = vector.multi_reduction <add>, %180, %cst_69 [2] : vector<2x8x32xf32> to vector<2x8xf32>
    %182 = vector.shape_cast %181 : vector<2x8xf32> to vector<2x8x1xf32>
    %cst_70 = arith.constant 3.200000e+01 : f32
    %183 = vector.broadcast %cst_70 : f32 to vector<2x8x1xf32>
    %184 = arith.divf %182, %183 : vector<2x8x1xf32>
    %cst_71 = arith.constant 9.99999974E-6 : f32
    %185 = vector.broadcast %cst_71 : f32 to vector<2x8x1xf32>
    %186 = arith.addf %184, %185 : vector<2x8x1xf32>
    %187 = math.rsqrt %186 : vector<2x8x1xf32>
    %188 = vector.broadcast %187 : vector<2x8x1xf32> to vector<2x8x32xf32>
    %189 = arith.mulf %179, %188 : vector<2x8x32xf32>
    %190 = vector.shape_cast %172 : vector<1x32xf32> to vector<1x1x32xf32>
    %191 = vector.broadcast %190 : vector<1x1x32xf32> to vector<2x8x32xf32>
    %192 = arith.mulf %189, %191 : vector<2x8x32xf32>
    %193 = vector.shape_cast %173 : vector<1x32xf32> to vector<1x1x32xf32>
    %194 = vector.broadcast %193 : vector<1x1x32xf32> to vector<2x8x32xf32>
    %195 = arith.addf %192, %194 : vector<2x8x32xf32>
    %196 = vector.shape_cast %195 : vector<2x8x32xf32> to vector<16x32xf32>
    %197 = arith.truncf %196 : vector<16x32xf32> to vector<16x32xbf16>
    %c0_72 = arith.constant 0 : index
    %c0_73 = arith.constant 0 : index
    %c0_74 = arith.constant 0 : index
    %198 = vector.load %arg9[%c0_72, %c0_73, %c0_74] : memref<1x32x64xbf16, #tpu.memory_space<vmem>>, vector<1x32x64xbf16>
    %199 = vector.shape_cast %198 : vector<1x32x64xbf16> to vector<32x64xbf16>
    %cst_75 = arith.constant dense<0.000000e+00> : vector<16x64xf32>
    %200 = tpu.matmul %197, %199, %cst_75 {dimension_numbers = #tpu.dot_dimension_numbers<[1], [0], [0], [1], [0, 0, 1, 1], [], []>} : vector<16x32xbf16>, vector<32x64xbf16>, vector<16x64xf32> -> vector<16x64xf32>
    %c0_76 = arith.constant 0 : index
    %c0_77 = arith.constant 0 : index
    %c0_78 = arith.constant 0 : index
    %201 = vector.load %arg10[%c0_76, %c0_77, %c0_78] : memref<1x1x64xf32, #tpu.memory_space<vmem>>, vector<1x1x64xf32>
    %202 = vector.shape_cast %201 : vector<1x1x64xf32> to vector<1x64xf32>
    %203 = vector.broadcast %202 : vector<1x64xf32> to vector<16x64xf32>
    %204 = arith.addf %200, %203 : vector<16x64xf32>
    %cst_79 = arith.constant 0.000000e+00 : f32
    %205 = vector.broadcast %cst_79 : f32 to vector<16x64xf32>
    %206 = arith.maximumf %204, %205 : vector<16x64xf32>
    %207 = arith.truncf %206 : vector<16x64xf32> to vector<16x64xbf16>
    %c0_80 = arith.constant 0 : index
    %c0_81 = arith.constant 0 : index
    %c0_82 = arith.constant 0 : index
    %208 = vector.load %arg11[%c0_80, %c0_81, %c0_82] : memref<1x64x32xbf16, #tpu.memory_space<vmem>>, vector<1x64x32xbf16>
    %209 = vector.shape_cast %208 : vector<1x64x32xbf16> to vector<64x32xbf16>
    %cst_83 = arith.constant dense<0.000000e+00> : vector<16x32xf32>
    %210 = tpu.matmul %207, %209, %cst_83 {dimension_numbers = #tpu.dot_dimension_numbers<[1], [0], [0], [1], [0, 0, 1, 1], [], []>} : vector<16x64xbf16>, vector<64x32xbf16>, vector<16x32xf32> -> vector<16x32xf32>
    %c0_84 = arith.constant 0 : index
    %c0_85 = arith.constant 0 : index
    %c0_86 = arith.constant 0 : index
    %211 = vector.load %arg12[%c0_84, %c0_85, %c0_86] : memref<1x1x32xf32, #tpu.memory_space<vmem>>, vector<1x1x32xf32>
    %212 = vector.shape_cast %211 : vector<1x1x32xf32> to vector<1x32xf32>
    %213 = vector.broadcast %212 : vector<1x32xf32> to vector<16x32xf32>
    %214 = arith.addf %210, %213 : vector<16x32xf32>
    %215 = vector.shape_cast %214 : vector<16x32xf32> to vector<2x8x32xf32>
    %216 = arith.addf %195, %215 : vector<2x8x32xf32>
    %217 = vector.extract_strided_slice %6 {offsets = [2, 0], sizes = [1, 32], strides = [1, 1]} : vector<3x32xf32> to vector<1x32xf32>
    %218 = vector.extract_strided_slice %8 {offsets = [2, 0], sizes = [1, 32], strides = [1, 1]} : vector<3x32xf32> to vector<1x32xf32>
    %cst_87 = arith.constant dense<0.000000e+00> : vector<2x8xf32>
    %219 = vector.multi_reduction <add>, %216, %cst_87 [2] : vector<2x8x32xf32> to vector<2x8xf32>
    %220 = vector.shape_cast %219 : vector<2x8xf32> to vector<2x8x1xf32>
    %cst_88 = arith.constant 3.200000e+01 : f32
    %221 = vector.broadcast %cst_88 : f32 to vector<2x8x1xf32>
    %222 = arith.divf %220, %221 : vector<2x8x1xf32>
    %223 = vector.broadcast %222 : vector<2x8x1xf32> to vector<2x8x32xf32>
    %224 = arith.subf %216, %223 : vector<2x8x32xf32>
    %225 = arith.mulf %224, %224 : vector<2x8x32xf32>
    %cst_89 = arith.constant dense<0.000000e+00> : vector<2x8xf32>
    %226 = vector.multi_reduction <add>, %225, %cst_89 [2] : vector<2x8x32xf32> to vector<2x8xf32>
    %227 = vector.shape_cast %226 : vector<2x8xf32> to vector<2x8x1xf32>
    %cst_90 = arith.constant 3.200000e+01 : f32
    %228 = vector.broadcast %cst_90 : f32 to vector<2x8x1xf32>
    %229 = arith.divf %227, %228 : vector<2x8x1xf32>
    %cst_91 = arith.constant 9.99999974E-6 : f32
    %230 = vector.broadcast %cst_91 : f32 to vector<2x8x1xf32>
    %231 = arith.addf %229, %230 : vector<2x8x1xf32>
    %232 = math.rsqrt %231 : vector<2x8x1xf32>
    %233 = vector.broadcast %232 : vector<2x8x1xf32> to vector<2x8x32xf32>
    %234 = arith.mulf %224, %233 : vector<2x8x32xf32>
    %235 = vector.shape_cast %217 : vector<1x32xf32> to vector<1x1x32xf32>
    %236 = vector.broadcast %235 : vector<1x1x32xf32> to vector<2x8x32xf32>
    %237 = arith.mulf %234, %236 : vector<2x8x32xf32>
    %238 = vector.shape_cast %218 : vector<1x32xf32> to vector<1x1x32xf32>
    %239 = vector.broadcast %238 : vector<1x1x32xf32> to vector<2x8x32xf32>
    %240 = arith.addf %237, %239 : vector<2x8x32xf32>
    %c0_92 = arith.constant 0 : index
    %c0_93 = arith.constant 0 : index
    %c0_94 = arith.constant 0 : index
    %241 = vector.load %arg16[%c0_92, %c0_93, %c0_94] : memref<2x8x32xf32, #tpu.memory_space<vmem>>, vector<2x8x32xf32>
    tpu.vector_store %arg16[%c0_92, %c0_93, %c0_94], %240 {strides = array<i32>} : memref<2x8x32xf32, #tpu.memory_space<vmem>>, vector<2x8x32xf32>,
    %c1_i32 = arith.constant 1 : i32
    %242 = arith.cmpi eq, %arg1, %c1_i32 : i32
    %243 = arith.extui %242 : i1 to i32
    %c0_i32_95 = arith.constant 0 : i32
    %244 = arith.cmpi ne, %243, %c0_i32_95 : i32
    scf.if %244 {
      %245 = vector.extract_strided_slice %0 {offsets = [6, 0], sizes = [1, 32], strides = [1, 1]} : vector<8x32xf32> to vector<1x32xf32>
      %246 = vector.extract_strided_slice %0 {offsets = [5, 0], sizes = [1, 1], strides = [1, 1]} : vector<8x32xf32> to vector<1x1xf32>
      %247 = vector.shape_cast %245 : vector<1x32xf32> to vector<1x1x32xf32>
      %248 = vector.broadcast %247 : vector<1x1x32xf32> to vector<2x8x32xf32>
      %249 = arith.mulf %240, %248 : vector<2x8x32xf32>
      %cst_96 = arith.constant dense<0.000000e+00> : vector<2x8xf32>
      %250 = vector.multi_reduction <add>, %249, %cst_96 [2] : vector<2x8x32xf32> to vector<2x8xf32>
      %251 = vector.broadcast %246 : vector<1x1xf32> to vector<2x8xf32>
      %252 = arith.addf %250, %251 : vector<2x8xf32>
      %c0_97 = arith.constant 0 : index
      %c0_98 = arith.constant 0 : index
      %c0_99 = arith.constant 0 : index
      %253 = vector.load %arg15[%c0_97, %c0_98, %c0_99] : memref<1x2x8xf32, #tpu.memory_space<vmem>>, vector<1x2x8xf32>
      %254 = vector.shape_cast %253 : vector<1x2x8xf32> to vector<2x8xf32>
      %255 = vector.shape_cast %252 : vector<2x8xf32> to vector<1x2x8xf32>
      tpu.vector_store %arg15[%c0_97, %c0_98, %c0_99], %255 {strides = array<i32>} : memref<1x2x8xf32, #tpu.memory_space<vmem>>, vector<1x2x8xf32>,
    } else {
    }
    return
  }
  func.func @transform_0(%arg0: i32, %arg1: i32) -> (i32, i32, i32) {
    %c0_i32 = arith.constant 0 : i32
    %c0_i32_0 = arith.constant 0 : i32
    %c0_i32_1 = arith.constant 0 : i32
    return %arg0, %c0_i32, %c0_i32_0 : i32, i32, i32
  }
  func.func @transform_1(%arg0: i32, %arg1: i32) -> (i32, i32, i32) {
    %c0_i32 = arith.constant 0 : i32
    %c0_i32_0 = arith.constant 0 : i32
    %c0_i32_1 = arith.constant 0 : i32
    return %arg0, %c0_i32, %c0_i32_0 : i32, i32, i32
  }
  func.func @transform_2(%arg0: i32, %arg1: i32) -> (i32, i32, i32) {
    %c0_i32 = arith.constant 0 : i32
    %c0_i32_0 = arith.constant 0 : i32
    %c0_i32_1 = arith.constant 0 : i32
    return %arg0, %c0_i32, %c0_i32_0 : i32, i32, i32
  }
  func.func @transform_3(%arg0: i32, %arg1: i32) -> (i32, i32, i32, i32) {
    %c0_i32 = arith.constant 0 : i32
    %c0_i32_0 = arith.constant 0 : i32
    %c0_i32_1 = arith.constant 0 : i32
    return %arg0, %arg1, %c0_i32, %c0_i32_0 : i32, i32, i32, i32
  }
  func.func @transform_4(%arg0: i32, %arg1: i32) -> (i32, i32) {
    %c0_i32 = arith.constant 0 : i32
    %c0_i32_0 = arith.constant 0 : i32
    %c0_i32_1 = arith.constant 0 : i32
    return %c0_i32, %c0_i32_0 : i32, i32
  }
  func.func @transform_5(%arg0: i32, %arg1: i32) -> (i32, i32, i32, i32) {
    %c0_i32 = arith.constant 0 : i32
    %c0_i32_0 = arith.constant 0 : i32
    %c0_i32_1 = arith.constant 0 : i32
    %c0_i32_2 = arith.constant 0 : i32
    return %arg1, %c0_i32, %c0_i32_0, %c0_i32_1 : i32, i32, i32, i32
  }
  func.func @transform_6(%arg0: i32, %arg1: i32) -> (i32, i32, i32) {
    %c0_i32 = arith.constant 0 : i32
    %c0_i32_0 = arith.constant 0 : i32
    %c0_i32_1 = arith.constant 0 : i32
    return %arg1, %c0_i32, %c0_i32_0 : i32, i32, i32
  }
  func.func @transform_7(%arg0: i32, %arg1: i32) -> (i32, i32, i32) {
    %c0_i32 = arith.constant 0 : i32
    %c0_i32_0 = arith.constant 0 : i32
    %c0_i32_1 = arith.constant 0 : i32
    return %arg1, %c0_i32, %c0_i32_0 : i32, i32, i32
  }
  func.func @transform_8(%arg0: i32, %arg1: i32) -> (i32, i32, i32) {
    %c0_i32 = arith.constant 0 : i32
    %c0_i32_0 = arith.constant 0 : i32
    %c0_i32_1 = arith.constant 0 : i32
    return %arg1, %c0_i32, %c0_i32_0 : i32, i32, i32
  }
  func.func @transform_9(%arg0: i32, %arg1: i32) -> (i32, i32, i32) {
    %c0_i32 = arith.constant 0 : i32
    %c0_i32_0 = arith.constant 0 : i32
    %c0_i32_1 = arith.constant 0 : i32
    return %arg1, %c0_i32, %c0_i32_0 : i32, i32, i32
  }
  func.func @transform_10(%arg0: i32, %arg1: i32) -> (i32, i32, i32) {
    %c0_i32 = arith.constant 0 : i32
    %c0_i32_0 = arith.constant 0 : i32
    %c0_i32_1 = arith.constant 0 : i32
    return %arg1, %c0_i32, %c0_i32_0 : i32, i32, i32
  }
  func.func @transform_11(%arg0: i32, %arg1: i32) -> (i32, i32, i32) {
    %c0_i32 = arith.constant 0 : i32
    %c0_i32_0 = arith.constant 0 : i32
    %c0_i32_1 = arith.constant 0 : i32
    return %arg1, %c0_i32, %c0_i32_0 : i32, i32, i32
  }
  func.func @transform_12(%arg0: i32, %arg1: i32) -> (i32, i32, i32) {
    %c0_i32 = arith.constant 0 : i32
    %c0_i32_0 = arith.constant 0 : i32
    %c0_i32_1 = arith.constant 0 : i32
    return %arg1, %c0_i32, %c0_i32_0 : i32, i32, i32
  }
  func.func @transform_13(%arg0: i32, %arg1: i32) -> (i32, i32, i32) {
    %c0_i32 = arith.constant 0 : i32
    %c0_i32_0 = arith.constant 0 : i32
    %c0_i32_1 = arith.constant 0 : i32
    return %arg0, %c0_i32, %c0_i32_0 : i32, i32, i32
  }
}

</mosaic_0001>

<llo_original>
// kernel: tpu_custom_call.1
$region0: #{tpu_custom_call.1}
  #allocation0 [shape = 'u32[]', space=smem, size = 0x4, offset = 0x4, fixed_abs, tag = 'smem constant byte address 0x4 - core index']
  #allocation1 [shape = 'u32[144,128]{1,0:T(1,128)}', space=vmem, size = 0x12000, scoped, tag = 'internal scratch']
  #allocation2 [shape = 'f32[2,8,32]{2,1,0:T(8,128)}', space=vmem, size = 0x2000, scoped, tag = 'scratch operand']
  %s0 = inlined_call_operand.hbm [shape: f32[1,2,8], index: 0, kind: input, shape index: {}]
  %s1 = inlined_call_operand.vmem [shape: f32[1,2,1], index: 1, kind: input, shape index: {}]
  %s2 = inlined_call_operand.hbm [shape: f32[1,2,8], index: 2, kind: input, shape index: {}]
  %s3 = inlined_call_operand.hbm [shape: f32[1,2,2,32], index: 3, kind: input, shape index: {}]
  %s4 = inlined_call_operand.hbm [shape: f32[8,32], index: 4, kind: input, shape index: {}]
  %s5 = inlined_call_operand.vmem [shape: bf16[2,4,32,32], index: 5, kind: input, shape index: {}]
  %s6 = inlined_call_operand.hbm [shape: f32[2,4,32], index: 6, kind: input, shape index: {}]
  %s7 = inlined_call_operand.hbm [shape: bf16[2,32,64], index: 7, kind: input, shape index: {}]
  %s8 = inlined_call_operand.hbm [shape: f32[2,1,64], index: 8, kind: input, shape index: {}]
  %s9 = inlined_call_operand.vmem [shape: bf16[2,64,32], index: 9, kind: input, shape index: {}]
  %s10 = inlined_call_operand.hbm [shape: f32[2,1,32], index: 10, kind: input, shape index: {}]
  %s11 = inlined_call_operand.vmem [shape: f32[2,3,32], index: 11, kind: input, shape index: {}]
  %s12 = inlined_call_operand.vmem [shape: f32[2,3,32], index: 12, kind: input, shape index: {}]
  %s13 = inlined_call_operand.hbm [shape: f32[1,2,8], index: 13, kind: output, shape index: {}]
  %s14 = sld [smem:[#allocation0]]
  $region125: #{tpu_custom_call.1} parent=0
    _
  %s16 = ssub.s32 1, %s14
  %s17 = scalar_select 0, %s16, %s14
  $region1: #{tpu_custom_call.1} parent=0
    #allocation3 [shape = 'u8[1024]{0}', space=vmem, size = 0x400, scoped, tag = 'input window, operand 0, single buffered']
    #allocation4 [shape = 's32[2]{0}', space=sflag, size = 0x8, scoped, tag = 'scoped memory for tpu_custom_call.1']
    #allocation5 [shape = 's32[2]{0}', space=sflag, size = 0x8, scoped, tag = 'scoped memory for tpu_custom_call.1']
    #allocation6 [shape = 'u8[1024]{0}', space=vmem, size = 0x400, scoped, tag = 'input window, operand 2, single buffered']
    #allocation7 [shape = 's32[1]{0}', space=sflag, size = 0x4, scoped, tag = 'scoped memory for tpu_custom_call.1']
    #allocation8 [shape = 'u8[2048]{0}', space=vmem, size = 0x800, scoped, tag = 'input window, operand 3']
    #allocation9 [shape = 'u8[4096]{0}', space=vmem, size = 0x1000, scoped, tag = 'input window, operand 4, single buffered']
    #allocation10 [shape = 'u8[4096]{0}', space=vmem, size = 0x1000, scoped, tag = 'input window, operand 6']
    #allocation11 [shape = 's32[2]{0}', space=sflag, size = 0x8, scoped, tag = 'scoped memory for tpu_custom_call.1']
    #allocation12 [shape = 'u8[16384]{0}', space=vmem, size = 0x4000, scoped, tag = 'input window, operand 7']
    #allocation13 [shape = 'u8[1024]{0}', space=vmem, size = 0x400, scoped, tag = 'input window, operand 8']
    #allocation14 [shape = 's32[2]{0}', space=sflag, size = 0x8, scoped, tag = 'scoped memory for tpu_custom_call.1']
    #allocation15 [shape = 'u8[1024]{0}', space=vmem, size = 0x400, scoped, tag = 'input window, operand 10']
    #allocation16 [shape = 'u8[1024]{0}', space=vmem, size = 0x400, scoped, tag = 'output window, operand 0, single buffered']
    %18 = vsyncpa [#allocation4], 0
    %19 = vsyncpa [#allocation7], 0
    %20 = vsyncpa [#allocation11], 0
    %s21 = scalar_lea.sflag [#allocation11], 1
    %22 = vsyncpa %s21, 0
    %23 = vsyncpa [#allocation14], 0
    %s24 = scalar_lea.sflag [#allocation14], 1
    %25 = vsyncpa %s24, 0
    %26 = vsyncpa [#allocation5], 0
    loop: start=0, step=1, limit=4
    $region2: #{tpu_custom_call.1} parent=1 // loop_pre_header
      _
    $region3: #{tpu_custom_call.1} parent=1 // loop_header
      %s28 = sphi 0, %s32
      %p29 = scmp.ge.s32.totalorder %s28, 4
      %s35 = sphi 0, %s47
      %s36 = sphi 0, %s43
      %s37 = sphi 0, %s35
      %s38 = sphi 0, %s36
      %s39 = sphi 0, %s37
      %s40 = sphi 0, %s38
      %s50 = sphi 0, %s52
      %s53 = sphi 0, %s50
      %s54 = sphi 0, %s53
      %s70 = sphi 0, %s54
      %s76 = sphi 0, %s78
      %s79 = sphi 0, %s76
      %s80 = sphi 0, %s79
      %s96 = sphi 0, %s80
      %s102 = sphi 0, %s104
      %s105 = sphi 0, %s102
      %s106 = sphi 0, %s105
      %s122 = sphi 0, %s106
      %s130 = sphi 0, %s132
      %s133 = sphi 0, %s130
      %s134 = sphi 0, %s133
      %s150 = sphi 0, %s134
      %s154 = sphi 0, %s154
      %s156 = sphi 0, %s154
      %s157 = sphi 0, %s156
      %s171 = sphi 0, %s157
      %s177 = sphi 0, %s179
      %s180 = sphi 0, %s177
      %s181 = sphi 0, %s180
      %s197 = sphi 0, %s181
      %s203 = sphi 0, %s205
      %s206 = sphi 0, %s203
      %s207 = sphi 0, %s206
      %s223 = sphi 0, %s207
      %s229 = sphi 0, %s231
      %s232 = sphi 0, %s229
      %s233 = sphi 0, %s232
      %s249 = sphi 0, %s233
      %s255 = sphi 0, %s257
      %s258 = sphi 0, %s255
      %s259 = sphi 0, %s258
      %s275 = sphi 0, %s259
      %s281 = sphi 0, %s283
      %s284 = sphi 0, %s281
      %s285 = sphi 0, %s284
      %s301 = sphi 0, %s285
      %s307 = sphi 0, %s309
      %s310 = sphi 0, %s307
      %s311 = sphi 0, %s310
      %s327 = sphi 0, %s311
      %s333 = sphi 0, %s335
      %s336 = sphi 0, %s333
      %s337 = sphi 0, %s336
      %s353 = sphi 0, %s337
      %s359 = sphi 0, %s361
      %s362 = sphi 0, %s359
      %s363 = sphi 0, %s362
      %s379 = sphi 0, %s363
      %s385 = sphi 0, %s387
      %s388 = sphi 0, %s385
      %s389 = sphi 0, %s388
      %s405 = sphi 0, %s389
    $region4: #{tpu_custom_call.1} parent=1 // loop_header_branch
      %31 = sbr.rel (%p29) target = $region8
    $region5: #{tpu_custom_call.1} parent=1 // loop_body
      %s33 = ssub.s32 %s28, 1
      %s34 = ssub.s32 %s28, 2
      %s41 = sadd.s32 1, %s36
      %p42 = scmp.ge.s32.totalorder %s41, 2
      %s43 = scalar_select %p42, 0, %s41
      %s44 = sadd.s32 1, %s35
      %s45 = scalar_select %p42, %s44, %s35
      %p46 = scmp.ge.s32.totalorder %s45, 1
      %s47 = scalar_select %p46, 0, %s45
      %s48 = ssub.s32 %s35, %s47
      %p49 = scmp.eq.s32.totalorder %s48, 0
      %s51 = sadd.s32 %s50, 1
      %s52 = scalar_select %p49, %s50, %s51
      %p55 = pneg %p49
      %p56 = scmp.eq.s32.totalorder %s28, 1
      %p57 = por %p55, %p56
      %p58 = scmp.ne.s32.totalorder %s50, %s53
      %p59 = scmp.eq.s32.totalorder %s28, 0
      %p60 = por %p58, %p59
      %p61 = scmp.ne.s32.totalorder %s50, %s53
      %p62 = scmp.eq.s32.totalorder %s33, 1
      %p63 = por %p61, %p62
      %p64 = scmp.ne.s32.totalorder %s53, %s54
      %p65 = scmp.eq.s32.totalorder %s33, 0
      %p66 = por %p64, %p65
      %p67 = scmp.ne.s32.totalorder %s53, %s54
      %p68 = scmp.eq.s32.totalorder %s34, 1
      %p69 = por %p67, %p68
      %p71 = scmp.ne.s32.totalorder %s54, %s70
      %p72 = scmp.eq.s32.totalorder %s34, 0
      %p73 = por %p71, %p72
      %s74 = ssub.s32 %s35, %s47
      %p75 = scmp.eq.s32.totalorder %s74, 0
      %s77 = sadd.s32 %s76, 1
      %s78 = scalar_select %p75, %s76, %s77
      %p81 = pneg %p75
      %p82 = scmp.eq.s32.totalorder %s28, 1
      %p83 = por %p81, %p82
      %p84 = scmp.ne.s32.totalorder %s76, %s79
      %p85 = scmp.eq.s32.totalorder %s28, 0
      %p86 = por %p84, %p85
      %p87 = scmp.ne.s32.totalorder %s76, %s79
      %p88 = scmp.eq.s32.totalorder %s33, 1
      %p89 = por %p87, %p88
      %p90 = scmp.ne.s32.totalorder %s79, %s80
      %p91 = scmp.eq.s32.totalorder %s33, 0
      %p92 = por %p90, %p91
      %p93 = scmp.ne.s32.totalorder %s79, %s80
      %p94 = scmp.eq.s32.totalorder %s34, 1
      %p95 = por %p93, %p94
      %p97 = scmp.ne.s32.totalorder %s80, %s96
      %p98 = scmp.eq.s32.totalorder %s34, 0
      %p99 = por %p97, %p98
      %s100 = ssub.s32 %s35, %s47
      %p101 = scmp.eq.s32.totalorder %s100, 0
      %s103 = sadd.s32 %s102, 1
      %s104 = scalar_select %p101, %s102, %s103
      %p107 = pneg %p101
      %p108 = scmp.eq.s32.totalorder %s28, 1
      %p109 = por %p107, %p108
      %p110 = scmp.ne.s32.totalorder %s102, %s105
      %p111 = scmp.eq.s32.totalorder %s28, 0
      %p112 = por %p110, %p111
      %p113 = scmp.ne.s32.totalorder %s102, %s105
      %p114 = scmp.eq.s32.totalorder %s33, 1
      %p115 = por %p113, %p114
      %p116 = scmp.ne.s32.totalorder %s105, %s106
      %p117 = scmp.eq.s32.totalorder %s33, 0
      %p118 = por %p116, %p117
      %p119 = scmp.ne.s32.totalorder %s105, %s106
      %p120 = scmp.eq.s32.totalorder %s34, 1
      %p121 = por %p119, %p120
      %p123 = scmp.ne.s32.totalorder %s106, %s122
      %p124 = scmp.eq.s32.totalorder %s34, 0
      %p125 = por %p123, %p124
      %s126 = ssub.s32 %s35, %s47
      %s127 = ssub.s32 %s36, %s43
      %s128 = sor.u32 %s126, %s127
      %p129 = scmp.eq.s32.totalorder %s128, 0
      %s131 = sadd.s32 %s130, 1
      %s132 = scalar_select %p129, %s130, %s131
      %p135 = pneg %p129
      %p136 = scmp.eq.s32.totalorder %s28, 1
      %p137 = por %p135, %p136
      %p138 = scmp.ne.s32.totalorder %s130, %s133
      %p139 = scmp.eq.s32.totalorder %s28, 0
      %p140 = por %p138, %p139
      %p141 = scmp.ne.s32.totalorder %s130, %s133
      %p142 = scmp.eq.s32.totalorder %s33, 1
      %p143 = por %p141, %p142
      %p144 = scmp.ne.s32.totalorder %s133, %s134
      %p145 = scmp.eq.s32.totalorder %s33, 0
      %p146 = por %p144, %p145
      %p147 = scmp.ne.s32.totalorder %s133, %s134
      %p148 = scmp.eq.s32.totalorder %s34, 1
      %p149 = por %p147, %p148
      %p151 = scmp.ne.s32.totalorder %s134, %s150
      %p152 = scmp.eq.s32.totalorder %s34, 0
      %p153 = por %p151, %p152
      %s155 = sadd.s32 %s154, 1
      %p158 = scmp.eq.s32.totalorder %s28, 1
      %p159 = scmp.ne.s32.totalorder %s154, %s156
      %p160 = scmp.eq.s32.totalorder %s28, 0
      %p161 = por %p159, %p160
      %p162 = scmp.ne.s32.totalorder %s154, %s156
      %p163 = scmp.eq.s32.totalorder %s33, 1
      %p164 = por %p162, %p163
      %p165 = scmp.ne.s32.totalorder %s156, %s157
      %p166 = scmp.eq.s32.totalorder %s33, 0
      %p167 = por %p165, %p166
      %p168 = scmp.ne.s32.totalorder %s156, %s157
      %p169 = scmp.eq.s32.totalorder %s34, 1
      %p170 = por %p168, %p169
      %p172 = scmp.ne.s32.totalorder %s157, %s171
      %p173 = scmp.eq.s32.totalorder %s34, 0
      %p174 = por %p172, %p173
      %s175 = ssub.s32 %s36, %s43
      %p176 = scmp.eq.s32.totalorder %s175, 0
      %s178 = sadd.s32 %s177, 1
      %s179 = scalar_select %p176, %s177, %s178
      %p182 = pneg %p176
      %p183 = scmp.eq.s32.totalorder %s28, 1
      %p184 = por %p182, %p183
      %p185 = scmp.ne.s32.totalorder %s177, %s180
      %p186 = scmp.eq.s32.totalorder %s28, 0
      %p187 = por %p185, %p186
      %p188 = scmp.ne.s32.totalorder %s177, %s180
      %p189 = scmp.eq.s32.totalorder %s33, 1
      %p190 = por %p188, %p189
      %p191 = scmp.ne.s32.totalorder %s180, %s181
      %p192 = scmp.eq.s32.totalorder %s33, 0
      %p193 = por %p191, %p192
      %p194 = scmp.ne.s32.totalorder %s180, %s181
      %p195 = scmp.eq.s32.totalorder %s34, 1
      %p196 = por %p194, %p195
      %p198 = scmp.ne.s32.totalorder %s181, %s197
      %p199 = scmp.eq.s32.totalorder %s34, 0
      %p200 = por %p198, %p199
      %s201 = ssub.s32 %s36, %s43
      %p202 = scmp.eq.s32.totalorder %s201, 0
      %s204 = sadd.s32 %s203, 1
      %s205 = scalar_select %p202, %s203, %s204
      %p208 = pneg %p202
      %p209 = scmp.eq.s32.totalorder %s28, 1
      %p210 = por %p208, %p209
      %p211 = scmp.ne.s32.totalorder %s203, %s206
      %p212 = scmp.eq.s32.totalorder %s28, 0
      %p213 = por %p211, %p212
      %p214 = scmp.ne.s32.totalorder %s203, %s206
      %p215 = scmp.eq.s32.totalorder %s33, 1
      %p216 = por %p214, %p215
      %p217 = scmp.ne.s32.totalorder %s206, %s207
      %p218 = scmp.eq.s32.totalorder %s33, 0
      %p219 = por %p217, %p218
      %p220 = scmp.ne.s32.totalorder %s206, %s207
      %p221 = scmp.eq.s32.totalorder %s34, 1
      %p222 = por %p220, %p221
      %p224 = scmp.ne.s32.totalorder %s207, %s223
      %p225 = scmp.eq.s32.totalorder %s34, 0
      %p226 = por %p224, %p225
      %s227 = ssub.s32 %s36, %s43
      %p228 = scmp.eq.s32.totalorder %s227, 0
      %s230 = sadd.s32 %s229, 1
      %s231 = scalar_select %p228, %s229, %s230
      %p234 = pneg %p228
      %p235 = scmp.eq.s32.totalorder %s28, 1
      %p236 = por %p234, %p235
      %p237 = scmp.ne.s32.totalorder %s229, %s232
      %p238 = scmp.eq.s32.totalorder %s28, 0
      %p239 = por %p237, %p238
      %p240 = scmp.ne.s32.totalorder %s229, %s232
      %p241 = scmp.eq.s32.totalorder %s33, 1
      %p242 = por %p240, %p241
      %p243 = scmp.ne.s32.totalorder %s232, %s233
      %p244 = scmp.eq.s32.totalorder %s33, 0
      %p245 = por %p243, %p244
      %p246 = scmp.ne.s32.totalorder %s232, %s233
      %p247 = scmp.eq.s32.totalorder %s34, 1
      %p248 = por %p246, %p247
      %p250 = scmp.ne.s32.totalorder %s233, %s249
      %p251 = scmp.eq.s32.totalorder %s34, 0
      %p252 = por %p250, %p251
      %s253 = ssub.s32 %s36, %s43
      %p254 = scmp.eq.s32.totalorder %s253, 0
      %s256 = sadd.s32 %s255, 1
      %s257 = scalar_select %p254, %s255, %s256
      %p260 = pneg %p254
      %p261 = scmp.eq.s32.totalorder %s28, 1
      %p262 = por %p260, %p261
      %p263 = scmp.ne.s32.totalorder %s255, %s258
      %p264 = scmp.eq.s32.totalorder %s28, 0
      %p265 = por %p263, %p264
      %p266 = scmp.ne.s32.totalorder %s255, %s258
      %p267 = scmp.eq.s32.totalorder %s33, 1
      %p268 = por %p266, %p267
      %p269 = scmp.ne.s32.totalorder %s258, %s259
      %p270 = scmp.eq.s32.totalorder %s33, 0
      %p271 = por %p269, %p270
      %p272 = scmp.ne.s32.totalorder %s258, %s259
      %p273 = scmp.eq.s32.totalorder %s34, 1
      %p274 = por %p272, %p273
      %p276 = scmp.ne.s32.totalorder %s259, %s275
      %p277 = scmp.eq.s32.totalorder %s34, 0
      %p278 = por %p276, %p277
      %s279 = ssub.s32 %s36, %s43
      %p280 = scmp.eq.s32.totalorder %s279, 0
      %s282 = sadd.s32 %s281, 1
      %s283 = scalar_select %p280, %s281, %s282
      %p286 = pneg %p280
      %p287 = scmp.eq.s32.totalorder %s28, 1
      %p288 = por %p286, %p287
      %p289 = scmp.ne.s32.totalorder %s281, %s284
      %p290 = scmp.eq.s32.totalorder %s28, 0
      %p291 = por %p289, %p290
      %p292 = scmp.ne.s32.totalorder %s281, %s284
      %p293 = scmp.eq.s32.totalorder %s33, 1
      %p294 = por %p292, %p293
      %p295 = scmp.ne.s32.totalorder %s284, %s285
      %p296 = scmp.eq.s32.totalorder %s33, 0
      %p297 = por %p295, %p296
      %p298 = scmp.ne.s32.totalorder %s284, %s285
      %p299 = scmp.eq.s32.totalorder %s34, 1
      %p300 = por %p298, %p299
      %p302 = scmp.ne.s32.totalorder %s285, %s301
      %p303 = scmp.eq.s32.totalorder %s34, 0
      %p304 = por %p302, %p303
      %s305 = ssub.s32 %s36, %s43
      %p306 = scmp.eq.s32.totalorder %s305, 0
      %s308 = sadd.s32 %s307, 1
      %s309 = scalar_select %p306, %s307, %s308
      %p312 = pneg %p306
      %p313 = scmp.eq.s32.totalorder %s28, 1
      %p314 = por %p312, %p313
      %p315 = scmp.ne.s32.totalorder %s307, %s310
      %p316 = scmp.eq.s32.totalorder %s28, 0
      %p317 = por %p315, %p316
      %p318 = scmp.ne.s32.totalorder %s307, %s310
      %p319 = scmp.eq.s32.totalorder %s33, 1
      %p320 = por %p318, %p319
      %p321 = scmp.ne.s32.totalorder %s310, %s311
      %p322 = scmp.eq.s32.totalorder %s33, 0
      %p323 = por %p321, %p322
      %p324 = scmp.ne.s32.totalorder %s310, %s311
      %p325 = scmp.eq.s32.totalorder %s34, 1
      %p326 = por %p324, %p325
      %p328 = scmp.ne.s32.totalorder %s311, %s327
      %p329 = scmp.eq.s32.totalorder %s34, 0
      %p330 = por %p328, %p329
      %s331 = ssub.s32 %s36, %s43
      %p332 = scmp.eq.s32.totalorder %s331, 0
      %s334 = sadd.s32 %s333, 1
      %s335 = scalar_select %p332, %s333, %s334
      %p338 = pneg %p332
      %p339 = scmp.eq.s32.totalorder %s28, 1
      %p340 = por %p338, %p339
      %p341 = scmp.ne.s32.totalorder %s333, %s336
      %p342 = scmp.eq.s32.totalorder %s28, 0
      %p343 = por %p341, %p342
      %p344 = scmp.ne.s32.totalorder %s333, %s336
      %p345 = scmp.eq.s32.totalorder %s33, 1
      %p346 = por %p344, %p345
      %p347 = scmp.ne.s32.totalorder %s336, %s337
      %p348 = scmp.eq.s32.totalorder %s33, 0
      %p349 = por %p347, %p348
      %p350 = scmp.ne.s32.totalorder %s336, %s337
      %p351 = scmp.eq.s32.totalorder %s34, 1
      %p352 = por %p350, %p351
      %p354 = scmp.ne.s32.totalorder %s337, %s353
      %p355 = scmp.eq.s32.totalorder %s34, 0
      %p356 = por %p354, %p355
      %s357 = ssub.s32 %s36, %s43
      %p358 = scmp.eq.s32.totalorder %s357, 0
      %s360 = sadd.s32 %s359, 1
      %s361 = scalar_select %p358, %s359, %s360
      %p364 = pneg %p358
      %p365 = scmp.eq.s32.totalorder %s28, 1
      %p366 = por %p364, %p365
      %p367 = scmp.ne.s32.totalorder %s359, %s362
      %p368 = scmp.eq.s32.totalorder %s28, 0
      %p369 = por %p367, %p368
      %p370 = scmp.ne.s32.totalorder %s359, %s362
      %p371 = scmp.eq.s32.totalorder %s33, 1
      %p372 = por %p370, %p371
      %p373 = scmp.ne.s32.totalorder %s362, %s363
      %p374 = scmp.eq.s32.totalorder %s33, 0
      %p375 = por %p373, %p374
      %p376 = scmp.ne.s32.totalorder %s362, %s363
      %p377 = scmp.eq.s32.totalorder %s34, 1
      %p378 = por %p376, %p377
      %p380 = scmp.ne.s32.totalorder %s363, %s379
      %p381 = scmp.eq.s32.totalorder %s34, 0
      %p382 = por %p380, %p381
      %s383 = ssub.s32 %s35, %s47
      %p384 = scmp.eq.s32.totalorder %s383, 0
      %s386 = sadd.s32 %s385, 1
      %s387 = scalar_select %p384, %s385, %s386
      %p390 = pneg %p384
      %p391 = scmp.eq.s32.totalorder %s28, 1
      %p392 = por %p390, %p391
      %p393 = scmp.ne.s32.totalorder %s385, %s388
      %p394 = scmp.eq.s32.totalorder %s28, 0
      %p395 = por %p393, %p394
      %p396 = scmp.ne.s32.totalorder %s385, %s388
      %p397 = scmp.eq.s32.totalorder %s33, 1
      %p398 = por %p396, %p397
      %p399 = scmp.ne.s32.totalorder %s388, %s389
      %p400 = scmp.eq.s32.totalorder %s33, 0
      %p401 = por %p399, %p400
      %p402 = scmp.ne.s32.totalorder %s388, %s389
      %p403 = scmp.eq.s32.totalorder %s34, 1
      %p404 = por %p402, %p403
      %p406 = scmp.ne.s32.totalorder %s389, %s405
      %p407 = scmp.eq.s32.totalorder %s34, 0
      %p408 = por %p406, %p407
      %p409 = scmp.le.s32.totalorder 1, %s28
      %p410 = scmp.lt.s32.totalorder %s28, 3
      %p411 = pnand %p409, %p410
      %p412 = pneg %p411
      // Predicated region
      $region9: #{tpu_custom_call.1} parent=5 // pred_check
        _
      $region10: #{tpu_custom_call.1} parent=5 // pred_check_branch
        %414 = sbr.rel (%p411) target = $region12
      $region11: #{tpu_custom_call.1} parent=5 // pred_region
        %s415 = ssub.s32 %s28, 1
        // Predicated region
        $region13: #{tpu_custom_call.1} parent=11 // pred_check
          %p416 = pneg %p66
        $region14: #{tpu_custom_call.1} parent=11 // pred_check_branch
          %418 = sbr.rel (%p416) target = $region16
        $region15: #{tpu_custom_call.1} parent=11 // pred_region
          %s420 = ssub.s32 32, 32
          %421 = vsyncadd [#allocation4], %s420
          %s422 = smul.addr %s37, 32
          %s423 = scalar_lea.hbm %s0, %s422
          %s425 = sshll.u32 [#allocation3], 4
          %s426 = int_to_ptr.vmem [resolvable:$true] %s425
          %428 = dma.hbm_to_vmem [thread:$0]  %s423, 32, %s426, [#allocation4]
        $region16: #{tpu_custom_call.1} parent=11 // pred_fallthru
          _
        // Predicated region
        $region17: #{tpu_custom_call.1} parent=11 // pred_check
          %p429 = pneg %p92
        $region18: #{tpu_custom_call.1} parent=11 // pred_check_branch
          %431 = sbr.rel (%p429) target = $region20
        $region19: #{tpu_custom_call.1} parent=11 // pred_region
          %p432 = scmp.lt.s32.totalorder %s37, 0
          %s433 = scalar_select %p432, %s37, 0
          %s434 = smul.addr %s433, 2
          %s435 = scalar_lea.vmem %s1, %s434
        $region20: #{tpu_custom_call.1} parent=11 // pred_fallthru
          _
        // Predicated region
        $region21: #{tpu_custom_call.1} parent=11 // pred_check
          %p436 = pneg %p118
        $region22: #{tpu_custom_call.1} parent=11 // pred_check_branch
          %438 = sbr.rel (%p436) target = $region24
        $region23: #{tpu_custom_call.1} parent=11 // pred_region
          %s440 = ssub.s32 32, 32
          %441 = vsyncadd [#allocation7], %s440
          %s442 = smul.addr %s37, 32
          %s443 = scalar_lea.hbm %s2, %s442
          %s445 = sshll.u32 [#allocation6], 4
          %s446 = int_to_ptr.vmem [resolvable:$true] %s445
          %448 = dma.hbm_to_vmem [thread:$0]  %s443, 32, %s446, [#allocation7]
        $region24: #{tpu_custom_call.1} parent=11 // pred_fallthru
          _
        // Predicated region
        $region25: #{tpu_custom_call.1} parent=11 // pred_check
          %p449 = pneg %p167
        $region26: #{tpu_custom_call.1} parent=11 // pred_check_branch
          %451 = sbr.rel (%p449) target = $region28
        $region27: #{tpu_custom_call.1} parent=11 // pred_region
          %s453 = ssub.s32 128, 128
          %454 = vsyncadd [#allocation7], %s453
          %s456 = sshll.u32 [#allocation9], 4
          %s457 = int_to_ptr.vmem [resolvable:$true] %s456
          %459 = dma.hbm_to_vmem [thread:$0]  %s4, 128, %s457, [#allocation7]
        $region28: #{tpu_custom_call.1} parent=11 // pred_fallthru
          _
      $region12: #{tpu_custom_call.1} parent=5 // pred_fallthru
        _
      %p460 = scmp.lt.s32.totalorder %s28, 2
      // Predicated region
      $region29: #{tpu_custom_call.1} parent=5 // pred_check
        %p461 = pneg %p460
      $region30: #{tpu_custom_call.1} parent=5 // pred_check_branch
        %463 = sbr.rel (%p461) target = $region32
      $region31: #{tpu_custom_call.1} parent=5 // pred_region
        // Predicated region
        $region33: #{tpu_custom_call.1} parent=31 // pred_check
          %p464 = pneg %p140
        $region34: #{tpu_custom_call.1} parent=31 // pred_check_branch
          %466 = sbr.rel (%p464) target = $region36
        $region35: #{tpu_custom_call.1} parent=31 // pred_region
          %s467 = sand.u32 %s28, 1
          %s468 = scalar_lea.sflag [#allocation4], %s467
          %s469 = sand.u32 %s130, 1
          %s470 = smul.addr %s469, 2
          %s471 = scalar_lea.vmem [#allocation8], %s470
          %s473 = ssub.s32 32, 32
          %474 = vsyncadd %s468, %s473
          %s475 = smul.addr %s35, 2
          %s476 = sadd.s32 %s36, %s475
          %s477 = smul.addr %s476, 32
          %s478 = scalar_lea.hbm %s3, %s477
          %s480 = sshll.u32 %s471, 4
          %s481 = int_to_ptr.vmem [resolvable:$true] %s480
          %483 = dma.hbm_to_vmem [thread:$0]  %s478, 32, %s481, %s468
        $region36: #{tpu_custom_call.1} parent=31 // pred_fallthru
          _
        // Predicated region
        $region37: #{tpu_custom_call.1} parent=31 // pred_check
          %p484 = pneg %p187
        $region38: #{tpu_custom_call.1} parent=31 // pred_check_branch
          %486 = sbr.rel (%p484) target = $region40
        $region39: #{tpu_custom_call.1} parent=31 // pred_region
          %p487 = scmp.lt.s32.totalorder %s36, 1
          %s488 = scalar_select %p487, %s36, 1
          %s489 = smul.addr %s488, 16
          %s490 = smul.addr %s489, 4
          %s491 = scalar_lea.vmem %s5, %s490
        $region40: #{tpu_custom_call.1} parent=31 // pred_fallthru
          _
        // Predicated region
        $region41: #{tpu_custom_call.1} parent=31 // pred_check
          %p492 = pneg %p213
        $region42: #{tpu_custom_call.1} parent=31 // pred_check_branch
          %494 = sbr.rel (%p492) target = $region44
        $region43: #{tpu_custom_call.1} parent=31 // pred_region
          %s495 = sand.u32 %s28, 1
          %s496 = scalar_lea.sflag [#allocation11], %s495
          %s497 = sand.u32 %s203, 1
          %s498 = smul.addr %s497, 4
          %s499 = scalar_lea.vmem [#allocation10], %s498
          %s501 = ssub.s32 64, 64
          %502 = vsyncadd %s496, %s501
          %s503 = smul.addr %s36, 64
          %s504 = scalar_lea.hbm %s6, %s503
          %s506 = sshll.u32 %s499, 4
          %s507 = int_to_ptr.vmem [resolvable:$true] %s506
          %509 = dma.hbm_to_vmem [thread:$0]  %s504, 64, %s507, %s496
        $region44: #{tpu_custom_call.1} parent=31 // pred_fallthru
          _
        // Predicated region
        $region45: #{tpu_custom_call.1} parent=31 // pred_check
          %p510 = pneg %p239
        $region46: #{tpu_custom_call.1} parent=31 // pred_check_branch
          %512 = sbr.rel (%p510) target = $region48
        $region47: #{tpu_custom_call.1} parent=31 // pred_region
          %s513 = sand.u32 %s28, 1
          %s514 = scalar_lea.sflag [#allocation11], %s513
          %s515 = sand.u32 %s229, 1
          %s516 = smul.addr %s515, 16
          %s517 = scalar_lea.vmem [#allocation12], %s516
          %s519 = ssub.s32 256, 256
          %520 = vsyncadd %s514, %s519
          %s521 = smul.addr %s36, 4
          %s522 = smul.addr %s521, 64
          %s523 = scalar_lea.hbm %s7, %s522
          %s524 = sshll.u32 %s517, 4
          %s525 = int_to_ptr.vmem [resolvable:$true] %s524
          %530 = dma.hbm_to_vmem [thread:$0]  %s523, 256, %s525, %s514, 64, 64, 4
        $region48: #{tpu_custom_call.1} parent=31 // pred_fallthru
          _
        // Predicated region
        $region49: #{tpu_custom_call.1} parent=31 // pred_check
          %p531 = pneg %p265
        $region50: #{tpu_custom_call.1} parent=31 // pred_check_branch
          %533 = sbr.rel (%p531) target = $region52
        $region51: #{tpu_custom_call.1} parent=31 // pred_region
          %s534 = sand.u32 %s28, 1
          %s535 = scalar_lea.sflag [#allocation14], %s534
          %s536 = sand.u32 %s255, 1
          %s537 = scalar_lea.vmem [#allocation13], %s536
          %s539 = ssub.s32 16, 16
          %540 = vsyncadd %s535, %s539
          %s541 = smul.addr %s36, 16
          %s542 = scalar_lea.hbm %s8, %s541
          %s544 = sshll.u32 %s537, 4
          %s545 = int_to_ptr.vmem [resolvable:$true] %s544
          %547 = dma.hbm_to_vmem [thread:$0]  %s542, 16, %s545, %s535
        $region52: #{tpu_custom_call.1} parent=31 // pred_fallthru
          _
        // Predicated region
        $region53: #{tpu_custom_call.1} parent=31 // pred_check
          %p548 = pneg %p291
        $region54: #{tpu_custom_call.1} parent=31 // pred_check_branch
          %550 = sbr.rel (%p548) target = $region56
        $region55: #{tpu_custom_call.1} parent=31 // pred_region
          %p551 = scmp.lt.s32.totalorder %s36, 1
          %s552 = scalar_select %p551, %s36, 1
          %s553 = smul.addr %s552, 8
          %s554 = smul.addr %s553, 4
          %s555 = scalar_lea.vmem %s9, %s554
        $region56: #{tpu_custom_call.1} parent=31 // pred_fallthru
          _
        // Predicated region
        $region57: #{tpu_custom_call.1} parent=31 // pred_check
          %p556 = pneg %p317
        $region58: #{tpu_custom_call.1} parent=31 // pred_check_branch
          %558 = sbr.rel (%p556) target = $region60
        $region59: #{tpu_custom_call.1} parent=31 // pred_region
          %s559 = sand.u32 %s28, 1
          %s560 = scalar_lea.sflag [#allocation14], %s559
          %s561 = sand.u32 %s307, 1
          %s562 = scalar_lea.vmem [#allocation15], %s561
          %s564 = ssub.s32 16, 16
          %565 = vsyncadd %s560, %s564
          %s566 = smul.addr %s36, 16
          %s567 = scalar_lea.hbm %s10, %s566
          %s569 = sshll.u32 %s562, 4
          %s570 = int_to_ptr.vmem [resolvable:$true] %s569
          %572 = dma.hbm_to_vmem [thread:$0]  %s567, 16, %s570, %s560
        $region60: #{tpu_custom_call.1} parent=31 // pred_fallthru
          _
        // Predicated region
        $region61: #{tpu_custom_call.1} parent=31 // pred_check
          %p573 = pneg %p343
        $region62: #{tpu_custom_call.1} parent=31 // pred_check_branch
          %575 = sbr.rel (%p573) target = $region64
        $region63: #{tpu_custom_call.1} parent=31 // pred_region
          %p576 = scmp.lt.s32.totalorder %s36, 1
          %s577 = scalar_select %p576, %s36, 1
          %s578 = smul.addr %s577, 4
          %s579 = scalar_lea.vmem %s11, %s578
        $region64: #{tpu_custom_call.1} parent=31 // pred_fallthru
          _
        // Predicated region
        $region65: #{tpu_custom_call.1} parent=31 // pred_check
          %p580 = pneg %p369
        $region66: #{tpu_custom_call.1} parent=31 // pred_check_branch
          %582 = sbr.rel (%p580) target = $region68
        $region67: #{tpu_custom_call.1} parent=31 // pred_region
          %p583 = scmp.lt.s32.totalorder %s36, 1
          %s584 = scalar_select %p583, %s36, 1
          %s585 = smul.addr %s584, 4
          %s586 = scalar_lea.vmem %s12, %s585
        $region68: #{tpu_custom_call.1} parent=31 // pred_fallthru
          _
      $region32: #{tpu_custom_call.1} parent=5 // pred_fallthru
        _
      %p587 = scmp.le.s32.totalorder 1, %s28
      %p588 = scmp.lt.s32.totalorder %s28, 3
      %p589 = pnand %p587, %p588
      %p590 = pneg %p589
      // Predicated region
      $region69: #{tpu_custom_call.1} parent=5 // pred_check
        _
      $region70: #{tpu_custom_call.1} parent=5 // pred_check_branch
        %592 = sbr.rel (%p589) target = $region72
      $region71: #{tpu_custom_call.1} parent=5 // pred_region
        %s593 = ssub.s32 %s28, 1
        // Predicated region
        $region73: #{tpu_custom_call.1} parent=71 // pred_check
          %p594 = pneg %p66
        $region74: #{tpu_custom_call.1} parent=71 // pred_check_branch
          %596 = sbr.rel (%p594) target = $region76
        $region75: #{tpu_custom_call.1} parent=71 // pred_region
          %597 = dma.done [#allocation4], 32
        $region76: #{tpu_custom_call.1} parent=71 // pred_fallthru
          _
        // Predicated region
        $region77: #{tpu_custom_call.1} parent=71 // pred_check
          %p598 = pneg %p118
        $region78: #{tpu_custom_call.1} parent=71 // pred_check_branch
          %600 = sbr.rel (%p598) target = $region80
        $region79: #{tpu_custom_call.1} parent=71 // pred_region
          %601 = dma.done [#allocation7], 32
        $region80: #{tpu_custom_call.1} parent=71 // pred_fallthru
          _
        %s602 = sand.u32 %s33, 1
        %s603 = scalar_lea.sflag [#allocation4], %s602
        %s604 = sand.u32 %s133, 1
        %s605 = smul.addr %s604, 2
        %s606 = scalar_lea.vmem [#allocation8], %s605
        // Predicated region
        $region81: #{tpu_custom_call.1} parent=71 // pred_check
          %p607 = pneg %p146
        $region82: #{tpu_custom_call.1} parent=71 // pred_check_branch
          %609 = sbr.rel (%p607) target = $region84
        $region83: #{tpu_custom_call.1} parent=71 // pred_region
          %610 = dma.done %s603, 32
        $region84: #{tpu_custom_call.1} parent=71 // pred_fallthru
          _
        // Predicated region
        $region85: #{tpu_custom_call.1} parent=71 // pred_check
          %p611 = pneg %p167
        $region86: #{tpu_custom_call.1} parent=71 // pred_check_branch
          %613 = sbr.rel (%p611) target = $region88
        $region87: #{tpu_custom_call.1} parent=71 // pred_region
          %614 = dma.done [#allocation7], 128
        $region88: #{tpu_custom_call.1} parent=71 // pred_fallthru
          _
        %s615 = sand.u32 %s33, 1
        %s616 = scalar_lea.sflag [#allocation11], %s615
        %s617 = sand.u32 %s206, 1
        %s618 = smul.addr %s617, 4
        %s619 = scalar_lea.vmem [#allocation10], %s618
        // Predicated region
        $region89: #{tpu_custom_call.1} parent=71 // pred_check
          %p620 = pneg %p219
        $region90: #{tpu_custom_call.1} parent=71 // pred_check_branch
          %622 = sbr.rel (%p620) target = $region92
        $region91: #{tpu_custom_call.1} parent=71 // pred_region
          %623 = dma.done %s616, 64
        $region92: #{tpu_custom_call.1} parent=71 // pred_fallthru
          _
        %s624 = sand.u32 %s33, 1
        %s625 = scalar_lea.sflag [#allocation11], %s624
        %s626 = sand.u32 %s232, 1
        %s627 = smul.addr %s626, 16
        %s628 = scalar_lea.vmem [#allocation12], %s627
        // Predicated region
        $region93: #{tpu_custom_call.1} parent=71 // pred_check
          %p629 = pneg %p245
        $region94: #{tpu_custom_call.1} parent=71 // pred_check_branch
          %631 = sbr.rel (%p629) target = $region96
        $region95: #{tpu_custom_call.1} parent=71 // pred_region
          %632 = dma.done %s625, 256
        $region96: #{tpu_custom_call.1} parent=71 // pred_fallthru
          _
        %s633 = sand.u32 %s33, 1
        %s634 = scalar_lea.sflag [#allocation14], %s633
        %s635 = sand.u32 %s258, 1
        %s636 = scalar_lea.vmem [#allocation13], %s635
        // Predicated region
        $region97: #{tpu_custom_call.1} parent=71 // pred_check
          %p637 = pneg %p271
        $region98: #{tpu_custom_call.1} parent=71 // pred_check_branch
          %639 = sbr.rel (%p637) target = $region100
        $region99: #{tpu_custom_call.1} parent=71 // pred_region
          %640 = dma.done %s634, 16
        $region100: #{tpu_custom_call.1} parent=71 // pred_fallthru
          _
        %s641 = sand.u32 %s33, 1
        %s642 = scalar_lea.sflag [#allocation14], %s641
        %s643 = sand.u32 %s310, 1
        %s644 = scalar_lea.vmem [#allocation15], %s643
        // Predicated region
        $region101: #{tpu_custom_call.1} parent=71 // pred_check
          %p645 = pneg %p323
        $region102: #{tpu_custom_call.1} parent=71 // pred_check_branch
          %647 = sbr.rel (%p645) target = $region104
        $region103: #{tpu_custom_call.1} parent=71 // pred_region
          %648 = dma.done %s642, 16
        $region104: #{tpu_custom_call.1} parent=71 // pred_fallthru
          _
        %p649 = pneg %p66
        %p650 = pneg %p63
        %p651 = scmp.lt.s32.totalorder %s37, 0
        %s652 = scalar_select %p651, %s37, 0
        %s653 = smul.addr %s652, 2
        %s654 = scalar_lea.vmem %s1, %s653
        %p655 = pneg %p92
        %p656 = pneg %p89
        %p657 = pneg %p118
        %p658 = pneg %p115
        %s659 = sand.u32 %s33, 1
        %s660 = scalar_lea.sflag [#allocation4], %s659
        %s661 = sand.u32 %s133, 1
        %s662 = smul.addr %s661, 2
        %s663 = scalar_lea.vmem [#allocation8], %s662
        %p664 = pneg %p146
        %p665 = pneg %p143
        %p666 = pneg %p167
        %p667 = pneg %p164
        %p668 = scmp.lt.s32.totalorder %s38, 1
        %s669 = scalar_select %p668, %s38, 1
        %s670 = smul.addr %s669, 16
        %s671 = smul.addr %s670, 4
        %s672 = scalar_lea.vmem %s5, %s671
        %p673 = pneg %p193
        %p674 = pneg %p190
        %s675 = sand.u32 %s33, 1
        %s676 = scalar_lea.sflag [#allocation11], %s675
        %s677 = sand.u32 %s206, 1
        %s678 = smul.addr %s677, 4
        %s679 = scalar_lea.vmem [#allocation10], %s678
        %p680 = pneg %p219
        %p681 = pneg %p216
        %s682 = sand.u32 %s33, 1
        %s683 = scalar_lea.sflag [#allocation11], %s682
        %s684 = sand.u32 %s232, 1
        %s685 = smul.addr %s684, 16
        %s686 = scalar_lea.vmem [#allocation12], %s685
        %p687 = pneg %p245
        %p688 = pneg %p242
        %s689 = sand.u32 %s33, 1
        %s690 = scalar_lea.sflag [#allocation14], %s689
        %s691 = sand.u32 %s258, 1
        %s692 = scalar_lea.vmem [#allocation13], %s691
        %p693 = pneg %p271
        %p694 = pneg %p268
        %p695 = scmp.lt.s32.totalorder %s38, 1
        %s696 = scalar_select %p695, %s38, 1
        %s697 = smul.addr %s696, 8
        %s698 = smul.addr %s697, 4
        %s699 = scalar_lea.vmem %s9, %s698
        %p700 = pneg %p297
        %p701 = pneg %p294
        %s702 = sand.u32 %s33, 1
        %s703 = scalar_lea.sflag [#allocation14], %s702
        %s704 = sand.u32 %s310, 1
        %s705 = scalar_lea.vmem [#allocation15], %s704
        %p706 = pneg %p323
        %p707 = pneg %p320
        %p708 = scmp.lt.s32.totalorder %s38, 1
        %s709 = scalar_select %p708, %s38, 1
        %s710 = smul.addr %s709, 4
        %s711 = scalar_lea.vmem %s11, %s710
        %p712 = pneg %p349
        %p713 = pneg %p346
        %p714 = scmp.lt.s32.totalorder %s38, 1
        %s715 = scalar_select %p714, %s38, 1
        %s716 = smul.addr %s715, 4
        %s717 = scalar_lea.vmem %s12, %s716
        %p718 = pneg %p375
        %p719 = pneg %p372
        %p720 = pneg %p401
        %p721 = pneg %p398
        %p722 = scmp.lt.s32.totalorder %s37, 0
        %s723 = scalar_select %p722, %s37, 0
        %s724 = smul.addr %s723, 2
        %s725 = scalar_lea.vmem %s1, %s724
        %p726 = scmp.lt.s32.totalorder %s38, 1
        %s727 = scalar_select %p726, %s38, 1
        %s728 = smul.addr %s727, 16
        %s729 = smul.addr %s728, 4
        %s730 = scalar_lea.vmem %s5, %s729
        %p731 = scmp.lt.s32.totalorder %s38, 1
        %s732 = scalar_select %p731, %s38, 1
        %s733 = smul.addr %s732, 8
        %s734 = smul.addr %s733, 4
        %s735 = scalar_lea.vmem %s9, %s734
        %p736 = scmp.lt.s32.totalorder %s38, 1
        %s737 = scalar_select %p736, %s38, 1
        %s738 = smul.addr %s737, 4
        %s739 = scalar_lea.vmem %s11, %s738
        %p740 = scmp.lt.s32.totalorder %s38, 1
        %s741 = scalar_select %p740, %s38, 1
        %s742 = smul.addr %s741, 4
        %s743 = scalar_lea.vmem %s12, %s742
        %v745 = vld [vmem:[#allocation9] sm:$0xff]
        %p746 = scmp.eq.s32.totalorder %s38, 0
        // Predicated region
        $region105: #{tpu_custom_call.1} parent=71 // pred_check
          %p747 = pneg %p746
        $region106: #{tpu_custom_call.1} parent=71 // pred_check_branch
          %749 = sbr.rel (%p747) target = $region108
        $region107: #{tpu_custom_call.1} parent=71 // pred_region
          %v750 = vld [vmem:[#allocation3] sm:$0x3]
          %v751 = vlaneseq
          %v752 = vshrl.u32 %v751, 7
          %v753 = vsub.s32 0, %v752
          %v754 = vrot.slane %v750, %v753
          %756 = vbcast.lane.b32.xlu0 %v754, 256
          %v757 = vpop.permute.xlu0 %756
          %v758 = vlaneseq
          %v759 = vshrl.u32 %v758, 7
          %v760 = vsub.s32 1, %v759
          %v761 = vrot.slane %v750, %v760
          %763 = vbcast.lane.b32.xlu0 %v761, 256
          %v764 = vpop.permute.xlu0 %763
          %v765 = vld [vmem:[%s725] sm:$0x3]
          %v768 = vunpack.c.l.s4 1966171168
          %v769 = vunpack.c.0.s8 %v768
          %v770 = vlaneseq
          %v771 = vshrl.u32 %v770, 7
          %v772 = vsub.s32 %v769, %v771
          %v773 = vrot.slane %v765, %v772
          %v774 = vcombine.high %v773, %v773
          %v776 = vunpack.c.l.s4 1966171168
          %v777 = vunpack.c.0.s8 %v776
          %v778 = vlaneseq
          %v779 = vshrl.u32 %v778, 7
          %v780 = vsub.s32 %v777, %v779
          %v781 = vrot.slane %v773, %v780
          %v783 = vunpack.c.l.s4 1966171168
          %v784 = vunpack.c.0.s8 %v783
          %v785 = vlaneseq
          %v786 = vshrl.u32 %v785, 7
          %v787 = vsub.s32 %v784, %v786
          %v788 = vrot.slane %v774, %v787
          %v789 = vlaneseq
          %v790 = vshrl.u32 %v789, 7
          %v791 = vsub.s32 0, %v790
          %v792 = vrot.slane %v745, %v791
          %v793 = vmul.f32 %v757, %v792
          %v794 = vmul.f32 %v764, %v792
          %v795 = vlaneseq
          %v796 = vshrl.u32 %v795, 7
          %v797 = vsub.s32 1, %v796
          %v798 = vrot.slane %v745, %v797
          %v799 = vadd.f32 %v793, %v798
          %v800 = vadd.f32 %v794, %v798
          %801 = vset.pattern.permute.xlu0 0
          %802 = vperm.xlu0 %801, %v781
          %v803 = vpop.permute.xlu0 %802
          %v805 = vlaneseq
          %v806 = vshrl.u32 %v805, 7
          %v807 = vsub.s32 0, %v806
          %v808 = vrot.slane %v803, %v807
          %809 = vset.pattern.permute.xlu0 0
          %810 = vperm.xlu0 %809, %v788
          %v811 = vpop.permute.xlu0 %810
          %v813 = vlaneseq
          %v814 = vshrl.u32 %v813, 7
          %v815 = vsub.s32 0, %v814
          %v816 = vrot.slane %v811, %v815
          %v817 = vmul.f32 %v808, %v745
          %v818 = vmul.f32 %v816, %v745
          %v819 = vlaneseq
          %v820 = vshrl.u32 %v819, 7
          %v821 = vsub.s32 2, %v820
          %v822 = vrot.slane %v817, %v821
          %v823 = vlaneseq
          %v824 = vshrl.u32 %v823, 7
          %v825 = vsub.s32 2, %v824
          %v826 = vrot.slane %v818, %v825
          %v827 = vadd.f32 %v799, %v822
          %v828 = vadd.f32 %v800, %v826
          %v829 = vlaneseq
          %v830 = vshrl.u32 %v829, 7
          %v831 = vsub.s32 3, %v830
          %v832 = vrot.slane %v745, %v831
          %v833 = vadd.f32 %v827, %v832
          %v834 = vadd.f32 %v828, %v832
          %vm835 = vcmask 261120
          %836 = vst.msk [vmem:[#allocation2] sm:$0xff] %vm835, %v833
          %837 = vst.msk [vmem:[#allocation2 + $0x8] sm:$0xff] %vm835, %v834
        $region108: #{tpu_custom_call.1} parent=71 // pred_fallthru
          _
        %v838 = vld [vmem:[#allocation2] sm:$0xff]
        %v839 = vld [vmem:[#allocation2 + $0x8] sm:$0xff]
        %v840 = vld [vmem:[%s739] sm:$0x7]
        %v841 = vld [vmem:[%s743] sm:$0x7]
        %v842 = vld [vmem:[%s619] sm:$0xf]
        %v843 = vld [vmem:[#allocation6] sm:$0x3]
        %v844 = vmul.f32 %v843, -1e+09
        %v847 = vunpack.c.l.s4 1966171168
        %v848 = vunpack.c.0.s8 %v847
        %v849 = vlaneseq
        %v850 = vshrl.u32 %v849, 7
        %v851 = vsub.s32 %v848, %v850
        %v852 = vrot.slane %v844, %v851
        %v853 = vcombine.high %v852, %v852
        %v855 = vunpack.c.l.s4 1966171168
        %v856 = vunpack.c.0.s8 %v855
        %v857 = vlaneseq
        %v858 = vshrl.u32 %v857, 7
        %v859 = vsub.s32 %v856, %v858
        %v860 = vrot.slane %v852, %v859
        %v862 = vunpack.c.l.s4 1966171168
        %v863 = vunpack.c.0.s8 %v862
        %v864 = vlaneseq
        %v865 = vshrl.u32 %v864, 7
        %v866 = vsub.s32 %v863, %v865
        %v867 = vrot.slane %v853, %v866
        %v868 = vpack.c.bf16 %v839, %v838
        %v869 = vld [vmem:[%s730] sm:$0xf]
        %v870 = vld [vmem:[%s730 + $0x4] sm:$0xf]
        %v871 = vld [vmem:[%s730 + $0x8] sm:$0xf]
        %v872 = vld [vmem:[%s730 + $0xc] sm:$0xf]
        %v873 = vlaneseq
        %v874 = vshrl.u32 %v873, 7
        %v875 = vsub.s32 0, %v874
        %v876 = vrot.slane %v842, %v875
        %v881 = vunpack.c.l.b16 %v869
        %v882 = vunpack.c.l.b16 %v870
        %v883 = vunpack.c.l.b16 %v871
        %v884 = vunpack.c.l.b16 %v872
        %v885 = vpack.c.b16 %v882, %v881
        %v886 = vpack.c.b16 %v884, %v883
        %vm889 = vcmask 261120
        %v891 = vsel %vm889, %v868, 0
        %893 = vmatprep.subr.bf16.mxu0 0
        %894 = vmatpush1.bf16.msra.mxu0 %v885
        %895 = vmatprep.subr.bf16.mxu0 0
        %896 = vmatpush1.bf16.msra.mxu0 %v886
        %897 = vmatprep.subr.bf16.mxu0 0
        %898 = vmatpush1.bf16.msra.mxu0 0
        %899 = vmatprep.subr.bf16.mxu0 0
        %900 = vmatpush1.bf16.msra.mxu0 0
        %901 = vmatprep.subr.bf16.mxu0 0
        %902 = vmatpush1.bf16.msra.mxu0 0
        %903 = vmatprep.subr.bf16.mxu0 0
        %904 = vmatpush1.bf16.msra.mxu0 0
        %905 = vmatprep.subr.bf16.mxu0 0
        %906 = vmatpush1.bf16.msra.mxu0 0
        %907 = vmatprep.subr.bf16.mxu0 0
        %908 = vmatpush1.bf16.msra.mxu0 0
        %909 = vmatprep.subr.bf16.mxu0 0
        %910 = vmatpush1.bf16.msra.mxu0 0
        %911 = vmatprep.subr.bf16.mxu0 0
        %912 = vmatpush1.bf16.msra.mxu0 0
        %913 = vmatprep.subr.bf16.mxu0 0
        %914 = vmatpush1.bf16.msra.mxu0 0
        %915 = vmatprep.subr.bf16.mxu0 0
        %916 = vmatpush1.bf16.msra.mxu0 0
        %917 = vmatprep.subr.bf16.mxu0 0
        %918 = vmatpush1.bf16.msra.mxu0 0
        %919 = vmatprep.subr.bf16.mxu0 0
        %920 = vmatpush1.bf16.msra.mxu0 0
        %921 = vmatprep.subr.bf16.mxu0 0
        %922 = vmatpush1.bf16.msra.mxu0 0
        %923 = vmatprep.subr.bf16.mxu0 0
        %924 = vmatpush1.bf16.msra.mxu0 0
        %925 = vmatprep.mubr.bf16.mxu0 0
        %926 = vmatmul.mubr.bf16.gmra.mrb[0].mxu0 %v891
        %v927 = vpop.f32.mrb[0].mxu0
        %v928 = vadd.f32 %v876, %v927
        %v929 = vpop.f32.mrb[0].mxu0
        %v930 = vpop.f32.mrb[0].mxu0
        %v931 = vadd.f32 %v876, %v930
        %v932 = vpop.f32.mrb[0].mxu0
        %933 = vdwg.mxu0
        %s934 = scalar_lea.vmem %s730, 16
        %v935 = vld [vmem:[%s934] sm:$0xf]
        %v936 = vld [vmem:[%s934 + $0x4] sm:$0xf]
        %v937 = vld [vmem:[%s934 + $0x8] sm:$0xf]
        %v938 = vld [vmem:[%s934 + $0xc] sm:$0xf]
        %v939 = vlaneseq
        %v940 = vshrl.u32 %v939, 7
        %v941 = vsub.s32 1, %v940
        %v942 = vrot.slane %v842, %v941
        %v947 = vunpack.c.l.b16 %v935
        %v948 = vunpack.c.l.b16 %v936
        %v949 = vunpack.c.l.b16 %v937
        %v950 = vunpack.c.l.b16 %v938
        %v951 = vpack.c.b16 %v948, %v947
        %v952 = vpack.c.b16 %v950, %v949
        %955 = vmatprep.subr.bf16.mxu0 0
        %956 = vmatpush1.bf16.msra.mxu0 %v951
        %957 = vmatprep.subr.bf16.mxu0 0
        %958 = vmatpush1.bf16.msra.mxu0 %v952
        %959 = vmatprep.subr.bf16.mxu0 0
        %960 = vmatpush1.bf16.msra.mxu0 0
        %961 = vmatprep.subr.bf16.mxu0 0
        %962 = vmatpush1.bf16.msra.mxu0 0
        %963 = vmatprep.subr.bf16.mxu0 0
        %964 = vmatpush1.bf16.msra.mxu0 0
        %965 = vmatprep.subr.bf16.mxu0 0
        %966 = vmatpush1.bf16.msra.mxu0 0
        %967 = vmatprep.subr.bf16.mxu0 0
        %968 = vmatpush1.bf16.msra.mxu0 0
        %969 = vmatprep.subr.bf16.mxu0 0
        %970 = vmatpush1.bf16.msra.mxu0 0
        %971 = vmatprep.subr.bf16.mxu0 0
        %972 = vmatpush1.bf16.msra.mxu0 0
        %973 = vmatprep.subr.bf16.mxu0 0
        %974 = vmatpush1.bf16.msra.mxu0 0
        %975 = vmatprep.subr.bf16.mxu0 0
        %976 = vmatpush1.bf16.msra.mxu0 0
        %977 = vmatprep.subr.bf16.mxu0 0
        %978 = vmatpush1.bf16.msra.mxu0 0
        %979 = vmatprep.subr.bf16.mxu0 0
        %980 = vmatpush1.bf16.msra.mxu0 0
        %981 = vmatprep.subr.bf16.mxu0 0
        %982 = vmatpush1.bf16.msra.mxu0 0
        %983 = vmatprep.subr.bf16.mxu0 0
        %984 = vmatpush1.bf16.msra.mxu0 0
        %985 = vmatprep.subr.bf16.mxu0 0
        %986 = vmatpush1.bf16.msra.mxu0 0
        %987 = vmatprep.mubr.bf16.mxu0 0
        %988 = vmatmul.mubr.bf16.gmra.mrb[0].mxu0 %v891
        %v989 = vpop.f32.mrb[0].mxu0
        %v990 = vadd.f32 %v942, %v989
        %v991 = vpop.f32.mrb[0].mxu0
        %v992 = vpop.f32.mrb[0].mxu0
        %v993 = vadd.f32 %v942, %v992
        %v994 = vpop.f32.mrb[0].mxu0
        %995 = vdwg.mxu0
        %s996 = scalar_lea.vmem %s730, 32
        %v997 = vld [vmem:[%s996] sm:$0xf]
        %v998 = vld [vmem:[%s996 + $0x4] sm:$0xf]
        %v999 = vld [vmem:[%s996 + $0x8] sm:$0xf]
        %v1000 = vld [vmem:[%s996 + $0xc] sm:$0xf]
        %v1001 = vlaneseq
        %v1002 = vshrl.u32 %v1001, 7
        %v1003 = vsub.s32 2, %v1002
        %v1004 = vrot.slane %v842, %v1003
        %v1009 = vunpack.c.l.b16 %v997
        %v1010 = vunpack.c.l.b16 %v998
        %v1011 = vunpack.c.l.b16 %v999
        %v1012 = vunpack.c.l.b16 %v1000
        %v1013 = vpack.c.b16 %v1010, %v1009
        %v1014 = vpack.c.b16 %v1012, %v1011
        %1017 = vmatprep.subr.bf16.mxu0 0
        %1018 = vmatpush1.bf16.msra.mxu0 %v1013
        %1019 = vmatprep.subr.bf16.mxu0 0
        %1020 = vmatpush1.bf16.msra.mxu0 %v1014
        %1021 = vmatprep.subr.bf16.mxu0 0
        %1022 = vmatpush1.bf16.msra.mxu0 0
        %1023 = vmatprep.subr.bf16.mxu0 0
        %1024 = vmatpush1.bf16.msra.mxu0 0
        %1025 = vmatprep.subr.bf16.mxu0 0
        %1026 = vmatpush1.bf16.msra.mxu0 0
        %1027 = vmatprep.subr.bf16.mxu0 0
        %1028 = vmatpush1.bf16.msra.mxu0 0
        %1029 = vmatprep.subr.bf16.mxu0 0
        %1030 = vmatpush1.bf16.msra.mxu0 0
        %1031 = vmatprep.subr.bf16.mxu0 0
        %1032 = vmatpush1.bf16.msra.mxu0 0
        %1033 = vmatprep.subr.bf16.mxu0 0
        %1034 = vmatpush1.bf16.msra.mxu0 0
        %1035 = vmatprep.subr.bf16.mxu0 0
        %1036 = vmatpush1.bf16.msra.mxu0 0
        %1037 = vmatprep.subr.bf16.mxu0 0
        %1038 = vmatpush1.bf16.msra.mxu0 0
        %1039 = vmatprep.subr.bf16.mxu0 0
        %1040 = vmatpush1.bf16.msra.mxu0 0
        %1041 = vmatprep.subr.bf16.mxu0 0
        %1042 = vmatpush1.bf16.msra.mxu0 0
        %1043 = vmatprep.subr.bf16.mxu0 0
        %1044 = vmatpush1.bf16.msra.mxu0 0
        %1045 = vmatprep.subr.bf16.mxu0 0
        %1046 = vmatpush1.bf16.msra.mxu0 0
        %1047 = vmatprep.subr.bf16.mxu0 0
        %1048 = vmatpush1.bf16.msra.mxu0 0
        %1049 = vmatprep.mubr.bf16.mxu0 0
        %1050 = vmatmul.mubr.bf16.gmra.mrb[0].mxu0 %v891
        %v1051 = vpop.f32.mrb[0].mxu0
        %v1052 = vadd.f32 %v1004, %v1051
        %v1053 = vpop.f32.mrb[0].mxu0
        %v1054 = vpop.f32.mrb[0].mxu0
        %v1055 = vadd.f32 %v1004, %v1054
        %v1056 = vpop.f32.mrb[0].mxu0
        %1057 = vdwg.mxu0
        %s1058 = scalar_lea.vmem %s730, 48
        %v1059 = vld [vmem:[%s1058] sm:$0xf]
        %v1060 = vld [vmem:[%s1058 + $0x4] sm:$0xf]
        %v1061 = vld [vmem:[%s1058 + $0x8] sm:$0xf]
        %v1062 = vld [vmem:[%s1058 + $0xc] sm:$0xf]
        %vm1063 = vcmask 64512
        %v1065 = vsel %vm1063, %v928, 0
        %v1068 = vsel %vm1063, %v990, 0
        %1070 = vmatprep.subr.mxu0 0.0
        %1071 = vmatpush1.xpose.msra.mxu0 %v1068
        %1072 = vmatprep.subr.mxu0 0.0
        %1073 = vmatpush1.xpose.msra.mxu0 0.0
        %1074 = vmatprep.subr.mxu0 0.0
        %1075 = vmatpush1.xpose.msra.mxu0 0.0
        %1076 = vmatprep.subr.mxu0 0.0
        %1077 = vmatpush1.xpose.msra.mxu0 0.0
        %1078 = vmatprep.subr.mxu0 0.0
        %1079 = vmatpush1.xpose.msra.mxu0 0.0
        %1080 = vmatprep.subr.mxu0 0.0
        %1081 = vmatpush1.xpose.msra.mxu0 0.0
        %1082 = vmatprep.subr.mxu0 0.0
        %1083 = vmatpush1.xpose.msra.mxu0 0.0
        %1084 = vmatprep.subr.mxu0 0.0
        %1085 = vmatpush1.xpose.msra.mxu0 0.0
        %1086 = vmatprep.subr.mxu0 0.0
        %1087 = vmatpush1.xpose.msra.mxu0 0.0
        %1088 = vmatprep.subr.mxu0 0.0
        %1089 = vmatpush1.xpose.msra.mxu0 0.0
        %1090 = vmatprep.subr.mxu0 0.0
        %1091 = vmatpush1.xpose.msra.mxu0 0.0
        %1092 = vmatprep.subr.mxu0 0.0
        %1093 = vmatpush1.xpose.msra.mxu0 0.0
        %1094 = vmatprep.subr.mxu0 0.0
        %1095 = vmatpush1.xpose.msra.mxu0 0.0
        %1096 = vmatprep.subr.mxu0 0.0
        %1097 = vmatpush1.xpose.msra.mxu0 0.0
        %1098 = vmatprep.subr.mxu0 0.0
        %1099 = vmatpush1.xpose.msra.mxu0 0.0
        %1100 = vmatprep.subr.mxu0 0.0
        %1101 = vmatpush1.xpose.msra.mxu0 0.0
        %1102 = vmatprep.subr.mxu0 0.0
        %1103 = vmatpush1.xpose.msra.mxu0 0.0
        %1104 = vmatprep.subr.mxu0 0.0
        %1105 = vmatpush1.xpose.msra.mxu0 0.0
        %1106 = vmatprep.subr.mxu0 0.0
        %1107 = vmatpush1.xpose.msra.mxu0 0.0
        %1108 = vmatprep.subr.mxu0 0.0
        %1109 = vmatpush1.xpose.msra.mxu0 0.0
        %1110 = vmatprep.subr.mxu0 0.0
        %1111 = vmatpush1.xpose.msra.mxu0 0.0
        %1112 = vmatprep.subr.mxu0 0.0
        %1113 = vmatpush1.xpose.msra.mxu0 0.0
        %1114 = vmatprep.subr.mxu0 0.0
        %1115 = vmatpush1.xpose.msra.mxu0 0.0
        %1116 = vmatprep.subr.mxu0 0.0
        %1117 = vmatpush1.xpose.msra.mxu0 0.0
        %1118 = vmatprep.subr.mxu0 0.0
        %1119 = vmatpush1.xpose.msra.mxu0 0.0
        %1120 = vmatprep.subr.mxu0 0.0
        %1121 = vmatpush1.xpose.msra.mxu0 0.0
        %1122 = vmatprep.subr.mxu0 0.0
        %1123 = vmatpush1.xpose.msra.mxu0 0.0
        %1124 = vmatprep.subr.mxu0 0.0
        %1125 = vmatpush1.xpose.msra.mxu0 0.0
        %1126 = vmatprep.subr.mxu0 0.0
        %1127 = vmatpush1.xpose.msra.mxu0 0.0
        %1128 = vmatprep.subr.mxu0 0.0
        %1129 = vmatpush1.xpose.msra.mxu0 0.0
        %1130 = vmatprep.subr.mxu0 0.0
        %1131 = vmatpush1.xpose.msra.mxu0 0.0
        %1132 = vmatprep.subr.mxu0 0.0
        %1133 = vmatpush1.xpose.msra.mxu0 0.0
        %1134 = vmatprep.mubr.f32.mxu0 0.0
        %1135 = vmatmul.mubr.f32.gmra.mrb[0].mxu0 %v1065
        %v1136 = vpop.f32.mrb[0].mxu0
        %v1137 = vadd.f32 0.0, %v1136
        %v1138 = vpop.f32.mrb[0].mxu0
        %1139 = vdwg.mxu0
        %v1141 = vsel %vm1063, %v931, 0
        %v1144 = vsel %vm1063, %v993, 0
        %1146 = vmatprep.subr.mxu0 0.0
        %1147 = vmatpush1.xpose.msra.mxu0 %v1144
        %1148 = vmatprep.subr.mxu0 0.0
        %1149 = vmatpush1.xpose.msra.mxu0 0.0
        %1150 = vmatprep.subr.mxu0 0.0
        %1151 = vmatpush1.xpose.msra.mxu0 0.0
        %1152 = vmatprep.subr.mxu0 0.0
        %1153 = vmatpush1.xpose.msra.mxu0 0.0
        %1154 = vmatprep.subr.mxu0 0.0
        %1155 = vmatpush1.xpose.msra.mxu0 0.0
        %1156 = vmatprep.subr.mxu0 0.0
        %1157 = vmatpush1.xpose.msra.mxu0 0.0
        %1158 = vmatprep.subr.mxu0 0.0
        %1159 = vmatpush1.xpose.msra.mxu0 0.0
        %1160 = vmatprep.subr.mxu0 0.0
        %1161 = vmatpush1.xpose.msra.mxu0 0.0
        %1162 = vmatprep.subr.mxu0 0.0
        %1163 = vmatpush1.xpose.msra.mxu0 0.0
        %1164 = vmatprep.subr.mxu0 0.0
        %1165 = vmatpush1.xpose.msra.mxu0 0.0
        %1166 = vmatprep.subr.mxu0 0.0
        %1167 = vmatpush1.xpose.msra.mxu0 0.0
        %1168 = vmatprep.subr.mxu0 0.0
        %1169 = vmatpush1.xpose.msra.mxu0 0.0
        %1170 = vmatprep.subr.mxu0 0.0
        %1171 = vmatpush1.xpose.msra.mxu0 0.0
        %1172 = vmatprep.subr.mxu0 0.0
        %1173 = vmatpush1.xpose.msra.mxu0 0.0
        %1174 = vmatprep.subr.mxu0 0.0
        %1175 = vmatpush1.xpose.msra.mxu0 0.0
        %1176 = vmatprep.subr.mxu0 0.0
        %1177 = vmatpush1.xpose.msra.mxu0 0.0
        %1178 = vmatprep.subr.mxu0 0.0
        %1179 = vmatpush1.xpose.msra.mxu0 0.0
        %1180 = vmatprep.subr.mxu0 0.0
        %1181 = vmatpush1.xpose.msra.mxu0 0.0
        %1182 = vmatprep.subr.mxu0 0.0
        %1183 = vmatpush1.xpose.msra.mxu0 0.0
        %1184 = vmatprep.subr.mxu0 0.0
        %1185 = vmatpush1.xpose.msra.mxu0 0.0
        %1186 = vmatprep.subr.mxu0 0.0
        %1187 = vmatpush1.xpose.msra.mxu0 0.0
        %1188 = vmatprep.subr.mxu0 0.0
        %1189 = vmatpush1.xpose.msra.mxu0 0.0
        %1190 = vmatprep.subr.mxu0 0.0
        %1191 = vmatpush1.xpose.msra.mxu0 0.0
        %1192 = vmatprep.subr.mxu0 0.0
        %1193 = vmatpush1.xpose.msra.mxu0 0.0
        %1194 = vmatprep.subr.mxu0 0.0
        %1195 = vmatpush1.xpose.msra.mxu0 0.0
        %1196 = vmatprep.subr.mxu0 0.0
        %1197 = vmatpush1.xpose.msra.mxu0 0.0
        %1198 = vmatprep.subr.mxu0 0.0
        %1199 = vmatpush1.xpose.msra.mxu0 0.0
        %1200 = vmatprep.subr.mxu0 0.0
        %1201 = vmatpush1.xpose.msra.mxu0 0.0
        %1202 = vmatprep.subr.mxu0 0.0
        %1203 = vmatpush1.xpose.msra.mxu0 0.0
        %1204 = vmatprep.subr.mxu0 0.0
        %1205 = vmatpush1.xpose.msra.mxu0 0.0
        %1206 = vmatprep.subr.mxu0 0.0
        %1207 = vmatpush1.xpose.msra.mxu0 0.0
        %1208 = vmatprep.subr.mxu0 0.0
        %1209 = vmatpush1.xpose.msra.mxu0 0.0
        %1210 = vmatprep.mubr.f32.mxu0 0.0
        %1211 = vmatmul.mubr.f32.gmra.mrb[0].mxu0 %v1141
        %v1212 = vpop.f32.mrb[0].mxu0
        %v1213 = vadd.f32 0.0, %v1212
        %v1214 = vpop.f32.mrb[0].mxu0
        %1215 = vdwg.mxu0
        %v1216 = vmul.f32 %v1137, 0.35355338
        %v1217 = vmul.f32 %v1213, 0.35355338
        %v1218 = vlaneseq
        %v1219 = vshrl.u32 %v1218, 7
        %v1220 = vsub.s32 0, %v1219
        %v1221 = vrot.slane %v860, %v1220
        %v1222 = vlaneseq
        %v1223 = vshrl.u32 %v1222, 7
        %v1224 = vsub.s32 0, %v1223
        %v1225 = vrot.slane %v867, %v1224
        %v1228 = vadd.f32 %v1216, %v1221
        %v1229 = vadd.f32 %v1217, %v1225
        %v1230 = vsel %vm1063, %v1228, -inf
        %1231 = vmax.xlane.f32.xlu0 %v1230
        %v1232 = vpop.xlane.xlu0 %1231
        %v1233 = vsel %vm1063, %v1229, -inf
        %1234 = vmax.xlane.f32.xlu0 %v1233
        %v1235 = vpop.xlane.xlu0 %1234
        %v1236 = vsub.f32 %v1228, %v1232
        %v1237 = vsub.f32 %v1229, %v1235
        %v1238 = vmul.f32 %v1236, 1.442695
        %v1239 = vpow.pop %v1238
        %v1240 = vmul.f32 %v1237, 1.442695
        %v1241 = vpow.pop %v1240
        %v1242 = vsel %vm1063, %v1239, 0.0
        %1243 = vadd.xlane.f32.xlu0 %v1242
        %v1244 = vpop.xlane.xlu0 %1243
        %v1245 = vsel %vm1063, %v1241, 0.0
        %1246 = vadd.xlane.f32.xlu0 %v1245
        %v1247 = vpop.xlane.xlu0 %1246
        %v1248 = vrcp.pop %v1244
        %v1249 = vrcp.pop %v1247
        %v1250 = vmul.f32 %v1239, %v1248
        %v1251 = vmul.f32 %v1241, %v1249
        %v1253 = vsel %vm1063, %v1250, 0
        %1255 = vmatprep.subr.mxu0 0.0
        %1256 = vmatpush1.msra.mxu0 %v1052
        %1257 = vmatprep.subr.mxu0 0.0
        %1258 = vmatpush1.msra.mxu0 0.0
        %1259 = vmatprep.subr.mxu0 0.0
        %1260 = vmatpush1.msra.mxu0 0.0
        %1261 = vmatprep.subr.mxu0 0.0
        %1262 = vmatpush1.msra.mxu0 0.0
        %1263 = vmatprep.subr.mxu0 0.0
        %1264 = vmatpush1.msra.mxu0 0.0
        %1265 = vmatprep.subr.mxu0 0.0
        %1266 = vmatpush1.msra.mxu0 0.0
        %1267 = vmatprep.subr.mxu0 0.0
        %1268 = vmatpush1.msra.mxu0 0.0
        %1269 = vmatprep.subr.mxu0 0.0
        %1270 = vmatpush1.msra.mxu0 0.0
        %1271 = vmatprep.subr.mxu0 0.0
        %1272 = vmatpush1.msra.mxu0 0.0
        %1273 = vmatprep.subr.mxu0 0.0
        %1274 = vmatpush1.msra.mxu0 0.0
        %1275 = vmatprep.subr.mxu0 0.0
        %1276 = vmatpush1.msra.mxu0 0.0
        %1277 = vmatprep.subr.mxu0 0.0
        %1278 = vmatpush1.msra.mxu0 0.0
        %1279 = vmatprep.subr.mxu0 0.0
        %1280 = vmatpush1.msra.mxu0 0.0
        %1281 = vmatprep.subr.mxu0 0.0
        %1282 = vmatpush1.msra.mxu0 0.0
        %1283 = vmatprep.subr.mxu0 0.0
        %1284 = vmatpush1.msra.mxu0 0.0
        %1285 = vmatprep.subr.mxu0 0.0
        %1286 = vmatpush1.msra.mxu0 0.0
        %1287 = vmatprep.subr.mxu0 0.0
        %1288 = vmatpush1.msra.mxu0 0.0
        %1289 = vmatprep.subr.mxu0 0.0
        %1290 = vmatpush1.msra.mxu0 0.0
        %1291 = vmatprep.subr.mxu0 0.0
        %1292 = vmatpush1.msra.mxu0 0.0
        %1293 = vmatprep.subr.mxu0 0.0
        %1294 = vmatpush1.msra.mxu0 0.0
        %1295 = vmatprep.subr.mxu0 0.0
        %1296 = vmatpush1.msra.mxu0 0.0
        %1297 = vmatprep.subr.mxu0 0.0
        %1298 = vmatpush1.msra.mxu0 0.0
        %1299 = vmatprep.subr.mxu0 0.0
        %1300 = vmatpush1.msra.mxu0 0.0
        %1301 = vmatprep.subr.mxu0 0.0
        %1302 = vmatpush1.msra.mxu0 0.0
        %1303 = vmatprep.subr.mxu0 0.0
        %1304 = vmatpush1.msra.mxu0 0.0
        %1305 = vmatprep.subr.mxu0 0.0
        %1306 = vmatpush1.msra.mxu0 0.0
        %1307 = vmatprep.subr.mxu0 0.0
        %1308 = vmatpush1.msra.mxu0 0.0
        %1309 = vmatprep.subr.mxu0 0.0
        %1310 = vmatpush1.msra.mxu0 0.0
        %1311 = vmatprep.subr.mxu0 0.0
        %1312 = vmatpush1.msra.mxu0 0.0
        %1313 = vmatprep.subr.mxu0 0.0
        %1314 = vmatpush1.msra.mxu0 0.0
        %1315 = vmatprep.subr.mxu0 0.0
        %1316 = vmatpush1.msra.mxu0 0.0
        %1317 = vmatprep.subr.mxu0 0.0
        %1318 = vmatpush1.msra.mxu0 0.0
        %1319 = vmatprep.mubr.f32.mxu0 0.0
        %1320 = vmatmul.mubr.f32.gmra.mrb[0].mxu0 %v1253
        %v1321 = vpop.f32.mrb[0].mxu0
        %v1322 = vadd.f32 0.0, %v1321
        %v1323 = vpop.f32.mrb[0].mxu0
        %1324 = vdwg.mxu0
        %v1326 = vsel %vm1063, %v1251, 0
        %1328 = vmatprep.subr.mxu0 0.0
        %1329 = vmatpush1.msra.mxu0 %v1055
        %1330 = vmatprep.subr.mxu0 0.0
        %1331 = vmatpush1.msra.mxu0 0.0
        %1332 = vmatprep.subr.mxu0 0.0
        %1333 = vmatpush1.msra.mxu0 0.0
        %1334 = vmatprep.subr.mxu0 0.0
        %1335 = vmatpush1.msra.mxu0 0.0
        %1336 = vmatprep.subr.mxu0 0.0
        %1337 = vmatpush1.msra.mxu0 0.0
        %1338 = vmatprep.subr.mxu0 0.0
        %1339 = vmatpush1.msra.mxu0 0.0
        %1340 = vmatprep.subr.mxu0 0.0
        %1341 = vmatpush1.msra.mxu0 0.0
        %1342 = vmatprep.subr.mxu0 0.0
        %1343 = vmatpush1.msra.mxu0 0.0
        %1344 = vmatprep.subr.mxu0 0.0
        %1345 = vmatpush1.msra.mxu0 0.0
        %1346 = vmatprep.subr.mxu0 0.0
        %1347 = vmatpush1.msra.mxu0 0.0
        %1348 = vmatprep.subr.mxu0 0.0
        %1349 = vmatpush1.msra.mxu0 0.0
        %1350 = vmatprep.subr.mxu0 0.0
        %1351 = vmatpush1.msra.mxu0 0.0
        %1352 = vmatprep.subr.mxu0 0.0
        %1353 = vmatpush1.msra.mxu0 0.0
        %1354 = vmatprep.subr.mxu0 0.0
        %1355 = vmatpush1.msra.mxu0 0.0
        %1356 = vmatprep.subr.mxu0 0.0
        %1357 = vmatpush1.msra.mxu0 0.0
        %1358 = vmatprep.subr.mxu0 0.0
        %1359 = vmatpush1.msra.mxu0 0.0
        %1360 = vmatprep.subr.mxu0 0.0
        %1361 = vmatpush1.msra.mxu0 0.0
        %1362 = vmatprep.subr.mxu0 0.0
        %1363 = vmatpush1.msra.mxu0 0.0
        %1364 = vmatprep.subr.mxu0 0.0
        %1365 = vmatpush1.msra.mxu0 0.0
        %1366 = vmatprep.subr.mxu0 0.0
        %1367 = vmatpush1.msra.mxu0 0.0
        %1368 = vmatprep.subr.mxu0 0.0
        %1369 = vmatpush1.msra.mxu0 0.0
        %1370 = vmatprep.subr.mxu0 0.0
        %1371 = vmatpush1.msra.mxu0 0.0
        %1372 = vmatprep.subr.mxu0 0.0
        %1373 = vmatpush1.msra.mxu0 0.0
        %1374 = vmatprep.subr.mxu0 0.0
        %1375 = vmatpush1.msra.mxu0 0.0
        %1376 = vmatprep.subr.mxu0 0.0
        %1377 = vmatpush1.msra.mxu0 0.0
        %1378 = vmatprep.subr.mxu0 0.0
        %1379 = vmatpush1.msra.mxu0 0.0
        %1380 = vmatprep.subr.mxu0 0.0
        %1381 = vmatpush1.msra.mxu0 0.0
        %1382 = vmatprep.subr.mxu0 0.0
        %1383 = vmatpush1.msra.mxu0 0.0
        %1384 = vmatprep.subr.mxu0 0.0
        %1385 = vmatpush1.msra.mxu0 0.0
        %1386 = vmatprep.subr.mxu0 0.0
        %1387 = vmatpush1.msra.mxu0 0.0
        %1388 = vmatprep.subr.mxu0 0.0
        %1389 = vmatpush1.msra.mxu0 0.0
        %1390 = vmatprep.subr.mxu0 0.0
        %1391 = vmatpush1.msra.mxu0 0.0
        %1392 = vmatprep.mubr.f32.mxu0 0.0
        %1393 = vmatmul.mubr.f32.gmra.mrb[0].mxu0 %v1326
        %v1394 = vpop.f32.mrb[0].mxu0
        %v1395 = vadd.f32 0.0, %v1394
        %v1396 = vpop.f32.mrb[0].mxu0
        %1397 = vdwg.mxu0
        %v1398 = vpack.c.bf16 %v1395, %v1322
        %1399 = vrot.lane.b32.xlu0 %v928, 120
        %v1400 = vpop.permute.xlu0 %1399
        %1401 = vrot.lane.b32.xlu0 %v990, 120
        %v1402 = vpop.permute.xlu0 %1401
        %v1403 = vsel %vm1063, %v1400, 0
        %v1405 = vsel %vm1063, %v1402, 0
        %1407 = vmatprep.subr.mxu0 0.0
        %1408 = vmatpush1.xpose.msra.mxu0 %v1405
        %1409 = vmatprep.subr.mxu0 0.0
        %1410 = vmatpush1.xpose.msra.mxu0 0.0
        %1411 = vmatprep.subr.mxu0 0.0
        %1412 = vmatpush1.xpose.msra.mxu0 0.0
        %1413 = vmatprep.subr.mxu0 0.0
        %1414 = vmatpush1.xpose.msra.mxu0 0.0
        %1415 = vmatprep.subr.mxu0 0.0
        %1416 = vmatpush1.xpose.msra.mxu0 0.0
        %1417 = vmatprep.subr.mxu0 0.0
        %1418 = vmatpush1.xpose.msra.mxu0 0.0
        %1419 = vmatprep.subr.mxu0 0.0
        %1420 = vmatpush1.xpose.msra.mxu0 0.0
        %1421 = vmatprep.subr.mxu0 0.0
        %1422 = vmatpush1.xpose.msra.mxu0 0.0
        %1423 = vmatprep.subr.mxu0 0.0
        %1424 = vmatpush1.xpose.msra.mxu0 0.0
        %1425 = vmatprep.subr.mxu0 0.0
        %1426 = vmatpush1.xpose.msra.mxu0 0.0
        %1427 = vmatprep.subr.mxu0 0.0
        %1428 = vmatpush1.xpose.msra.mxu0 0.0
        %1429 = vmatprep.subr.mxu0 0.0
        %1430 = vmatpush1.xpose.msra.mxu0 0.0
        %1431 = vmatprep.subr.mxu0 0.0
        %1432 = vmatpush1.xpose.msra.mxu0 0.0
        %1433 = vmatprep.subr.mxu0 0.0
        %1434 = vmatpush1.xpose.msra.mxu0 0.0
        %1435 = vmatprep.subr.mxu0 0.0
        %1436 = vmatpush1.xpose.msra.mxu0 0.0
        %1437 = vmatprep.subr.mxu0 0.0
        %1438 = vmatpush1.xpose.msra.mxu0 0.0
        %1439 = vmatprep.subr.mxu0 0.0
        %1440 = vmatpush1.xpose.msra.mxu0 0.0
        %1441 = vmatprep.subr.mxu0 0.0
        %1442 = vmatpush1.xpose.msra.mxu0 0.0
        %1443 = vmatprep.subr.mxu0 0.0
        %1444 = vmatpush1.xpose.msra.mxu0 0.0
        %1445 = vmatprep.subr.mxu0 0.0
        %1446 = vmatpush1.xpose.msra.mxu0 0.0
        %1447 = vmatprep.subr.mxu0 0.0
        %1448 = vmatpush1.xpose.msra.mxu0 0.0
        %1449 = vmatprep.subr.mxu0 0.0
        %1450 = vmatpush1.xpose.msra.mxu0 0.0
        %1451 = vmatprep.subr.mxu0 0.0
        %1452 = vmatpush1.xpose.msra.mxu0 0.0
        %1453 = vmatprep.subr.mxu0 0.0
        %1454 = vmatpush1.xpose.msra.mxu0 0.0
        %1455 = vmatprep.subr.mxu0 0.0
        %1456 = vmatpush1.xpose.msra.mxu0 0.0
        %1457 = vmatprep.subr.mxu0 0.0
        %1458 = vmatpush1.xpose.msra.mxu0 0.0
        %1459 = vmatprep.subr.mxu0 0.0
        %1460 = vmatpush1.xpose.msra.mxu0 0.0
        %1461 = vmatprep.subr.mxu0 0.0
        %1462 = vmatpush1.xpose.msra.mxu0 0.0
        %1463 = vmatprep.subr.mxu0 0.0
        %1464 = vmatpush1.xpose.msra.mxu0 0.0
        %1465 = vmatprep.subr.mxu0 0.0
        %1466 = vmatpush1.xpose.msra.mxu0 0.0
        %1467 = vmatprep.subr.mxu0 0.0
        %1468 = vmatpush1.xpose.msra.mxu0 0.0
        %1469 = vmatprep.subr.mxu0 0.0
        %1470 = vmatpush1.xpose.msra.mxu0 0.0
        %1471 = vmatprep.mubr.f32.mxu0 0.0
        %1472 = vmatmul.mubr.f32.gmra.mrb[0].mxu0 %v1403
        %v1473 = vpop.f32.mrb[0].mxu0
        %v1474 = vadd.f32 0.0, %v1473
        %v1475 = vpop.f32.mrb[0].mxu0
        %1476 = vdwg.mxu0
        %1477 = vrot.lane.b32.xlu0 %v931, 120
        %v1478 = vpop.permute.xlu0 %1477
        %1479 = vrot.lane.b32.xlu0 %v993, 120
        %v1480 = vpop.permute.xlu0 %1479
        %v1481 = vsel %vm1063, %v1478, 0
        %v1483 = vsel %vm1063, %v1480, 0
        %1485 = vmatprep.subr.mxu0 0.0
        %1486 = vmatpush1.xpose.msra.mxu0 %v1483
        %1487 = vmatprep.subr.mxu0 0.0
        %1488 = vmatpush1.xpose.msra.mxu0 0.0
        %1489 = vmatprep.subr.mxu0 0.0
        %1490 = vmatpush1.xpose.msra.mxu0 0.0
        %1491 = vmatprep.subr.mxu0 0.0
        %1492 = vmatpush1.xpose.msra.mxu0 0.0
        %1493 = vmatprep.subr.mxu0 0.0
        %1494 = vmatpush1.xpose.msra.mxu0 0.0
        %1495 = vmatprep.subr.mxu0 0.0
        %1496 = vmatpush1.xpose.msra.mxu0 0.0
        %1497 = vmatprep.subr.mxu0 0.0
        %1498 = vmatpush1.xpose.msra.mxu0 0.0
        %1499 = vmatprep.subr.mxu0 0.0
        %1500 = vmatpush1.xpose.msra.mxu0 0.0
        %1501 = vmatprep.subr.mxu0 0.0
        %1502 = vmatpush1.xpose.msra.mxu0 0.0
        %1503 = vmatprep.subr.mxu0 0.0
        %1504 = vmatpush1.xpose.msra.mxu0 0.0
        %1505 = vmatprep.subr.mxu0 0.0
        %1506 = vmatpush1.xpose.msra.mxu0 0.0
        %1507 = vmatprep.subr.mxu0 0.0
        %1508 = vmatpush1.xpose.msra.mxu0 0.0
        %1509 = vmatprep.subr.mxu0 0.0
        %1510 = vmatpush1.xpose.msra.mxu0 0.0
        %1511 = vmatprep.subr.mxu0 0.0
        %1512 = vmatpush1.xpose.msra.mxu0 0.0
        %1513 = vmatprep.subr.mxu0 0.0
        %1514 = vmatpush1.xpose.msra.mxu0 0.0
        %1515 = vmatprep.subr.mxu0 0.0
        %1516 = vmatpush1.xpose.msra.mxu0 0.0
        %1517 = vmatprep.subr.mxu0 0.0
        %1518 = vmatpush1.xpose.msra.mxu0 0.0
        %1519 = vmatprep.subr.mxu0 0.0
        %1520 = vmatpush1.xpose.msra.mxu0 0.0
        %1521 = vmatprep.subr.mxu0 0.0
        %1522 = vmatpush1.xpose.msra.mxu0 0.0
        %1523 = vmatprep.subr.mxu0 0.0
        %1524 = vmatpush1.xpose.msra.mxu0 0.0
        %1525 = vmatprep.subr.mxu0 0.0
        %1526 = vmatpush1.xpose.msra.mxu0 0.0
        %1527 = vmatprep.subr.mxu0 0.0
        %1528 = vmatpush1.xpose.msra.mxu0 0.0
        %1529 = vmatprep.subr.mxu0 0.0
        %1530 = vmatpush1.xpose.msra.mxu0 0.0
        %1531 = vmatprep.subr.mxu0 0.0
        %1532 = vmatpush1.xpose.msra.mxu0 0.0
        %1533 = vmatprep.subr.mxu0 0.0
        %1534 = vmatpush1.xpose.msra.mxu0 0.0
        %1535 = vmatprep.subr.mxu0 0.0
        %1536 = vmatpush1.xpose.msra.mxu0 0.0
        %1537 = vmatprep.subr.mxu0 0.0
        %1538 = vmatpush1.xpose.msra.mxu0 0.0
        %1539 = vmatprep.subr.mxu0 0.0
        %1540 = vmatpush1.xpose.msra.mxu0 0.0
        %1541 = vmatprep.subr.mxu0 0.0
        %1542 = vmatpush1.xpose.msra.mxu0 0.0
        %1543 = vmatprep.subr.mxu0 0.0
        %1544 = vmatpush1.xpose.msra.mxu0 0.0
        %1545 = vmatprep.subr.mxu0 0.0
        %1546 = vmatpush1.xpose.msra.mxu0 0.0
        %1547 = vmatprep.subr.mxu0 0.0
        %1548 = vmatpush1.xpose.msra.mxu0 0.0
        %1549 = vmatprep.mubr.f32.mxu0 0.0
        %1550 = vmatmul.mubr.f32.gmra.mrb[0].mxu0 %v1481
        %v1551 = vpop.f32.mrb[0].mxu0
        %v1552 = vadd.f32 0.0, %v1551
        %v1553 = vpop.f32.mrb[0].mxu0
        %1554 = vdwg.mxu0
        %v1555 = vmul.f32 %v1474, 0.35355338
        %v1556 = vmul.f32 %v1552, 0.35355338
        %v1557 = vadd.f32 %v1555, %v1221
        %v1558 = vadd.f32 %v1556, %v1225
        %v1559 = vsel %vm1063, %v1557, -inf
        %1560 = vmax.xlane.f32.xlu0 %v1559
        %v1561 = vpop.xlane.xlu0 %1560
        %v1562 = vsel %vm1063, %v1558, -inf
        %1563 = vmax.xlane.f32.xlu0 %v1562
        %v1564 = vpop.xlane.xlu0 %1563
        %v1565 = vsub.f32 %v1557, %v1561
        %v1566 = vsub.f32 %v1558, %v1564
        %v1567 = vmul.f32 %v1565, 1.442695
        %v1568 = vpow.pop %v1567
        %v1569 = vmul.f32 %v1566, 1.442695
        %v1570 = vpow.pop %v1569
        %v1571 = vsel %vm1063, %v1568, 0.0
        %1572 = vadd.xlane.f32.xlu0 %v1571
        %v1573 = vpop.xlane.xlu0 %1572
        %v1574 = vsel %vm1063, %v1570, 0.0
        %1575 = vadd.xlane.f32.xlu0 %v1574
        %v1576 = vpop.xlane.xlu0 %1575
        %v1577 = vrcp.pop %v1573
        %v1578 = vrcp.pop %v1576
        %v1579 = vmul.f32 %v1568, %v1577
        %v1580 = vmul.f32 %v1570, %v1578
        %1582 = vrot.lane.b32.xlu0 %v1052, 120
        %v1583 = vpop.permute.xlu0 %1582
        %v1586 = vsel %vm1063, %v1579, 0
        %1588 = vmatprep.subr.mxu0 0.0
        %1589 = vmatpush1.msra.mxu0 %v1583
        %1590 = vmatprep.subr.mxu0 0.0
        %1591 = vmatpush1.msra.mxu0 0.0
        %1592 = vmatprep.subr.mxu0 0.0
        %1593 = vmatpush1.msra.mxu0 0.0
        %1594 = vmatprep.subr.mxu0 0.0
        %1595 = vmatpush1.msra.mxu0 0.0
        %1596 = vmatprep.subr.mxu0 0.0
        %1597 = vmatpush1.msra.mxu0 0.0
        %1598 = vmatprep.subr.mxu0 0.0
        %1599 = vmatpush1.msra.mxu0 0.0
        %1600 = vmatprep.subr.mxu0 0.0
        %1601 = vmatpush1.msra.mxu0 0.0
        %1602 = vmatprep.subr.mxu0 0.0
        %1603 = vmatpush1.msra.mxu0 0.0
        %1604 = vmatprep.subr.mxu0 0.0
        %1605 = vmatpush1.msra.mxu0 0.0
        %1606 = vmatprep.subr.mxu0 0.0
        %1607 = vmatpush1.msra.mxu0 0.0
        %1608 = vmatprep.subr.mxu0 0.0
        %1609 = vmatpush1.msra.mxu0 0.0
        %1610 = vmatprep.subr.mxu0 0.0
        %1611 = vmatpush1.msra.mxu0 0.0
        %1612 = vmatprep.subr.mxu0 0.0
        %1613 = vmatpush1.msra.mxu0 0.0
        %1614 = vmatprep.subr.mxu0 0.0
        %1615 = vmatpush1.msra.mxu0 0.0
        %1616 = vmatprep.subr.mxu0 0.0
        %1617 = vmatpush1.msra.mxu0 0.0
        %1618 = vmatprep.subr.mxu0 0.0
        %1619 = vmatpush1.msra.mxu0 0.0
        %1620 = vmatprep.subr.mxu0 0.0
        %1621 = vmatpush1.msra.mxu0 0.0
        %1622 = vmatprep.subr.mxu0 0.0
        %1623 = vmatpush1.msra.mxu0 0.0
        %1624 = vmatprep.subr.mxu0 0.0
        %1625 = vmatpush1.msra.mxu0 0.0
        %1626 = vmatprep.subr.mxu0 0.0
        %1627 = vmatpush1.msra.mxu0 0.0
        %1628 = vmatprep.subr.mxu0 0.0
        %1629 = vmatpush1.msra.mxu0 0.0
        %1630 = vmatprep.subr.mxu0 0.0
        %1631 = vmatpush1.msra.mxu0 0.0
        %1632 = vmatprep.subr.mxu0 0.0
        %1633 = vmatpush1.msra.mxu0 0.0
        %1634 = vmatprep.subr.mxu0 0.0
        %1635 = vmatpush1.msra.mxu0 0.0
        %1636 = vmatprep.subr.mxu0 0.0
        %1637 = vmatpush1.msra.mxu0 0.0
        %1638 = vmatprep.subr.mxu0 0.0
        %1639 = vmatpush1.msra.mxu0 0.0
        %1640 = vmatprep.subr.mxu0 0.0
        %1641 = vmatpush1.msra.mxu0 0.0
        %1642 = vmatprep.subr.mxu0 0.0
        %1643 = vmatpush1.msra.mxu0 0.0
        %1644 = vmatprep.subr.mxu0 0.0
        %1645 = vmatpush1.msra.mxu0 0.0
        %1646 = vmatprep.subr.mxu0 0.0
        %1647 = vmatpush1.msra.mxu0 0.0
        %1648 = vmatprep.subr.mxu0 0.0
        %1649 = vmatpush1.msra.mxu0 0.0
        %1650 = vmatprep.subr.mxu0 0.0
        %1651 = vmatpush1.msra.mxu0 0.0
        %1652 = vmatprep.mubr.f32.mxu0 0.0
        %1653 = vmatmul.mubr.f32.gmra.mrb[0].mxu0 %v1586
        %v1654 = vpop.f32.mrb[0].mxu0
        %v1655 = vadd.f32 0.0, %v1654
        %v1656 = vpop.f32.mrb[0].mxu0
        %1657 = vdwg.mxu0
        %1659 = vrot.lane.b32.xlu0 %v1055, 120
        %v1660 = vpop.permute.xlu0 %1659
        %v1663 = vsel %vm1063, %v1580, 0
        %1665 = vmatprep.subr.mxu0 0.0
        %1666 = vmatpush1.msra.mxu0 %v1660
        %1667 = vmatprep.subr.mxu0 0.0
        %1668 = vmatpush1.msra.mxu0 0.0
        %1669 = vmatprep.subr.mxu0 0.0
        %1670 = vmatpush1.msra.mxu0 0.0
        %1671 = vmatprep.subr.mxu0 0.0
        %1672 = vmatpush1.msra.mxu0 0.0
        %1673 = vmatprep.subr.mxu0 0.0
        %1674 = vmatpush1.msra.mxu0 0.0
        %1675 = vmatprep.subr.mxu0 0.0
        %1676 = vmatpush1.msra.mxu0 0.0
        %1677 = vmatprep.subr.mxu0 0.0
        %1678 = vmatpush1.msra.mxu0 0.0
        %1679 = vmatprep.subr.mxu0 0.0
        %1680 = vmatpush1.msra.mxu0 0.0
        %1681 = vmatprep.subr.mxu0 0.0
        %1682 = vmatpush1.msra.mxu0 0.0
        %1683 = vmatprep.subr.mxu0 0.0
        %1684 = vmatpush1.msra.mxu0 0.0
        %1685 = vmatprep.subr.mxu0 0.0
        %1686 = vmatpush1.msra.mxu0 0.0
        %1687 = vmatprep.subr.mxu0 0.0
        %1688 = vmatpush1.msra.mxu0 0.0
        %1689 = vmatprep.subr.mxu0 0.0
        %1690 = vmatpush1.msra.mxu0 0.0
        %1691 = vmatprep.subr.mxu0 0.0
        %1692 = vmatpush1.msra.mxu0 0.0
        %1693 = vmatprep.subr.mxu0 0.0
        %1694 = vmatpush1.msra.mxu0 0.0
        %1695 = vmatprep.subr.mxu0 0.0
        %1696 = vmatpush1.msra.mxu0 0.0
        %1697 = vmatprep.subr.mxu0 0.0
        %1698 = vmatpush1.msra.mxu0 0.0
        %1699 = vmatprep.subr.mxu0 0.0
        %1700 = vmatpush1.msra.mxu0 0.0
        %1701 = vmatprep.subr.mxu0 0.0
        %1702 = vmatpush1.msra.mxu0 0.0
        %1703 = vmatprep.subr.mxu0 0.0
        %1704 = vmatpush1.msra.mxu0 0.0
        %1705 = vmatprep.subr.mxu0 0.0
        %1706 = vmatpush1.msra.mxu0 0.0
        %1707 = vmatprep.subr.mxu0 0.0
        %1708 = vmatpush1.msra.mxu0 0.0
        %1709 = vmatprep.subr.mxu0 0.0
        %1710 = vmatpush1.msra.mxu0 0.0
        %1711 = vmatprep.subr.mxu0 0.0
        %1712 = vmatpush1.msra.mxu0 0.0
        %1713 = vmatprep.subr.mxu0 0.0
        %1714 = vmatpush1.msra.mxu0 0.0
        %1715 = vmatprep.subr.mxu0 0.0
        %1716 = vmatpush1.msra.mxu0 0.0
        %1717 = vmatprep.subr.mxu0 0.0
        %1718 = vmatpush1.msra.mxu0 0.0
        %1719 = vmatprep.subr.mxu0 0.0
        %1720 = vmatpush1.msra.mxu0 0.0
        %1721 = vmatprep.subr.mxu0 0.0
        %1722 = vmatpush1.msra.mxu0 0.0
        %1723 = vmatprep.subr.mxu0 0.0
        %1724 = vmatpush1.msra.mxu0 0.0
        %1725 = vmatprep.subr.mxu0 0.0
        %1726 = vmatpush1.msra.mxu0 0.0
        %1727 = vmatprep.subr.mxu0 0.0
        %1728 = vmatpush1.msra.mxu0 0.0
        %1729 = vmatprep.mubr.f32.mxu0 0.0
        %1730 = vmatmul.mubr.f32.gmra.mrb[0].mxu0 %v1663
        %v1731 = vpop.f32.mrb[0].mxu0
        %v1732 = vadd.f32 0.0, %v1731
        %v1733 = vpop.f32.mrb[0].mxu0
        %1734 = vdwg.mxu0
        %v1735 = vpack.c.bf16 %v1732, %v1655
        %v1737 = vsel %vm1063, %v1735, 0
        %vm1739 = vcmask 1043456
        %v1741 = vsel %vm1739, %v1060, 0
        %1743 = vmatprep.subr.bf16.mxu0 0
        %1744 = vmatpush1.bf16.msra.mxu0 %v1741
        %1745 = vmatprep.subr.bf16.mxu0 0
        %1746 = vmatpush1.bf16.msra.mxu0 0
        %1747 = vmatprep.subr.bf16.mxu0 0
        %1748 = vmatpush1.bf16.msra.mxu0 0
        %1749 = vmatprep.subr.bf16.mxu0 0
        %1750 = vmatpush1.bf16.msra.mxu0 0
        %1751 = vmatprep.subr.bf16.mxu0 0
        %1752 = vmatpush1.bf16.msra.mxu0 0
        %1753 = vmatprep.subr.bf16.mxu0 0
        %1754 = vmatpush1.bf16.msra.mxu0 0
        %1755 = vmatprep.subr.bf16.mxu0 0
        %1756 = vmatpush1.bf16.msra.mxu0 0
        %1757 = vmatprep.subr.bf16.mxu0 0
        %1758 = vmatpush1.bf16.msra.mxu0 0
        %1759 = vmatprep.subr.bf16.mxu0 0
        %1760 = vmatpush1.bf16.msra.mxu0 0
        %1761 = vmatprep.subr.bf16.mxu0 0
        %1762 = vmatpush1.bf16.msra.mxu0 0
        %1763 = vmatprep.subr.bf16.mxu0 0
        %1764 = vmatpush1.bf16.msra.mxu0 0
        %1765 = vmatprep.subr.bf16.mxu0 0
        %1766 = vmatpush1.bf16.msra.mxu0 0
        %1767 = vmatprep.subr.bf16.mxu0 0
        %1768 = vmatpush1.bf16.msra.mxu0 0
        %1769 = vmatprep.subr.bf16.mxu0 0
        %1770 = vmatpush1.bf16.msra.mxu0 0
        %1771 = vmatprep.subr.bf16.mxu0 0
        %1772 = vmatpush1.bf16.msra.mxu0 0
        %1773 = vmatprep.subr.bf16.mxu0 0
        %1774 = vmatpush1.bf16.msra.mxu0 0
        %1775 = vmatprep.mubr.bf16.mxu0 0
        %1776 = vmatmul.mubr.bf16.gmra.mrb[0].mxu0 %v1737
        %v1777 = vpop.f32.mrb[0].mxu0
        %v1778 = vadd.f32 0.0, %v1777
        %v1779 = vpop.f32.mrb[0].mxu0
        %v1780 = vpop.f32.mrb[0].mxu0
        %v1781 = vadd.f32 0.0, %v1780
        %v1782 = vpop.f32.mrb[0].mxu0
        %1783 = vdwg.mxu0
        %v1785 = vsel %vm1063, %v1398, 0
        %v1788 = vsel %vm1739, %v1059, 0
        %1790 = vmatprep.subr.bf16.mxu0 0
        %1791 = vmatpush1.bf16.msra.mxu0 %v1788
        %1792 = vmatprep.subr.bf16.mxu0 0
        %1793 = vmatpush1.bf16.msra.mxu0 0
        %1794 = vmatprep.subr.bf16.mxu0 0
        %1795 = vmatpush1.bf16.msra.mxu0 0
        %1796 = vmatprep.subr.bf16.mxu0 0
        %1797 = vmatpush1.bf16.msra.mxu0 0
        %1798 = vmatprep.subr.bf16.mxu0 0
        %1799 = vmatpush1.bf16.msra.mxu0 0
        %1800 = vmatprep.subr.bf16.mxu0 0
        %1801 = vmatpush1.bf16.msra.mxu0 0
        %1802 = vmatprep.subr.bf16.mxu0 0
        %1803 = vmatpush1.bf16.msra.mxu0 0
        %1804 = vmatprep.subr.bf16.mxu0 0
        %1805 = vmatpush1.bf16.msra.mxu0 0
        %1806 = vmatprep.subr.bf16.mxu0 0
        %1807 = vmatpush1.bf16.msra.mxu0 0
        %1808 = vmatprep.subr.bf16.mxu0 0
        %1809 = vmatpush1.bf16.msra.mxu0 0
        %1810 = vmatprep.subr.bf16.mxu0 0
        %1811 = vmatpush1.bf16.msra.mxu0 0
        %1812 = vmatprep.subr.bf16.mxu0 0
        %1813 = vmatpush1.bf16.msra.mxu0 0
        %1814 = vmatprep.subr.bf16.mxu0 0
        %1815 = vmatpush1.bf16.msra.mxu0 0
        %1816 = vmatprep.subr.bf16.mxu0 0
        %1817 = vmatpush1.bf16.msra.mxu0 0
        %1818 = vmatprep.subr.bf16.mxu0 0
        %1819 = vmatpush1.bf16.msra.mxu0 0
        %1820 = vmatprep.subr.bf16.mxu0 0
        %1821 = vmatpush1.bf16.msra.mxu0 0
        %1822 = vmatprep.mubr.bf16.mxu0 0
        %1823 = vmatmul.mubr.bf16.gmra.mrb[0].mxu0 %v1785
        %v1824 = vpop.f32.mrb[0].mxu0
        %v1825 = vadd.f32 %v1778, %v1824
        %v1826 = vpop.f32.mrb[0].mxu0
        %v1827 = vpop.f32.mrb[0].mxu0
        %v1828 = vadd.f32 %v1781, %v1827
        %v1829 = vpop.f32.mrb[0].mxu0
        %1830 = vdwg.mxu0
        %1831 = vrot.lane.b32.xlu0 %v928, 112
        %v1832 = vpop.permute.xlu0 %1831
        %1833 = vrot.lane.b32.xlu0 %v990, 112
        %v1834 = vpop.permute.xlu0 %1833
        %v1835 = vsel %vm1063, %v1832, 0
        %v1837 = vsel %vm1063, %v1834, 0
        %1839 = vmatprep.subr.mxu0 0.0
        %1840 = vmatpush1.xpose.msra.mxu0 %v1837
        %1841 = vmatprep.subr.mxu0 0.0
        %1842 = vmatpush1.xpose.msra.mxu0 0.0
        %1843 = vmatprep.subr.mxu0 0.0
        %1844 = vmatpush1.xpose.msra.mxu0 0.0
        %1845 = vmatprep.subr.mxu0 0.0
        %1846 = vmatpush1.xpose.msra.mxu0 0.0
        %1847 = vmatprep.subr.mxu0 0.0
        %1848 = vmatpush1.xpose.msra.mxu0 0.0
        %1849 = vmatprep.subr.mxu0 0.0
        %1850 = vmatpush1.xpose.msra.mxu0 0.0
        %1851 = vmatprep.subr.mxu0 0.0
        %1852 = vmatpush1.xpose.msra.mxu0 0.0
        %1853 = vmatprep.subr.mxu0 0.0
        %1854 = vmatpush1.xpose.msra.mxu0 0.0
        %1855 = vmatprep.subr.mxu0 0.0
        %1856 = vmatpush1.xpose.msra.mxu0 0.0
        %1857 = vmatprep.subr.mxu0 0.0
        %1858 = vmatpush1.xpose.msra.mxu0 0.0
        %1859 = vmatprep.subr.mxu0 0.0
        %1860 = vmatpush1.xpose.msra.mxu0 0.0
        %1861 = vmatprep.subr.mxu0 0.0
        %1862 = vmatpush1.xpose.msra.mxu0 0.0
        %1863 = vmatprep.subr.mxu0 0.0
        %1864 = vmatpush1.xpose.msra.mxu0 0.0
        %1865 = vmatprep.subr.mxu0 0.0
        %1866 = vmatpush1.xpose.msra.mxu0 0.0
        %1867 = vmatprep.subr.mxu0 0.0
        %1868 = vmatpush1.xpose.msra.mxu0 0.0
        %1869 = vmatprep.subr.mxu0 0.0
        %1870 = vmatpush1.xpose.msra.mxu0 0.0
        %1871 = vmatprep.subr.mxu0 0.0
        %1872 = vmatpush1.xpose.msra.mxu0 0.0
        %1873 = vmatprep.subr.mxu0 0.0
        %1874 = vmatpush1.xpose.msra.mxu0 0.0
        %1875 = vmatprep.subr.mxu0 0.0
        %1876 = vmatpush1.xpose.msra.mxu0 0.0
        %1877 = vmatprep.subr.mxu0 0.0
        %1878 = vmatpush1.xpose.msra.mxu0 0.0
        %1879 = vmatprep.subr.mxu0 0.0
        %1880 = vmatpush1.xpose.msra.mxu0 0.0
        %1881 = vmatprep.subr.mxu0 0.0
        %1882 = vmatpush1.xpose.msra.mxu0 0.0
        %1883 = vmatprep.subr.mxu0 0.0
        %1884 = vmatpush1.xpose.msra.mxu0 0.0
        %1885 = vmatprep.subr.mxu0 0.0
        %1886 = vmatpush1.xpose.msra.mxu0 0.0
        %1887 = vmatprep.subr.mxu0 0.0
        %1888 = vmatpush1.xpose.msra.mxu0 0.0
        %1889 = vmatprep.subr.mxu0 0.0
        %1890 = vmatpush1.xpose.msra.mxu0 0.0
        %1891 = vmatprep.subr.mxu0 0.0
        %1892 = vmatpush1.xpose.msra.mxu0 0.0
        %1893 = vmatprep.subr.mxu0 0.0
        %1894 = vmatpush1.xpose.msra.mxu0 0.0
        %1895 = vmatprep.subr.mxu0 0.0
        %1896 = vmatpush1.xpose.msra.mxu0 0.0
        %1897 = vmatprep.subr.mxu0 0.0
        %1898 = vmatpush1.xpose.msra.mxu0 0.0
        %1899 = vmatprep.subr.mxu0 0.0
        %1900 = vmatpush1.xpose.msra.mxu0 0.0
        %1901 = vmatprep.subr.mxu0 0.0
        %1902 = vmatpush1.xpose.msra.mxu0 0.0
        %1903 = vmatprep.mubr.f32.mxu0 0.0
        %1904 = vmatmul.mubr.f32.gmra.mrb[0].mxu0 %v1835
        %v1905 = vpop.f32.mrb[0].mxu0
        %v1906 = vadd.f32 0.0, %v1905
        %v1907 = vpop.f32.mrb[0].mxu0
        %1908 = vdwg.mxu0
        %1909 = vrot.lane.b32.xlu0 %v931, 112
        %v1910 = vpop.permute.xlu0 %1909
        %1911 = vrot.lane.b32.xlu0 %v993, 112
        %v1912 = vpop.permute.xlu0 %1911
        %v1913 = vsel %vm1063, %v1910, 0
        %v1915 = vsel %vm1063, %v1912, 0
        %1917 = vmatprep.subr.mxu0 0.0
        %1918 = vmatpush1.xpose.msra.mxu0 %v1915
        %1919 = vmatprep.subr.mxu0 0.0
        %1920 = vmatpush1.xpose.msra.mxu0 0.0
        %1921 = vmatprep.subr.mxu0 0.0
        %1922 = vmatpush1.xpose.msra.mxu0 0.0
        %1923 = vmatprep.subr.mxu0 0.0
        %1924 = vmatpush1.xpose.msra.mxu0 0.0
        %1925 = vmatprep.subr.mxu0 0.0
        %1926 = vmatpush1.xpose.msra.mxu0 0.0
        %1927 = vmatprep.subr.mxu0 0.0
        %1928 = vmatpush1.xpose.msra.mxu0 0.0
        %1929 = vmatprep.subr.mxu0 0.0
        %1930 = vmatpush1.xpose.msra.mxu0 0.0
        %1931 = vmatprep.subr.mxu0 0.0
        %1932 = vmatpush1.xpose.msra.mxu0 0.0
        %1933 = vmatprep.subr.mxu0 0.0
        %1934 = vmatpush1.xpose.msra.mxu0 0.0
        %1935 = vmatprep.subr.mxu0 0.0
        %1936 = vmatpush1.xpose.msra.mxu0 0.0
        %1937 = vmatprep.subr.mxu0 0.0
        %1938 = vmatpush1.xpose.msra.mxu0 0.0
        %1939 = vmatprep.subr.mxu0 0.0
        %1940 = vmatpush1.xpose.msra.mxu0 0.0
        %1941 = vmatprep.subr.mxu0 0.0
        %1942 = vmatpush1.xpose.msra.mxu0 0.0
        %1943 = vmatprep.subr.mxu0 0.0
        %1944 = vmatpush1.xpose.msra.mxu0 0.0
        %1945 = vmatprep.subr.mxu0 0.0
        %1946 = vmatpush1.xpose.msra.mxu0 0.0
        %1947 = vmatprep.subr.mxu0 0.0
        %1948 = vmatpush1.xpose.msra.mxu0 0.0
        %1949 = vmatprep.subr.mxu0 0.0
        %1950 = vmatpush1.xpose.msra.mxu0 0.0
        %1951 = vmatprep.subr.mxu0 0.0
        %1952 = vmatpush1.xpose.msra.mxu0 0.0
        %1953 = vmatprep.subr.mxu0 0.0
        %1954 = vmatpush1.xpose.msra.mxu0 0.0
        %1955 = vmatprep.subr.mxu0 0.0
        %1956 = vmatpush1.xpose.msra.mxu0 0.0
        %1957 = vmatprep.subr.mxu0 0.0
        %1958 = vmatpush1.xpose.msra.mxu0 0.0
        %1959 = vmatprep.subr.mxu0 0.0
        %1960 = vmatpush1.xpose.msra.mxu0 0.0
        %1961 = vmatprep.subr.mxu0 0.0
        %1962 = vmatpush1.xpose.msra.mxu0 0.0
        %1963 = vmatprep.subr.mxu0 0.0
        %1964 = vmatpush1.xpose.msra.mxu0 0.0
        %1965 = vmatprep.subr.mxu0 0.0
        %1966 = vmatpush1.xpose.msra.mxu0 0.0
        %1967 = vmatprep.subr.mxu0 0.0
        %1968 = vmatpush1.xpose.msra.mxu0 0.0
        %1969 = vmatprep.subr.mxu0 0.0
        %1970 = vmatpush1.xpose.msra.mxu0 0.0
        %1971 = vmatprep.subr.mxu0 0.0
        %1972 = vmatpush1.xpose.msra.mxu0 0.0
        %1973 = vmatprep.subr.mxu0 0.0
        %1974 = vmatpush1.xpose.msra.mxu0 0.0
        %1975 = vmatprep.subr.mxu0 0.0
        %1976 = vmatpush1.xpose.msra.mxu0 0.0
        %1977 = vmatprep.subr.mxu0 0.0
        %1978 = vmatpush1.xpose.msra.mxu0 0.0
        %1979 = vmatprep.subr.mxu0 0.0
        %1980 = vmatpush1.xpose.msra.mxu0 0.0
        %1981 = vmatprep.mubr.f32.mxu0 0.0
        %1982 = vmatmul.mubr.f32.gmra.mrb[0].mxu0 %v1913
        %v1983 = vpop.f32.mrb[0].mxu0
        %v1984 = vadd.f32 0.0, %v1983
        %v1985 = vpop.f32.mrb[0].mxu0
        %1986 = vdwg.mxu0
        %v1987 = vmul.f32 %v1906, 0.35355338
        %v1988 = vmul.f32 %v1984, 0.35355338
        %v1989 = vadd.f32 %v1987, %v1221
        %v1990 = vadd.f32 %v1988, %v1225
        %v1991 = vsel %vm1063, %v1989, -inf
        %1992 = vmax.xlane.f32.xlu0 %v1991
        %v1993 = vpop.xlane.xlu0 %1992
        %v1994 = vsel %vm1063, %v1990, -inf
        %1995 = vmax.xlane.f32.xlu0 %v1994
        %v1996 = vpop.xlane.xlu0 %1995
        %v1997 = vsub.f32 %v1989, %v1993
        %v1998 = vsub.f32 %v1990, %v1996
        %v1999 = vmul.f32 %v1997, 1.442695
        %v2000 = vpow.pop %v1999
        %v2001 = vmul.f32 %v1998, 1.442695
        %v2002 = vpow.pop %v2001
        %v2003 = vsel %vm1063, %v2000, 0.0
        %2004 = vadd.xlane.f32.xlu0 %v2003
        %v2005 = vpop.xlane.xlu0 %2004
        %v2006 = vsel %vm1063, %v2002, 0.0
        %2007 = vadd.xlane.f32.xlu0 %v2006
        %v2008 = vpop.xlane.xlu0 %2007
        %v2009 = vrcp.pop %v2005
        %v2010 = vrcp.pop %v2008
        %v2011 = vmul.f32 %v2000, %v2009
        %v2012 = vmul.f32 %v2002, %v2010
        %2013 = vrot.lane.b32.xlu0 %v1052, 112
        %v2014 = vpop.permute.xlu0 %2013
        %v2017 = vsel %vm1063, %v2011, 0
        %2019 = vmatprep.subr.mxu0 0.0
        %2020 = vmatpush1.msra.mxu0 %v2014
        %2021 = vmatprep.subr.mxu0 0.0
        %2022 = vmatpush1.msra.mxu0 0.0
        %2023 = vmatprep.subr.mxu0 0.0
        %2024 = vmatpush1.msra.mxu0 0.0
        %2025 = vmatprep.subr.mxu0 0.0
        %2026 = vmatpush1.msra.mxu0 0.0
        %2027 = vmatprep.subr.mxu0 0.0
        %2028 = vmatpush1.msra.mxu0 0.0
        %2029 = vmatprep.subr.mxu0 0.0
        %2030 = vmatpush1.msra.mxu0 0.0
        %2031 = vmatprep.subr.mxu0 0.0
        %2032 = vmatpush1.msra.mxu0 0.0
        %2033 = vmatprep.subr.mxu0 0.0
        %2034 = vmatpush1.msra.mxu0 0.0
        %2035 = vmatprep.subr.mxu0 0.0
        %2036 = vmatpush1.msra.mxu0 0.0
        %2037 = vmatprep.subr.mxu0 0.0
        %2038 = vmatpush1.msra.mxu0 0.0
        %2039 = vmatprep.subr.mxu0 0.0
        %2040 = vmatpush1.msra.mxu0 0.0
        %2041 = vmatprep.subr.mxu0 0.0
        %2042 = vmatpush1.msra.mxu0 0.0
        %2043 = vmatprep.subr.mxu0 0.0
        %2044 = vmatpush1.msra.mxu0 0.0
        %2045 = vmatprep.subr.mxu0 0.0
        %2046 = vmatpush1.msra.mxu0 0.0
        %2047 = vmatprep.subr.mxu0 0.0
        %2048 = vmatpush1.msra.mxu0 0.0
        %2049 = vmatprep.subr.mxu0 0.0
        %2050 = vmatpush1.msra.mxu0 0.0
        %2051 = vmatprep.subr.mxu0 0.0
        %2052 = vmatpush1.msra.mxu0 0.0
        %2053 = vmatprep.subr.mxu0 0.0
        %2054 = vmatpush1.msra.mxu0 0.0
        %2055 = vmatprep.subr.mxu0 0.0
        %2056 = vmatpush1.msra.mxu0 0.0
        %2057 = vmatprep.subr.mxu0 0.0
        %2058 = vmatpush1.msra.mxu0 0.0
        %2059 = vmatprep.subr.mxu0 0.0
        %2060 = vmatpush1.msra.mxu0 0.0
        %2061 = vmatprep.subr.mxu0 0.0
        %2062 = vmatpush1.msra.mxu0 0.0
        %2063 = vmatprep.subr.mxu0 0.0
        %2064 = vmatpush1.msra.mxu0 0.0
        %2065 = vmatprep.subr.mxu0 0.0
        %2066 = vmatpush1.msra.mxu0 0.0
        %2067 = vmatprep.subr.mxu0 0.0
        %2068 = vmatpush1.msra.mxu0 0.0
        %2069 = vmatprep.subr.mxu0 0.0
        %2070 = vmatpush1.msra.mxu0 0.0
        %2071 = vmatprep.subr.mxu0 0.0
        %2072 = vmatpush1.msra.mxu0 0.0
        %2073 = vmatprep.subr.mxu0 0.0
        %2074 = vmatpush1.msra.mxu0 0.0
        %2075 = vmatprep.subr.mxu0 0.0
        %2076 = vmatpush1.msra.mxu0 0.0
        %2077 = vmatprep.subr.mxu0 0.0
        %2078 = vmatpush1.msra.mxu0 0.0
        %2079 = vmatprep.subr.mxu0 0.0
        %2080 = vmatpush1.msra.mxu0 0.0
        %2081 = vmatprep.subr.mxu0 0.0
        %2082 = vmatpush1.msra.mxu0 0.0
        %2083 = vmatprep.mubr.f32.mxu0 0.0
        %2084 = vmatmul.mubr.f32.gmra.mrb[0].mxu0 %v2017
        %v2085 = vpop.f32.mrb[0].mxu0
        %v2086 = vadd.f32 0.0, %v2085
        %v2087 = vpop.f32.mrb[0].mxu0
        %2088 = vdwg.mxu0
        %2089 = vrot.lane.b32.xlu0 %v1055, 112
        %v2090 = vpop.permute.xlu0 %2089
        %v2093 = vsel %vm1063, %v2012, 0
        %2095 = vmatprep.subr.mxu0 0.0
        %2096 = vmatpush1.msra.mxu0 %v2090
        %2097 = vmatprep.subr.mxu0 0.0
        %2098 = vmatpush1.msra.mxu0 0.0
        %2099 = vmatprep.subr.mxu0 0.0
        %2100 = vmatpush1.msra.mxu0 0.0
        %2101 = vmatprep.subr.mxu0 0.0
        %2102 = vmatpush1.msra.mxu0 0.0
        %2103 = vmatprep.subr.mxu0 0.0
        %2104 = vmatpush1.msra.mxu0 0.0
        %2105 = vmatprep.subr.mxu0 0.0
        %2106 = vmatpush1.msra.mxu0 0.0
        %2107 = vmatprep.subr.mxu0 0.0
        %2108 = vmatpush1.msra.mxu0 0.0
        %2109 = vmatprep.subr.mxu0 0.0
        %2110 = vmatpush1.msra.mxu0 0.0
        %2111 = vmatprep.subr.mxu0 0.0
        %2112 = vmatpush1.msra.mxu0 0.0
        %2113 = vmatprep.subr.mxu0 0.0
        %2114 = vmatpush1.msra.mxu0 0.0
        %2115 = vmatprep.subr.mxu0 0.0
        %2116 = vmatpush1.msra.mxu0 0.0
        %2117 = vmatprep.subr.mxu0 0.0
        %2118 = vmatpush1.msra.mxu0 0.0
        %2119 = vmatprep.subr.mxu0 0.0
        %2120 = vmatpush1.msra.mxu0 0.0
        %2121 = vmatprep.subr.mxu0 0.0
        %2122 = vmatpush1.msra.mxu0 0.0
        %2123 = vmatprep.subr.mxu0 0.0
        %2124 = vmatpush1.msra.mxu0 0.0
        %2125 = vmatprep.subr.mxu0 0.0
        %2126 = vmatpush1.msra.mxu0 0.0
        %2127 = vmatprep.subr.mxu0 0.0
        %2128 = vmatpush1.msra.mxu0 0.0
        %2129 = vmatprep.subr.mxu0 0.0
        %2130 = vmatpush1.msra.mxu0 0.0
        %2131 = vmatprep.subr.mxu0 0.0
        %2132 = vmatpush1.msra.mxu0 0.0
        %2133 = vmatprep.subr.mxu0 0.0
        %2134 = vmatpush1.msra.mxu0 0.0
        %2135 = vmatprep.subr.mxu0 0.0
        %2136 = vmatpush1.msra.mxu0 0.0
        %2137 = vmatprep.subr.mxu0 0.0
        %2138 = vmatpush1.msra.mxu0 0.0
        %2139 = vmatprep.subr.mxu0 0.0
        %2140 = vmatpush1.msra.mxu0 0.0
        %2141 = vmatprep.subr.mxu0 0.0
        %2142 = vmatpush1.msra.mxu0 0.0
        %2143 = vmatprep.subr.mxu0 0.0
        %2144 = vmatpush1.msra.mxu0 0.0
        %2145 = vmatprep.subr.mxu0 0.0
        %2146 = vmatpush1.msra.mxu0 0.0
        %2147 = vmatprep.subr.mxu0 0.0
        %2148 = vmatpush1.msra.mxu0 0.0
        %2149 = vmatprep.subr.mxu0 0.0
        %2150 = vmatpush1.msra.mxu0 0.0
        %2151 = vmatprep.subr.mxu0 0.0
        %2152 = vmatpush1.msra.mxu0 0.0
        %2153 = vmatprep.subr.mxu0 0.0
        %2154 = vmatpush1.msra.mxu0 0.0
        %2155 = vmatprep.subr.mxu0 0.0
        %2156 = vmatpush1.msra.mxu0 0.0
        %2157 = vmatprep.subr.mxu0 0.0
        %2158 = vmatpush1.msra.mxu0 0.0
        %2159 = vmatprep.mubr.f32.mxu0 0.0
        %2160 = vmatmul.mubr.f32.gmra.mrb[0].mxu0 %v2093
        %v2161 = vpop.f32.mrb[0].mxu0
        %v2162 = vadd.f32 0.0, %v2161
        %v2163 = vpop.f32.mrb[0].mxu0
        %2164 = vdwg.mxu0
        %v2165 = vpack.c.bf16 %v2162, %v2086
        %v2167 = vsel %vm1063, %v2165, 0
        %v2170 = vsel %vm1739, %v1061, 0
        %2172 = vmatprep.subr.bf16.mxu0 0
        %2173 = vmatpush1.bf16.msra.mxu0 %v2170
        %2174 = vmatprep.subr.bf16.mxu0 0
        %2175 = vmatpush1.bf16.msra.mxu0 0
        %2176 = vmatprep.subr.bf16.mxu0 0
        %2177 = vmatpush1.bf16.msra.mxu0 0
        %2178 = vmatprep.subr.bf16.mxu0 0
        %2179 = vmatpush1.bf16.msra.mxu0 0
        %2180 = vmatprep.subr.bf16.mxu0 0
        %2181 = vmatpush1.bf16.msra.mxu0 0
        %2182 = vmatprep.subr.bf16.mxu0 0
        %2183 = vmatpush1.bf16.msra.mxu0 0
        %2184 = vmatprep.subr.bf16.mxu0 0
        %2185 = vmatpush1.bf16.msra.mxu0 0
        %2186 = vmatprep.subr.bf16.mxu0 0
        %2187 = vmatpush1.bf16.msra.mxu0 0
        %2188 = vmatprep.subr.bf16.mxu0 0
        %2189 = vmatpush1.bf16.msra.mxu0 0
        %2190 = vmatprep.subr.bf16.mxu0 0
        %2191 = vmatpush1.bf16.msra.mxu0 0
        %2192 = vmatprep.subr.bf16.mxu0 0
        %2193 = vmatpush1.bf16.msra.mxu0 0
        %2194 = vmatprep.subr.bf16.mxu0 0
        %2195 = vmatpush1.bf16.msra.mxu0 0
        %2196 = vmatprep.subr.bf16.mxu0 0
        %2197 = vmatpush1.bf16.msra.mxu0 0
        %2198 = vmatprep.subr.bf16.mxu0 0
        %2199 = vmatpush1.bf16.msra.mxu0 0
        %2200 = vmatprep.subr.bf16.mxu0 0
        %2201 = vmatpush1.bf16.msra.mxu0 0
        %2202 = vmatprep.subr.bf16.mxu0 0
        %2203 = vmatpush1.bf16.msra.mxu0 0
        %2204 = vmatprep.mubr.bf16.mxu0 0
        %2205 = vmatmul.mubr.bf16.gmra.mrb[0].mxu0 %v2167
        %v2206 = vpop.f32.mrb[0].mxu0
        %v2207 = vadd.f32 0.0, %v2206
        %v2208 = vpop.f32.mrb[0].mxu0
        %v2209 = vpop.f32.mrb[0].mxu0
        %v2210 = vadd.f32 0.0, %v2209
        %v2211 = vpop.f32.mrb[0].mxu0
        %2212 = vdwg.mxu0
        %v2213 = vadd.f32 %v1825, %v2207
        %v2214 = vadd.f32 %v1828, %v2210
        %2215 = vrot.lane.b32.xlu0 %v928, 104
        %v2216 = vpop.permute.xlu0 %2215
        %2217 = vrot.lane.b32.xlu0 %v990, 104
        %v2218 = vpop.permute.xlu0 %2217
        %v2219 = vsel %vm1063, %v2216, 0
        %v2221 = vsel %vm1063, %v2218, 0
        %2223 = vmatprep.subr.mxu0 0.0
        %2224 = vmatpush1.xpose.msra.mxu0 %v2221
        %2225 = vmatprep.subr.mxu0 0.0
        %2226 = vmatpush1.xpose.msra.mxu0 0.0
        %2227 = vmatprep.subr.mxu0 0.0
        %2228 = vmatpush1.xpose.msra.mxu0 0.0
        %2229 = vmatprep.subr.mxu0 0.0
        %2230 = vmatpush1.xpose.msra.mxu0 0.0
        %2231 = vmatprep.subr.mxu0 0.0
        %2232 = vmatpush1.xpose.msra.mxu0 0.0
        %2233 = vmatprep.subr.mxu0 0.0
        %2234 = vmatpush1.xpose.msra.mxu0 0.0
        %2235 = vmatprep.subr.mxu0 0.0
        %2236 = vmatpush1.xpose.msra.mxu0 0.0
        %2237 = vmatprep.subr.mxu0 0.0
        %2238 = vmatpush1.xpose.msra.mxu0 0.0
        %2239 = vmatprep.subr.mxu0 0.0
        %2240 = vmatpush1.xpose.msra.mxu0 0.0
        %2241 = vmatprep.subr.mxu0 0.0
        %2242 = vmatpush1.xpose.msra.mxu0 0.0
        %2243 = vmatprep.subr.mxu0 0.0
        %2244 = vmatpush1.xpose.msra.mxu0 0.0
        %2245 = vmatprep.subr.mxu0 0.0
        %2246 = vmatpush1.xpose.msra.mxu0 0.0
        %2247 = vmatprep.subr.mxu0 0.0
        %2248 = vmatpush1.xpose.msra.mxu0 0.0
        %2249 = vmatprep.subr.mxu0 0.0
        %2250 = vmatpush1.xpose.msra.mxu0 0.0
        %2251 = vmatprep.subr.mxu0 0.0
        %2252 = vmatpush1.xpose.msra.mxu0 0.0
        %2253 = vmatprep.subr.mxu0 0.0
        %2254 = vmatpush1.xpose.msra.mxu0 0.0
        %2255 = vmatprep.subr.mxu0 0.0
        %2256 = vmatpush1.xpose.msra.mxu0 0.0
        %2257 = vmatprep.subr.mxu0 0.0
        %2258 = vmatpush1.xpose.msra.mxu0 0.0
        %2259 = vmatprep.subr.mxu0 0.0
        %2260 = vmatpush1.xpose.msra.mxu0 0.0
        %2261 = vmatprep.subr.mxu0 0.0
        %2262 = vmatpush1.xpose.msra.mxu0 0.0
        %2263 = vmatprep.subr.mxu0 0.0
        %2264 = vmatpush1.xpose.msra.mxu0 0.0
        %2265 = vmatprep.subr.mxu0 0.0
        %2266 = vmatpush1.xpose.msra.mxu0 0.0
        %2267 = vmatprep.subr.mxu0 0.0
        %2268 = vmatpush1.xpose.msra.mxu0 0.0
        %2269 = vmatprep.subr.mxu0 0.0
        %2270 = vmatpush1.xpose.msra.mxu0 0.0
        %2271 = vmatprep.subr.mxu0 0.0
        %2272 = vmatpush1.xpose.msra.mxu0 0.0
        %2273 = vmatprep.subr.mxu0 0.0
        %2274 = vmatpush1.xpose.msra.mxu0 0.0
        %2275 = vmatprep.subr.mxu0 0.0
        %2276 = vmatpush1.xpose.msra.mxu0 0.0
        %2277 = vmatprep.subr.mxu0 0.0
        %2278 = vmatpush1.xpose.msra.mxu0 0.0
        %2279 = vmatprep.subr.mxu0 0.0
        %2280 = vmatpush1.xpose.msra.mxu0 0.0
        %2281 = vmatprep.subr.mxu0 0.0
        %2282 = vmatpush1.xpose.msra.mxu0 0.0
        %2283 = vmatprep.subr.mxu0 0.0
        %2284 = vmatpush1.xpose.msra.mxu0 0.0
        %2285 = vmatprep.subr.mxu0 0.0
        %2286 = vmatpush1.xpose.msra.mxu0 0.0
        %2287 = vmatprep.mubr.f32.mxu0 0.0
        %2288 = vmatmul.mubr.f32.gmra.mrb[0].mxu0 %v2219
        %v2289 = vpop.f32.mrb[0].mxu0
        %v2290 = vadd.f32 0.0, %v2289
        %v2291 = vpop.f32.mrb[0].mxu0
        %2292 = vdwg.mxu0
        %2293 = vrot.lane.b32.xlu0 %v931, 104
        %v2294 = vpop.permute.xlu0 %2293
        %2295 = vrot.lane.b32.xlu0 %v993, 104
        %v2296 = vpop.permute.xlu0 %2295
        %v2297 = vsel %vm1063, %v2294, 0
        %v2299 = vsel %vm1063, %v2296, 0
        %2301 = vmatprep.subr.mxu0 0.0
        %2302 = vmatpush1.xpose.msra.mxu0 %v2299
        %2303 = vmatprep.subr.mxu0 0.0
        %2304 = vmatpush1.xpose.msra.mxu0 0.0
        %2305 = vmatprep.subr.mxu0 0.0
        %2306 = vmatpush1.xpose.msra.mxu0 0.0
        %2307 = vmatprep.subr.mxu0 0.0
        %2308 = vmatpush1.xpose.msra.mxu0 0.0
        %2309 = vmatprep.subr.mxu0 0.0
        %2310 = vmatpush1.xpose.msra.mxu0 0.0
        %2311 = vmatprep.subr.mxu0 0.0
        %2312 = vmatpush1.xpose.msra.mxu0 0.0
        %2313 = vmatprep.subr.mxu0 0.0
        %2314 = vmatpush1.xpose.msra.mxu0 0.0
        %2315 = vmatprep.subr.mxu0 0.0
        %2316 = vmatpush1.xpose.msra.mxu0 0.0
        %2317 = vmatprep.subr.mxu0 0.0
        %2318 = vmatpush1.xpose.msra.mxu0 0.0
        %2319 = vmatprep.subr.mxu0 0.0
        %2320 = vmatpush1.xpose.msra.mxu0 0.0
        %2321 = vmatprep.subr.mxu0 0.0
        %2322 = vmatpush1.xpose.msra.mxu0 0.0
        %2323 = vmatprep.subr.mxu0 0.0
        %2324 = vmatpush1.xpose.msra.mxu0 0.0
        %2325 = vmatprep.subr.mxu0 0.0
        %2326 = vmatpush1.xpose.msra.mxu0 0.0
        %2327 = vmatprep.subr.mxu0 0.0
        %2328 = vmatpush1.xpose.msra.mxu0 0.0
        %2329 = vmatprep.subr.mxu0 0.0
        %2330 = vmatpush1.xpose.msra.mxu0 0.0
        %2331 = vmatprep.subr.mxu0 0.0
        %2332 = vmatpush1.xpose.msra.mxu0 0.0
        %2333 = vmatprep.subr.mxu0 0.0
        %2334 = vmatpush1.xpose.msra.mxu0 0.0
        %2335 = vmatprep.subr.mxu0 0.0
        %2336 = vmatpush1.xpose.msra.mxu0 0.0
        %2337 = vmatprep.subr.mxu0 0.0
        %2338 = vmatpush1.xpose.msra.mxu0 0.0
        %2339 = vmatprep.subr.mxu0 0.0
        %2340 = vmatpush1.xpose.msra.mxu0 0.0
        %2341 = vmatprep.subr.mxu0 0.0
        %2342 = vmatpush1.xpose.msra.mxu0 0.0
        %2343 = vmatprep.subr.mxu0 0.0
        %2344 = vmatpush1.xpose.msra.mxu0 0.0
        %2345 = vmatprep.subr.mxu0 0.0
        %2346 = vmatpush1.xpose.msra.mxu0 0.0
        %2347 = vmatprep.subr.mxu0 0.0
        %2348 = vmatpush1.xpose.msra.mxu0 0.0
        %2349 = vmatprep.subr.mxu0 0.0
        %2350 = vmatpush1.xpose.msra.mxu0 0.0
        %2351 = vmatprep.subr.mxu0 0.0
        %2352 = vmatpush1.xpose.msra.mxu0 0.0
        %2353 = vmatprep.subr.mxu0 0.0
        %2354 = vmatpush1.xpose.msra.mxu0 0.0
        %2355 = vmatprep.subr.mxu0 0.0
        %2356 = vmatpush1.xpose.msra.mxu0 0.0
        %2357 = vmatprep.subr.mxu0 0.0
        %2358 = vmatpush1.xpose.msra.mxu0 0.0
        %2359 = vmatprep.subr.mxu0 0.0
        %2360 = vmatpush1.xpose.msra.mxu0 0.0
        %2361 = vmatprep.subr.mxu0 0.0
        %2362 = vmatpush1.xpose.msra.mxu0 0.0
        %2363 = vmatprep.subr.mxu0 0.0
        %2364 = vmatpush1.xpose.msra.mxu0 0.0
        %2365 = vmatprep.mubr.f32.mxu0 0.0
        %2366 = vmatmul.mubr.f32.gmra.mrb[0].mxu0 %v2297
        %v2367 = vpop.f32.mrb[0].mxu0
        %v2368 = vadd.f32 0.0, %v2367
        %v2369 = vpop.f32.mrb[0].mxu0
        %2370 = vdwg.mxu0
        %v2371 = vmul.f32 %v2290, 0.35355338
        %v2372 = vmul.f32 %v2368, 0.35355338
        %v2373 = vadd.f32 %v2371, %v1221
        %v2374 = vadd.f32 %v2372, %v1225
        %v2375 = vsel %vm1063, %v2373, -inf
        %2376 = vmax.xlane.f32.xlu0 %v2375
        %v2377 = vpop.xlane.xlu0 %2376
        %v2378 = vsel %vm1063, %v2374, -inf
        %2379 = vmax.xlane.f32.xlu0 %v2378
        %v2380 = vpop.xlane.xlu0 %2379
        %v2381 = vsub.f32 %v2373, %v2377
        %v2382 = vsub.f32 %v2374, %v2380
        %v2383 = vmul.f32 %v2381, 1.442695
        %v2384 = vpow.pop %v2383
        %v2385 = vmul.f32 %v2382, 1.442695
        %v2386 = vpow.pop %v2385
        %v2387 = vsel %vm1063, %v2384, 0.0
        %2388 = vadd.xlane.f32.xlu0 %v2387
        %v2389 = vpop.xlane.xlu0 %2388
        %v2390 = vsel %vm1063, %v2386, 0.0
        %2391 = vadd.xlane.f32.xlu0 %v2390
        %v2392 = vpop.xlane.xlu0 %2391
        %v2393 = vrcp.pop %v2389
        %v2394 = vrcp.pop %v2392
        %v2395 = vmul.f32 %v2384, %v2393
        %v2396 = vmul.f32 %v2386, %v2394
        %2397 = vrot.lane.b32.xlu0 %v1052, 104
        %v2398 = vpop.permute.xlu0 %2397
        %v2401 = vsel %vm1063, %v2395, 0
        %2403 = vmatprep.subr.mxu0 0.0
        %2404 = vmatpush1.msra.mxu0 %v2398
        %2405 = vmatprep.subr.mxu0 0.0
        %2406 = vmatpush1.msra.mxu0 0.0
        %2407 = vmatprep.subr.mxu0 0.0
        %2408 = vmatpush1.msra.mxu0 0.0
        %2409 = vmatprep.subr.mxu0 0.0
        %2410 = vmatpush1.msra.mxu0 0.0
        %2411 = vmatprep.subr.mxu0 0.0
        %2412 = vmatpush1.msra.mxu0 0.0
        %2413 = vmatprep.subr.mxu0 0.0
        %2414 = vmatpush1.msra.mxu0 0.0
        %2415 = vmatprep.subr.mxu0 0.0
        %2416 = vmatpush1.msra.mxu0 0.0
        %2417 = vmatprep.subr.mxu0 0.0
        %2418 = vmatpush1.msra.mxu0 0.0
        %2419 = vmatprep.subr.mxu0 0.0
        %2420 = vmatpush1.msra.mxu0 0.0
        %2421 = vmatprep.subr.mxu0 0.0
        %2422 = vmatpush1.msra.mxu0 0.0
        %2423 = vmatprep.subr.mxu0 0.0
        %2424 = vmatpush1.msra.mxu0 0.0
        %2425 = vmatprep.subr.mxu0 0.0
        %2426 = vmatpush1.msra.mxu0 0.0
        %2427 = vmatprep.subr.mxu0 0.0
        %2428 = vmatpush1.msra.mxu0 0.0
        %2429 = vmatprep.subr.mxu0 0.0
        %2430 = vmatpush1.msra.mxu0 0.0
        %2431 = vmatprep.subr.mxu0 0.0
        %2432 = vmatpush1.msra.mxu0 0.0
        %2433 = vmatprep.subr.mxu0 0.0
        %2434 = vmatpush1.msra.mxu0 0.0
        %2435 = vmatprep.subr.mxu0 0.0
        %2436 = vmatpush1.msra.mxu0 0.0
        %2437 = vmatprep.subr.mxu0 0.0
        %2438 = vmatpush1.msra.mxu0 0.0
        %2439 = vmatprep.subr.mxu0 0.0
        %2440 = vmatpush1.msra.mxu0 0.0
        %2441 = vmatprep.subr.mxu0 0.0
        %2442 = vmatpush1.msra.mxu0 0.0
        %2443 = vmatprep.subr.mxu0 0.0
        %2444 = vmatpush1.msra.mxu0 0.0
        %2445 = vmatprep.subr.mxu0 0.0
        %2446 = vmatpush1.msra.mxu0 0.0
        %2447 = vmatprep.subr.mxu0 0.0
        %2448 = vmatpush1.msra.mxu0 0.0
        %2449 = vmatprep.subr.mxu0 0.0
        %2450 = vmatpush1.msra.mxu0 0.0
        %2451 = vmatprep.subr.mxu0 0.0
        %2452 = vmatpush1.msra.mxu0 0.0
        %2453 = vmatprep.subr.mxu0 0.0
        %2454 = vmatpush1.msra.mxu0 0.0
        %2455 = vmatprep.subr.mxu0 0.0
        %2456 = vmatpush1.msra.mxu0 0.0
        %2457 = vmatprep.subr.mxu0 0.0
        %2458 = vmatpush1.msra.mxu0 0.0
        %2459 = vmatprep.subr.mxu0 0.0
        %2460 = vmatpush1.msra.mxu0 0.0
        %2461 = vmatprep.subr.mxu0 0.0
        %2462 = vmatpush1.msra.mxu0 0.0
        %2463 = vmatprep.subr.mxu0 0.0
        %2464 = vmatpush1.msra.mxu0 0.0
        %2465 = vmatprep.subr.mxu0 0.0
        %2466 = vmatpush1.msra.mxu0 0.0
        %2467 = vmatprep.mubr.f32.mxu0 0.0
        %2468 = vmatmul.mubr.f32.gmra.mrb[0].mxu0 %v2401
        %v2469 = vpop.f32.mrb[0].mxu0
        %v2470 = vadd.f32 0.0, %v2469
        %v2471 = vpop.f32.mrb[0].mxu0
        %2472 = vdwg.mxu0
        %2473 = vrot.lane.b32.xlu0 %v1055, 104
        %v2474 = vpop.permute.xlu0 %2473
        %v2477 = vsel %vm1063, %v2396, 0
        %2479 = vmatprep.subr.mxu0 0.0
        %2480 = vmatpush1.msra.mxu0 %v2474
        %2481 = vmatprep.subr.mxu0 0.0
        %2482 = vmatpush1.msra.mxu0 0.0
        %2483 = vmatprep.subr.mxu0 0.0
        %2484 = vmatpush1.msra.mxu0 0.0
        %2485 = vmatprep.subr.mxu0 0.0
        %2486 = vmatpush1.msra.mxu0 0.0
        %2487 = vmatprep.subr.mxu0 0.0
        %2488 = vmatpush1.msra.mxu0 0.0
        %2489 = vmatprep.subr.mxu0 0.0
        %2490 = vmatpush1.msra.mxu0 0.0
        %2491 = vmatprep.subr.mxu0 0.0
        %2492 = vmatpush1.msra.mxu0 0.0
        %2493 = vmatprep.subr.mxu0 0.0
        %2494 = vmatpush1.msra.mxu0 0.0
        %2495 = vmatprep.subr.mxu0 0.0
        %2496 = vmatpush1.msra.mxu0 0.0
        %2497 = vmatprep.subr.mxu0 0.0
        %2498 = vmatpush1.msra.mxu0 0.0
        %2499 = vmatprep.subr.mxu0 0.0
        %2500 = vmatpush1.msra.mxu0 0.0
        %2501 = vmatprep.subr.mxu0 0.0
        %2502 = vmatpush1.msra.mxu0 0.0
        %2503 = vmatprep.subr.mxu0 0.0
        %2504 = vmatpush1.msra.mxu0 0.0
        %2505 = vmatprep.subr.mxu0 0.0
        %2506 = vmatpush1.msra.mxu0 0.0
        %2507 = vmatprep.subr.mxu0 0.0
        %2508 = vmatpush1.msra.mxu0 0.0
        %2509 = vmatprep.subr.mxu0 0.0
        %2510 = vmatpush1.msra.mxu0 0.0
        %2511 = vmatprep.subr.mxu0 0.0
        %2512 = vmatpush1.msra.mxu0 0.0
        %2513 = vmatprep.subr.mxu0 0.0
        %2514 = vmatpush1.msra.mxu0 0.0
        %2515 = vmatprep.subr.mxu0 0.0
        %2516 = vmatpush1.msra.mxu0 0.0
        %2517 = vmatprep.subr.mxu0 0.0
        %2518 = vmatpush1.msra.mxu0 0.0
        %2519 = vmatprep.subr.mxu0 0.0
        %2520 = vmatpush1.msra.mxu0 0.0
        %2521 = vmatprep.subr.mxu0 0.0
        %2522 = vmatpush1.msra.mxu0 0.0
        %2523 = vmatprep.subr.mxu0 0.0
        %2524 = vmatpush1.msra.mxu0 0.0
        %2525 = vmatprep.subr.mxu0 0.0
        %2526 = vmatpush1.msra.mxu0 0.0
        %2527 = vmatprep.subr.mxu0 0.0
        %2528 = vmatpush1.msra.mxu0 0.0
        %2529 = vmatprep.subr.mxu0 0.0
        %2530 = vmatpush1.msra.mxu0 0.0
        %2531 = vmatprep.subr.mxu0 0.0
        %2532 = vmatpush1.msra.mxu0 0.0
        %2533 = vmatprep.subr.mxu0 0.0
        %2534 = vmatpush1.msra.mxu0 0.0
        %2535 = vmatprep.subr.mxu0 0.0
        %2536 = vmatpush1.msra.mxu0 0.0
        %2537 = vmatprep.subr.mxu0 0.0
        %2538 = vmatpush1.msra.mxu0 0.0
        %2539 = vmatprep.subr.mxu0 0.0
        %2540 = vmatpush1.msra.mxu0 0.0
        %2541 = vmatprep.subr.mxu0 0.0
        %2542 = vmatpush1.msra.mxu0 0.0
        %2543 = vmatprep.mubr.f32.mxu0 0.0
        %2544 = vmatmul.mubr.f32.gmra.mrb[0].mxu0 %v2477
        %v2545 = vpop.f32.mrb[0].mxu0
        %v2546 = vadd.f32 0.0, %v2545
        %v2547 = vpop.f32.mrb[0].mxu0
        %2548 = vdwg.mxu0
        %v2549 = vpack.c.bf16 %v2546, %v2470
        %v2551 = vsel %vm1063, %v2549, 0
        %v2554 = vsel %vm1739, %v1062, 0
        %2556 = vmatprep.subr.bf16.mxu0 0
        %2557 = vmatpush1.bf16.msra.mxu0 %v2554
        %2558 = vmatprep.subr.bf16.mxu0 0
        %2559 = vmatpush1.bf16.msra.mxu0 0
        %2560 = vmatprep.subr.bf16.mxu0 0
        %2561 = vmatpush1.bf16.msra.mxu0 0
        %2562 = vmatprep.subr.bf16.mxu0 0
        %2563 = vmatpush1.bf16.msra.mxu0 0
        %2564 = vmatprep.subr.bf16.mxu0 0
        %2565 = vmatpush1.bf16.msra.mxu0 0
        %2566 = vmatprep.subr.bf16.mxu0 0
        %2567 = vmatpush1.bf16.msra.mxu0 0
        %2568 = vmatprep.subr.bf16.mxu0 0
        %2569 = vmatpush1.bf16.msra.mxu0 0
        %2570 = vmatprep.subr.bf16.mxu0 0
        %2571 = vmatpush1.bf16.msra.mxu0 0
        %2572 = vmatprep.subr.bf16.mxu0 0
        %2573 = vmatpush1.bf16.msra.mxu0 0
        %2574 = vmatprep.subr.bf16.mxu0 0
        %2575 = vmatpush1.bf16.msra.mxu0 0
        %2576 = vmatprep.subr.bf16.mxu0 0
        %2577 = vmatpush1.bf16.msra.mxu0 0
        %2578 = vmatprep.subr.bf16.mxu0 0
        %2579 = vmatpush1.bf16.msra.mxu0 0
        %2580 = vmatprep.subr.bf16.mxu0 0
        %2581 = vmatpush1.bf16.msra.mxu0 0
        %2582 = vmatprep.subr.bf16.mxu0 0
        %2583 = vmatpush1.bf16.msra.mxu0 0
        %2584 = vmatprep.subr.bf16.mxu0 0
        %2585 = vmatpush1.bf16.msra.mxu0 0
        %2586 = vmatprep.subr.bf16.mxu0 0
        %2587 = vmatpush1.bf16.msra.mxu0 0
        %2588 = vmatprep.mubr.bf16.mxu0 0
        %2589 = vmatmul.mubr.bf16.gmra.mrb[0].mxu0 %v2551
        %v2590 = vpop.f32.mrb[0].mxu0
        %v2591 = vadd.f32 0.0, %v2590
        %v2592 = vpop.f32.mrb[0].mxu0
        %v2593 = vpop.f32.mrb[0].mxu0
        %v2594 = vadd.f32 0.0, %v2593
        %v2595 = vpop.f32.mrb[0].mxu0
        %2596 = vdwg.mxu0
        %v2597 = vadd.f32 %v2213, %v2591
        %v2598 = vadd.f32 %v2214, %v2594
        %v2599 = vlaneseq
        %v2600 = vshrl.u32 %v2599, 7
        %v2601 = vsub.s32 3, %v2600
        %v2602 = vrot.slane %v842, %v2601
        %v2603 = vadd.f32 %v2597, %v2602
        %v2604 = vadd.f32 %v2598, %v2602
        %v2605 = vadd.f32 %v838, %v2603
        %v2606 = vadd.f32 %v839, %v2604
        %v2607 = vsel %vm889, %v2605, 0.0
        %2608 = vadd.xlane.f32.xlu0 %v2607
        %v2609 = vpop.xlane.xlu0 %2608
        %v2610 = vsel %vm889, %v2606, 0.0
        %2611 = vadd.xlane.f32.xlu0 %v2610
        %v2612 = vpop.xlane.xlu0 %2611
        %v2613 = vrcp.pop 32.0
        %v2614 = vmul.f32 %v2609, %v2613
        %v2615 = vmul.f32 %v2612, %v2613
        %v2616 = vsub.f32 %v2605, %v2614
        %v2617 = vsub.f32 %v2606, %v2615
        %v2618 = vmul.f32 %v2616, %v2616
        %v2619 = vmul.f32 %v2617, %v2617
        %v2620 = vsel %vm889, %v2618, 0.0
        %2621 = vadd.xlane.f32.xlu0 %v2620
        %v2622 = vpop.xlane.xlu0 %2621
        %v2623 = vsel %vm889, %v2619, 0.0
        %2624 = vadd.xlane.f32.xlu0 %v2623
        %v2625 = vpop.xlane.xlu0 %2624
        %v2626 = vmul.f32 %v2622, %v2613
        %v2627 = vmul.f32 %v2625, %v2613
        %v2628 = vadd.f32 %v2626, 1e-05
        %v2629 = vadd.f32 %v2627, 1e-05
        %v2630 = vrsqrt.pop %v2628
        %v2631 = vrsqrt.pop %v2629
        %v2632 = vmul.f32 %v2616, %v2630
        %v2633 = vmul.f32 %v2617, %v2631
        %v2634 = vlaneseq
        %v2635 = vshrl.u32 %v2634, 7
        %v2636 = vsub.s32 0, %v2635
        %v2637 = vrot.slane %v840, %v2636
        %v2638 = vmul.f32 %v2632, %v2637
        %v2639 = vmul.f32 %v2633, %v2637
        %v2640 = vlaneseq
        %v2641 = vshrl.u32 %v2640, 7
        %v2642 = vsub.s32 0, %v2641
        %v2643 = vrot.slane %v841, %v2642
        %v2644 = vadd.f32 %v2638, %v2643
        %v2645 = vadd.f32 %v2639, %v2643
        %v2646 = vld [vmem:[%s606] sm:$0x3]
        %v2649 = vunpack.c.l.s4 1966171168
        %v2650 = vunpack.c.0.s8 %v2649
        %v2651 = vlaneseq
        %v2652 = vshrl.u32 %v2651, 7
        %v2653 = vsub.s32 %v2650, %v2652
        %v2654 = vrot.slane %v2646, %v2653
        %v2655 = vcombine.high %v2654, %v2654
        %v2657 = vunpack.c.l.s4 1966171168
        %v2658 = vunpack.c.0.s8 %v2657
        %v2659 = vlaneseq
        %v2660 = vshrl.u32 %v2659, 7
        %v2661 = vsub.s32 %v2658, %v2660
        %v2662 = vrot.slane %v2654, %v2661
        %v2664 = vunpack.c.l.s4 1966171168
        %v2665 = vunpack.c.0.s8 %v2664
        %v2666 = vlaneseq
        %v2667 = vshrl.u32 %v2666, 7
        %v2668 = vsub.s32 %v2665, %v2667
        %v2669 = vrot.slane %v2655, %v2668
        %v2670 = vlaneseq
        %v2671 = vshrl.u32 %v2670, 7
        %v2672 = vsub.s32 0, %v2671
        %v2673 = vrot.slane %v2662, %v2672
        %v2674 = vlaneseq
        %v2675 = vshrl.u32 %v2674, 7
        %v2676 = vsub.s32 0, %v2675
        %v2677 = vrot.slane %v2669, %v2676
        %v2680 = vadd.f32 %v2644, %v2673
        %v2681 = vadd.f32 %v2645, %v2677
        %v2682 = vsel %vm889, %v2680, 0.0
        %2683 = vadd.xlane.f32.xlu0 %v2682
        %v2684 = vpop.xlane.xlu0 %2683
        %v2685 = vsel %vm889, %v2681, 0.0
        %2686 = vadd.xlane.f32.xlu0 %v2685
        %v2687 = vpop.xlane.xlu0 %2686
        %v2688 = vmul.f32 %v2684, %v2613
        %v2689 = vmul.f32 %v2687, %v2613
        %v2690 = vsub.f32 %v2680, %v2688
        %v2691 = vsub.f32 %v2681, %v2689
        %v2692 = vmul.f32 %v2690, %v2690
        %v2693 = vmul.f32 %v2691, %v2691
        %v2694 = vsel %vm889, %v2692, 0.0
        %2695 = vadd.xlane.f32.xlu0 %v2694
        %v2696 = vpop.xlane.xlu0 %2695
        %v2697 = vsel %vm889, %v2693, 0.0
        %2698 = vadd.xlane.f32.xlu0 %v2697
        %v2699 = vpop.xlane.xlu0 %2698
        %v2700 = vmul.f32 %v2696, %v2613
        %v2701 = vmul.f32 %v2699, %v2613
        %v2702 = vadd.f32 %v2700, 1e-05
        %v2703 = vadd.f32 %v2701, 1e-05
        %v2704 = vrsqrt.pop %v2702
        %v2705 = vrsqrt.pop %v2703
        %v2706 = vmul.f32 %v2690, %v2704
        %v2707 = vmul.f32 %v2691, %v2705
        %v2708 = vlaneseq
        %v2709 = vshrl.u32 %v2708, 7
        %v2710 = vsub.s32 1, %v2709
        %v2711 = vrot.slane %v840, %v2710
        %v2712 = vmul.f32 %v2706, %v2711
        %v2713 = vmul.f32 %v2707, %v2711
        %v2714 = vlaneseq
        %v2715 = vshrl.u32 %v2714, 7
        %v2716 = vsub.s32 1, %v2715
        %v2717 = vrot.slane %v841, %v2716
        %v2718 = vadd.f32 %v2712, %v2717
        %v2719 = vadd.f32 %v2713, %v2717
        %v2720 = vpack.c.bf16 %v2719, %v2718
        %v2721 = vld [vmem:[%s628] sm:$0xf]
        %v2722 = vld [vmem:[%s628 + $0x4] sm:$0xf]
        %v2723 = vld [vmem:[%s628 + $0x8] sm:$0xf]
        %v2724 = vld [vmem:[%s628 + $0xc] sm:$0xf]
        %v2725 = vld [vmem:[%s636] sm:$0x1]
        %v2727 = vlaneseq
        %v2728 = vshrl.u32 %v2727, 7
        %v2729 = vsub.s32 0, %v2728
        %v2730 = vrot.slane %v2725, %v2729
        %v2736 = vunpack.c.l.b16 %v2721
        %v2737 = vunpack.c.l.b16 %v2722
        %v2738 = vunpack.c.l.b16 %v2723
        %v2739 = vunpack.c.l.b16 %v2724
        %v2740 = vpack.c.b16 %v2737, %v2736
        %v2741 = vpack.c.b16 %v2739, %v2738
        %v2745 = vsel %vm889, %v2720, 0
        %2747 = vmatprep.subr.bf16.mxu0 0
        %2748 = vmatpush1.bf16.msra.mxu0 %v2740
        %2749 = vmatprep.subr.bf16.mxu0 0
        %2750 = vmatpush1.bf16.msra.mxu0 %v2741
        %2751 = vmatprep.subr.bf16.mxu0 0
        %2752 = vmatpush1.bf16.msra.mxu0 0
        %2753 = vmatprep.subr.bf16.mxu0 0
        %2754 = vmatpush1.bf16.msra.mxu0 0
        %2755 = vmatprep.subr.bf16.mxu0 0
        %2756 = vmatpush1.bf16.msra.mxu0 0
        %2757 = vmatprep.subr.bf16.mxu0 0
        %2758 = vmatpush1.bf16.msra.mxu0 0
        %2759 = vmatprep.subr.bf16.mxu0 0
        %2760 = vmatpush1.bf16.msra.mxu0 0
        %2761 = vmatprep.subr.bf16.mxu0 0
        %2762 = vmatpush1.bf16.msra.mxu0 0
        %2763 = vmatprep.subr.bf16.mxu0 0
        %2764 = vmatpush1.bf16.msra.mxu0 0
        %2765 = vmatprep.subr.bf16.mxu0 0
        %2766 = vmatpush1.bf16.msra.mxu0 0
        %2767 = vmatprep.subr.bf16.mxu0 0
        %2768 = vmatpush1.bf16.msra.mxu0 0
        %2769 = vmatprep.subr.bf16.mxu0 0
        %2770 = vmatpush1.bf16.msra.mxu0 0
        %2771 = vmatprep.subr.bf16.mxu0 0
        %2772 = vmatpush1.bf16.msra.mxu0 0
        %2773 = vmatprep.subr.bf16.mxu0 0
        %2774 = vmatpush1.bf16.msra.mxu0 0
        %2775 = vmatprep.subr.bf16.mxu0 0
        %2776 = vmatpush1.bf16.msra.mxu0 0
        %2777 = vmatprep.subr.bf16.mxu0 0
        %2778 = vmatpush1.bf16.msra.mxu0 0
        %2779 = vmatprep.mubr.bf16.mxu0 0
        %2780 = vmatmul.mubr.bf16.gmra.mrb[0].mxu0 %v2745
        %v2781 = vpop.f32.mrb[0].mxu0
        %v2782 = vadd.f32 %v2730, %v2781
        %v2783 = vpop.f32.mrb[0].mxu0
        %v2784 = vpop.f32.mrb[0].mxu0
        %v2785 = vadd.f32 %v2730, %v2784
        %v2786 = vpop.f32.mrb[0].mxu0
        %2787 = vdwg.mxu0
        %v2788 = vmax.f32 %v2782, 0.0
        %v2789 = vmax.f32 %v2785, 0.0
        %v2790 = vpack.c.bf16 %v2789, %v2788
        %v2791 = vld [vmem:[%s735] sm:$0xf]
        %v2792 = vld [vmem:[%s735 + $0x4] sm:$0xf]
        %v2793 = vld [vmem:[%s735 + $0x8] sm:$0xf]
        %v2794 = vld [vmem:[%s735 + $0xc] sm:$0xf]
        %v2795 = vld [vmem:[%s735 + $0x10] sm:$0xf]
        %v2796 = vld [vmem:[%s735 + $0x14] sm:$0xf]
        %v2797 = vld [vmem:[%s735 + $0x18] sm:$0xf]
        %v2798 = vld [vmem:[%s735 + $0x1c] sm:$0xf]
        %v2799 = vld [vmem:[%s644] sm:$0x1]
        %v2801 = vlaneseq
        %v2802 = vshrl.u32 %v2801, 7
        %v2803 = vsub.s32 0, %v2802
        %v2804 = vrot.slane %v2799, %v2803
        %v2814 = vunpack.c.l.b16 %v2791
        %v2815 = vunpack.c.l.b16 %v2792
        %v2816 = vunpack.c.l.b16 %v2793
        %v2817 = vunpack.c.l.b16 %v2794
        %v2818 = vunpack.c.l.b16 %v2795
        %v2819 = vunpack.c.l.b16 %v2796
        %v2820 = vunpack.c.l.b16 %v2797
        %v2821 = vunpack.c.l.b16 %v2798
        %v2822 = vpack.c.b16 %v2815, %v2814
        %v2823 = vpack.c.b16 %v2817, %v2816
        %v2824 = vpack.c.b16 %v2819, %v2818
        %v2825 = vpack.c.b16 %v2821, %v2820
        %vm2830 = vcmask 523264
        %v2832 = vsel %vm2830, %v2790, 0
        %2834 = vmatprep.subr.bf16.mxu0 0
        %2835 = vmatpush1.bf16.msra.mxu0 %v2822
        %2836 = vmatprep.subr.bf16.mxu0 0
        %2837 = vmatpush1.bf16.msra.mxu0 %v2823
        %2838 = vmatprep.subr.bf16.mxu0 0
        %2839 = vmatpush1.bf16.msra.mxu0 %v2824
        %2840 = vmatprep.subr.bf16.mxu0 0
        %2841 = vmatpush1.bf16.msra.mxu0 %v2825
        %2842 = vmatprep.subr.bf16.mxu0 0
        %2843 = vmatpush1.bf16.msra.mxu0 0
        %2844 = vmatprep.subr.bf16.mxu0 0
        %2845 = vmatpush1.bf16.msra.mxu0 0
        %2846 = vmatprep.subr.bf16.mxu0 0
        %2847 = vmatpush1.bf16.msra.mxu0 0
        %2848 = vmatprep.subr.bf16.mxu0 0
        %2849 = vmatpush1.bf16.msra.mxu0 0
        %2850 = vmatprep.subr.bf16.mxu0 0
        %2851 = vmatpush1.bf16.msra.mxu0 0
        %2852 = vmatprep.subr.bf16.mxu0 0
        %2853 = vmatpush1.bf16.msra.mxu0 0
        %2854 = vmatprep.subr.bf16.mxu0 0
        %2855 = vmatpush1.bf16.msra.mxu0 0
        %2856 = vmatprep.subr.bf16.mxu0 0
        %2857 = vmatpush1.bf16.msra.mxu0 0
        %2858 = vmatprep.subr.bf16.mxu0 0
        %2859 = vmatpush1.bf16.msra.mxu0 0
        %2860 = vmatprep.subr.bf16.mxu0 0
        %2861 = vmatpush1.bf16.msra.mxu0 0
        %2862 = vmatprep.subr.bf16.mxu0 0
        %2863 = vmatpush1.bf16.msra.mxu0 0
        %2864 = vmatprep.subr.bf16.mxu0 0
        %2865 = vmatpush1.bf16.msra.mxu0 0
        %2866 = vmatprep.mubr.bf16.mxu0 0
        %2867 = vmatmul.mubr.bf16.gmra.mrb[0].mxu0 %v2832
        %v2868 = vpop.f32.mrb[0].mxu0
        %v2869 = vadd.f32 %v2804, %v2868
        %v2870 = vpop.f32.mrb[0].mxu0
        %v2871 = vpop.f32.mrb[0].mxu0
        %v2872 = vadd.f32 %v2804, %v2871
        %v2873 = vpop.f32.mrb[0].mxu0
        %2874 = vdwg.mxu0
        %v2875 = vadd.f32 %v2718, %v2869
        %v2876 = vadd.f32 %v2719, %v2872
        %v2877 = vsel %vm889, %v2875, 0.0
        %2878 = vadd.xlane.f32.xlu0 %v2877
        %v2879 = vpop.xlane.xlu0 %2878
        %v2880 = vsel %vm889, %v2876, 0.0
        %2881 = vadd.xlane.f32.xlu0 %v2880
        %v2882 = vpop.xlane.xlu0 %2881
        %v2883 = vmul.f32 %v2879, %v2613
        %v2884 = vmul.f32 %v2882, %v2613
        %v2885 = vsub.f32 %v2875, %v2883
        %v2886 = vsub.f32 %v2876, %v2884
        %v2887 = vmul.f32 %v2885, %v2885
        %v2888 = vmul.f32 %v2886, %v2886
        %v2889 = vsel %vm889, %v2887, 0.0
        %2890 = vadd.xlane.f32.xlu0 %v2889
        %v2891 = vpop.xlane.xlu0 %2890
        %v2892 = vsel %vm889, %v2888, 0.0
        %2893 = vadd.xlane.f32.xlu0 %v2892
        %v2894 = vpop.xlane.xlu0 %2893
        %v2895 = vmul.f32 %v2891, %v2613
        %v2896 = vmul.f32 %v2894, %v2613
        %v2897 = vadd.f32 %v2895, 1e-05
        %v2898 = vadd.f32 %v2896, 1e-05
        %v2899 = vrsqrt.pop %v2897
        %v2900 = vrsqrt.pop %v2898
        %v2901 = vmul.f32 %v2885, %v2899
        %v2902 = vmul.f32 %v2886, %v2900
        %v2903 = vlaneseq
        %v2904 = vshrl.u32 %v2903, 7
        %v2905 = vsub.s32 2, %v2904
        %v2906 = vrot.slane %v840, %v2905
        %v2907 = vmul.f32 %v2901, %v2906
        %v2908 = vmul.f32 %v2902, %v2906
        %v2909 = vlaneseq
        %v2910 = vshrl.u32 %v2909, 7
        %v2911 = vsub.s32 2, %v2910
        %v2912 = vrot.slane %v841, %v2911
        %v2913 = vadd.f32 %v2907, %v2912
        %v2914 = vadd.f32 %v2908, %v2912
        %2915 = vst.msk [vmem:[#allocation2] sm:$0xff] %vm889, %v2913
        %2916 = vst.msk [vmem:[#allocation2 + $0x8] sm:$0xff] %vm889, %v2914
        %p2917 = scmp.eq.s32.totalorder %s38, 1
        // Predicated region
        $region109: #{tpu_custom_call.1} parent=71 // pred_check
          %p2918 = pneg %p2917
        $region110: #{tpu_custom_call.1} parent=71 // pred_check_branch
          %2920 = sbr.rel (%p2918) target = $region112
        $region111: #{tpu_custom_call.1} parent=71 // pred_region
          %v2921 = vlaneseq
          %v2922 = vshrl.u32 %v2921, 7
          %v2923 = vsub.s32 6, %v2922
          %v2924 = vrot.slane %v745, %v2923
          %v2925 = vmul.f32 %v2913, %v2924
          %v2926 = vmul.f32 %v2914, %v2924
          %v2927 = vsel %vm889, %v2925, 0.0
          %2928 = vadd.xlane.f32.xlu0 %v2927
          %v2929 = vpop.xlane.xlu0 %2928
          %v2930 = vsel %vm889, %v2926, 0.0
          %2931 = vadd.xlane.f32.xlu0 %v2930
          %v2932 = vpop.xlane.xlu0 %2931
          %v2934 = vrot.slane %v745, 5
          %s2935 = vtos %v2934
          %v2936 = vstv %s2935
          %v2938 = vadd.f32 %v2929, %v2936
          %v2939 = vadd.f32 %v2932, %v2936
          %v2942 = vlaneseq
          %v2943 = vand.u32 %v2942, 127
          %v2944 = vlaneseq
          %v2945 = vshrl.u32 %v2944, 7
          %v2946 = vsub.s32 %v2943, %v2945
          %v2947 = vrot.slane %v2938, %v2946
          %v2948 = vlaneseq
          %v2949 = vshrl.u32 %v2948, 7
          %v2950 = vsub.s32 %v2943, %v2949
          %v2951 = vrot.slane %v2939, %v2950
          %vm2952 = vcmask 1041409
          %v2953 = vsel %vm2952, %v2951, %v2947
          %vm2955 = vcmask 58368
          %2956 = vst.msk [vmem:[#allocation16] sm:$0x3] %vm2955, %v2953
        $region112: #{tpu_custom_call.1} parent=71 // pred_fallthru
          _
        // Predicated region
        $region113: #{tpu_custom_call.1} parent=71 // pred_check
          %p2957 = pneg %p398
        $region114: #{tpu_custom_call.1} parent=71 // pred_check_branch
          %2959 = sbr.rel (%p2957) target = $region116
        $region115: #{tpu_custom_call.1} parent=71 // pred_region
          %s2961 = ssub.s32 32, 32
          %2962 = vsyncadd [#allocation5], %s2961
          %s2963 = smul.addr %s37, 32
          %s2964 = scalar_lea.hbm %s13, %s2963
          %s2966 = sshll.u32 [#allocation16], 4
          %s2967 = int_to_ptr.vmem [resolvable:$true] %s2966
          %2969 = dma.vmem_to_hbm [thread:$0]  %s2967, 32, %s2964, [#allocation5]
        $region116: #{tpu_custom_call.1} parent=71 // pred_fallthru
          _
        // Predicated region
        $region117: #{tpu_custom_call.1} parent=71 // pred_check
          %p2970 = pneg %p398
        $region118: #{tpu_custom_call.1} parent=71 // pred_check_branch
          %2972 = sbr.rel (%p2970) target = $region120
        $region119: #{tpu_custom_call.1} parent=71 // pred_region
          %2973 = dma.done [#allocation5], 32
        $region120: #{tpu_custom_call.1} parent=71 // pred_fallthru
          _
      $region72: #{tpu_custom_call.1} parent=5 // pred_fallthru
        _
      %p2974 = scmp.le.s32.totalorder 2, %s28
      // Predicated region
      $region121: #{tpu_custom_call.1} parent=5 // pred_check
        %p2975 = pneg %p2974
      $region122: #{tpu_custom_call.1} parent=5 // pred_check_branch
        %2977 = sbr.rel (%p2975) target = $region124
      $region123: #{tpu_custom_call.1} parent=5 // pred_region
        %s2978 = ssub.s32 %s28, 2
      $region124: #{tpu_custom_call.1} parent=5 // pred_fallthru
        _
    $region6: #{tpu_custom_call.1} parent=1 // loop_footer
      %s32 = sadd.s32 1, %s28
    $region7: #{tpu_custom_call.1} parent=1 // loop_footer_branch
      %27 = sbr.rel target = $region3
    $region8: #{tpu_custom_call.1} parent=1 // loop_exit
      _
    %2979 = vsyncpa [#allocation4], 1
    %s2980 = scalar_lea.sflag [#allocation4], 1
    %2981 = vsyncpa %s2980, 1
    %2982 = vsyncpa [#allocation7], 1
    %2983 = vsyncpa [#allocation11], 1
    %s2984 = scalar_lea.sflag [#allocation11], 1
    %2985 = vsyncpa %s2984, 1
    %2986 = vsyncpa [#allocation14], 1
    %s2987 = scalar_lea.sflag [#allocation14], 1
    %2988 = vsyncpa %s2987, 1
    %2989 = vsyncpa [#allocation5], 1
    %s2990 = scalar_lea.sflag [#allocation5], 1
    %2991 = vsyncpa %s2990, 1

</llo_original>
